<compile_context>
chip_gen: v6e
topology: v6e:2x2x1
jax: 0.10.0
libtpu: 0.0.40
codegen_flags: <defaults>
</compile_context>

<pallas_src>
import numpy as np

import jax
import jax.numpy as jnp
from jax import lax
from jax.experimental import pallas as pl
from jax.experimental.pallas import tpu as pltpu

_GN_EPS = 1e-5


def _round_up(x, m):
    return (x + m - 1) // m * m


# ----------------------------------------------------------------------------
# Static per-level geometry (everything derived from shapes only).
# ----------------------------------------------------------------------------
def _level_geometry(c_in, c_out, h, w):
    assert h % 2 == 0 and w % 2 == 0, "spatial dims must be even at every level"
    hp, wp = h + 2, w + 2                 # conv-A canvas = pad-1 input
    ho, wo = h // 2, w // 2               # level output spatial
    hc, wc = ho + 1, wo + 1               # space-to-depth plane spatial
    return dict(
        c_in=c_in, c_out=c_out, h=h, w=w, hp=hp, wp=wp,
        la=hp * wp + 2,                   # conv-A canvas length (flat + slack)
        na=h * wp,                        # conv-A output positions (valid col < w)
        ho=ho, wo=wo, hc=hc, wc=wc,
        nb=ho * wc,                       # conv-B output positions (valid col < wo)
        pc=hc * wc + 2,                   # plane canvas length (flat + slack)
    )


# ----------------------------------------------------------------------------
# Host-side constant builders (shape-only -> numpy constants).
# ----------------------------------------------------------------------------
def _s2d_selection(g):
    """(4, na, pc) 0/1 matrices: conv-A output (flat, with junk cols) ->
    the 4 space-to-depth planes of its pad-1 version. Junk cols never hit 1."""
    sel = np.zeros((4, g["na"], g["pc"]), np.float32)
    for pi in range(2):
        for pj in range(2):
            p = pi * 2 + pj
            for m in range(g["hc"] * g["wc"]):
                rp, cp = divmod(m, g["wc"])
                r, c = 2 * rp + pi, 2 * cp + pj
                if 1 <= r <= g["h"] and 1 <= c <= g["w"]:
                    sel[p, (r - 1) * g["wp"] + (c - 1), m] = 1.0
    return sel


def _transition(g_prev, g_cur):
    """(nb_prev, la_cur) 0/1 matrix: level output (flat, with junk cols) ->
    next level's pad-1 conv-A canvas. Junk cols map to all-zero rows."""
    t = np.zeros((g_prev["nb"], g_cur["la"]), np.float32)
    for r in range(1, g_cur["h"] + 1):
        for c in range(1, g_cur["w"] + 1):
            t[(r - 1) * g_prev["wc"] + (c - 1), r * g_cur["wp"] + c] = 1.0
    return t


# ----------------------------------------------------------------------------
# Weight re-layouts (traceable jnp ops; run under jit with the params).
# ----------------------------------------------------------------------------
def _pack_w1(w1, c_in_pad):
    """(c_out, c_in, 3, 3) -> (c_out, 9*c_in_pad), columns ordered (a, b, ci)."""
    c_out, c_in = w1.shape[0], w1.shape[1]
    w1p = jnp.pad(w1.astype(jnp.float32),
                  ((0, 0), (0, c_in_pad - c_in), (0, 0), (0, 0)))
    return w1p.transpose(0, 2, 3, 1).reshape(c_out, 9 * c_in_pad)


def _pack_w2(w2):
    """(c_out, c_in, 4, 4) -> (c_out, 16*c_in), columns ordered (pi, pj, ap, bp, ci)
    with a = 2*ap + pi, b = 2*bp + pj (space-to-depth tap decomposition)."""
    c_out, c_in2 = w2.shape[0], w2.shape[1]
    w2r = w2.astype(jnp.float32).reshape(c_out, c_in2, 2, 2, 2, 2)  # (co,ci,ap,pi,bp,pj)
    w2r = w2r.transpose(0, 3, 5, 2, 4, 1)                           # (co,pi,pj,ap,bp,ci)
    return w2r.reshape(c_out, 16 * c_in2)


def _pack_aff(b1, g1, be1, b2, g2, be2):
    """Single (c_out, 8) operand: [b1, g1, be1, 0, b2, g2, be2, 0]."""
    z = jnp.zeros_like(b1)
    return jnp.stack([b1, g1, be1, z, b2, g2, be2, z], axis=1).astype(jnp.float32)


def _pack_linear(lin_w, lin_b, c_last, ho, wo, wc, e_pad):
    """(F, E) -> (c_last, ho*wc, e_pad): per-channel weight slab matching the
    kernel's (C, Ho*Wc) activation layout (junk col -> zero rows)."""
    e = lin_b.shape[0]
    wl = lin_w.astype(jnp.float32).reshape(c_last, ho, wo, e)
    wl = jnp.pad(wl, ((0, 0), (0, 0), (0, wc - wo), (0, e_pad - e)))
    wl = wl.reshape(c_last, ho * wc, e_pad)
    lb = jnp.pad(lin_b.astype(jnp.float32), ((0, e_pad - e),)).reshape(1, e_pad)
    return wl, lb


# ----------------------------------------------------------------------------
# Fused encoder kernel (one sample -- or block_b samples -- per grid step).
# ----------------------------------------------------------------------------
def _gn_silu(y, gamma, beta, period, valid_w, count, eps):
    """GroupNorm(num_groups=1) + affine + SiLU over the valid columns of the
    flattened canvas layout (junk columns: q % period >= valid_w)."""
    n = y.shape[1]
    col = lax.broadcasted_iota(jnp.int32, (1, n), 1)
    valid = (col % period) < valid_w
    inv_count = 1.0 / float(count)
    yv = jnp.where(valid, y, 0.0)
    mean = jnp.sum(jnp.sum(yv, axis=1, keepdims=True),
                   axis=0, keepdims=True) * inv_count            # (1, 1)
    d = jnp.where(valid, y - mean, 0.0)
    var = jnp.sum(jnp.sum(d * d, axis=1, keepdims=True),
                  axis=0, keepdims=True) * inv_count             # (1, 1), two-pass
    scale = gamma * lax.rsqrt(var + eps)                         # (c_out, 1)
    z = y * scale + (beta - mean * scale)                        # single FMA epilogue
    return z * jax.nn.sigmoid(z)                                 # SiLU


def _make_kernel(geoms, block_b, e_pad, eps):
    def kernel(*refs):
        out_ref = refs[-1]
        for s in range(block_b):
            pos = 0
            x_ref = refs[pos]; pos += 1
            act = None
            for li, g in enumerate(geoms):
                if li == 0:
                    can_a = x_ref[s]                              # (c_in_pad, la0_pad)
                else:
                    t_ref = refs[pos]; pos += 1
                    can_a = jnp.dot(act, t_ref[...],
                                    preferred_element_type=jnp.float32)
                w1_ref, aff_ref, w2_ref, sel_ref = refs[pos:pos + 4]
                pos += 4
                aff = aff_ref[...]                                # (c_out, 8)

                # ---- Conv2d(k=3, s=1, p=1) as ONE GEMM ----
                pieces = []
                for a in range(3):
                    for b in range(3):
                        off = a * g["wp"] + b
                        pieces.append(can_a[:, off:off + g["na"]])
                patches = jnp.concatenate(pieces, axis=0)         # (9*c_in, na)
                y = jnp.dot(w1_ref[...], patches,
                            preferred_element_type=jnp.float32)   # (c_out, na)
                y = y + aff[:, 0:1]
                act_a = _gn_silu(y, aff[:, 1:2], aff[:, 2:3], g["wp"], g["w"],
                                 g["c_out"] * g["h"] * g["w"], eps)

                # ---- Conv2d(k=4, s=2, p=1): s2d planes (selection matmuls)
                #      then a stride-1 2x2 conv as ONE GEMM (K = 16*c_out) ----
                planes = [jnp.dot(act_a, sel_ref[p],
                                  preferred_element_type=jnp.float32)
                          for p in range(4)]                      # each (c_out, pc)
                pieces_b = []
                for pi in range(2):
                    for pj in range(2):
                        pln = planes[pi * 2 + pj]
                        for ap in range(2):
                            for bp in range(2):
                                off = ap * g["wc"] + bp
                                pieces_b.append(pln[:, off:off + g["nb"]])
                patches_b = jnp.concatenate(pieces_b, axis=0)     # (16*c_out, nb)
                y2 = jnp.dot(w2_ref[...], patches_b,
                             preferred_element_type=jnp.float32)  # (c_out, nb)
                y2 = y2 + aff[:, 4:5]
                act = _gn_silu(y2, aff[:, 5:6], aff[:, 6:7], g["wc"], g["wo"],
                               g["c_out"] * g["ho"] * g["wo"], eps)

            # ---- Flatten + Linear, folded (lin_w pre-laid-out per channel) ----
            wl_ref, lb_ref = refs[pos], refs[pos + 1]
            acc = lb_ref[...]                                     # (1, e_pad)
            for ci in range(geoms[-1]["c_out"]):
                acc = acc + jnp.dot(act[ci:ci + 1, :], wl_ref[ci],
                                    preferred_element_type=jnp.float32)
            out_ref[s] = acc                                      # lane-dense store

    return kernel


def _full_spec(arr):
    zeros = (0,) * arr.ndim
    return pl.BlockSpec(arr.shape, lambda i: zeros)


# ----------------------------------------------------------------------------
# Whole-encoder forward: one pallas_call.
# ----------------------------------------------------------------------------
def encoder_forward(params, x, *, block_b=1):
    B, c0, H, W = x.shape
    assert B % block_b == 0
    levels = params["levels"]
    e = params["lin_b"].shape[0]
    e_pad = _round_up(e, 128)

    # Static geometry per level.
    geoms = []
    c_in, h, w = c0, H, W
    for lvl in levels:
        c_out = lvl["w1"].shape[0]
        geoms.append(_level_geometry(c_in, c_out, h, w))
        c_in, h, w = c_out, h // 2, w // 2
    gl = geoms[-1]
    assert params["lin_w"].shape[0] == gl["c_out"] * gl["ho"] * gl["wo"]

    g0 = geoms[0]
    c0_pad = _round_up(max(c0, 8), 8)
    la0_pad = _round_up(g0["la"], 128)

    # One-time network-input prep: pad-1 spatially, pad channels to a sublane
    # multiple, flatten spatial, pad lanes -> the level-0 conv-A canvas.
    xp = jnp.pad(x.astype(jnp.float32),
                 ((0, 0), (0, c0_pad - c0), (1, 1), (1, 1)))
    x_can = jnp.pad(xp.reshape(B, c0_pad, g0["hp"] * g0["wp"]),
                    ((0, 0), (0, 0), (0, la0_pad - g0["hp"] * g0["wp"])))

    operands = [x_can]
    in_specs = [pl.BlockSpec((block_b, c0_pad, la0_pad), lambda i: (i, 0, 0))]

    for li, (lvl, g) in enumerate(zip(levels, geoms)):
        if li > 0:
            t = jnp.asarray(_transition(geoms[li - 1], g))
            operands.append(t); in_specs.append(_full_spec(t))
        c_in_pad = c0_pad if li == 0 else g["c_in"]
        w1k = _pack_w1(lvl["w1"], c_in_pad)
        aff = _pack_aff(lvl["b1"], lvl["g1"], lvl["be1"],
                        lvl["b2"], lvl["g2"], lvl["be2"])
        w2k = _pack_w2(lvl["w2"])
        sel = jnp.asarray(_s2d_selection(g))
        for arr in (w1k, aff, w2k, sel):
            operands.append(arr); in_specs.append(_full_spec(arr))

    wl2, lb = _pack_linear(params["lin_w"], params["lin_b"], gl["c_out"],
                           gl["ho"], gl["wo"], gl["wc"], e_pad)
    operands += [wl2, lb]
    in_specs += [_full_spec(wl2), _full_spec(lb)]

    kernel = _make_kernel(geoms, block_b, e_pad, _GN_EPS)

    flops = 0
    for g in geoms:
        flops += 2 * (9 * g["c_in"] * g["c_out"] * g["na"]
                      + 4 * g["c_out"] * g["na"] * g["pc"]
                      + 16 * g["c_out"] * g["c_out"] * g["nb"])
    flops = int(B * (flops + 2 * gl["c_out"] * gl["nb"] * e_pad))
    transc = int(B * sum(g["c_out"] * (g["na"] + g["nb"]) for g in geoms))
    bytes_accessed = int(sum(int(np.prod(o.shape)) * 4 for o in operands)
                         + B * e_pad * 4)

    out = pl.pallas_call(
        kernel,
        out_shape=jax.ShapeDtypeStruct((B, 1, e_pad), jnp.float32),
        grid=(B // block_b,),
        in_specs=in_specs,
        out_specs=pl.BlockSpec((block_b, 1, e_pad), lambda i: (i, 0, 0)),
        compiler_params=pltpu.CompilerParams(dimension_semantics=("parallel",)),
        cost_estimate=pl.CostEstimate(flops=flops, transcendentals=transc,
                                      bytes_accessed=bytes_accessed),
    )(*operands)
    return out[:, 0, :e]


# ----------------------------------------------------------------------------
# Parameter init (f32, matches the PyTorch module's layer shapes).
# ----------------------------------------------------------------------------
def init_encoder_params(key, input_shape, initial_hidden_channels, levels,
                        encoding_dim):
    c_in, h, w = input_shape
    c_out = initial_hidden_channels
    keys = iter(jax.random.split(key, 8 * levels + 2))

    def nrm(k, shape, scale):
        return scale * jax.random.normal(k, shape, jnp.float32)

    params = {"levels": []}
    for level in range(levels):
        if level != 0:
            c_in = c_out
            c_out *= 2
        params["levels"].append({
            "w1": nrm(next(keys), (c_out, c_in, 3, 3), 1.0 / np.sqrt(c_in * 9)),
            "b1": nrm(next(keys), (c_out,), 0.1),
            "g1": 1.0 + nrm(next(keys), (c_out,), 0.1),
            "be1": nrm(next(keys), (c_out,), 0.1),
            "w2": nrm(next(keys), (c_out, c_out, 4, 4), 1.0 / np.sqrt(c_out * 16)),
            "b2": nrm(next(keys), (c_out,), 0.1),
            "g2": 1.0 + nrm(next(keys), (c_out,), 0.1),
            "be2": nrm(next(keys), (c_out,), 0.1),
        })
        h //= 2
        w //= 2
    flattened = c_out * h * w
    params["lin_w"] = nrm(next(keys), (flattened, encoding_dim),
                          1.0 / np.sqrt(flattened))
    params["lin_b"] = nrm(next(keys), (encoding_dim,), 0.1)
    return params


# ----------------------------------------------------------------------------
# Pure-JAX reference.
# ----------------------------------------------------------------------------
def _reference_forward(params, x):
    def gn_silu(y, g, be):
        mean = jnp.mean(y, axis=(1, 2, 3), keepdims=True)
        var = jnp.mean((y - mean) ** 2, axis=(1, 2, 3), keepdims=True)
        z = (y - mean) * lax.rsqrt(var + _GN_EPS)
        z = z * g.reshape(1, -1, 1, 1) + be.reshape(1, -1, 1, 1)
        return z * jax.nn.sigmoid(z)

    def conv(h, w, b, stride, pad):
        y = lax.conv_general_dilated(
            h, w, (stride, stride), ((pad, pad), (pad, pad)),
            dimension_numbers=("NCHW", "OIHW", "NCHW"),
            precision=lax.Precision.HIGHEST)
        return y + b.reshape(1, -1, 1, 1)

    h = x.astype(jnp.float32)
    for lvl in params["levels"]:
        h = gn_silu(conv(h, lvl["w1"], lvl["b1"], 1, 1), lvl["g1"], lvl["be1"])
        h = gn_silu(conv(h, lvl["w2"], lvl["b2"], 2, 1), lvl["g2"], lvl["be2"])
    B = h.shape[0]
    return h.reshape(B, -1) @ params["lin_w"] + params["lin_b"]


# ----------------------------------------------------------------------------
if __name__ == "__main__":
    input_shape = (4, 16, 16)          # (C, H, W)
    initial_hidden_channels = 8
    levels = 2
    encoding_dim = 32
    batch = 2

    key = jax.random.PRNGKey(0)
    kp, kx = jax.random.split(key)
    params = init_encoder_params(kp, input_shape, initial_hidden_channels,
                                 levels, encoding_dim)
    x = jax.random.normal(kx, (batch,) + input_shape, jnp.float32)

    fwd = jax.jit(encoder_forward)
    out = jax.block_until_ready(fwd(params, x))
    assert out.shape == (batch, encoding_dim), out.shape
    assert bool(jnp.all(jnp.isfinite(out)))

    ref = _reference_forward(params, x)
    assert bool(jnp.allclose(out, ref, atol=3e-2, rtol=3e-2)), (
        float(jnp.max(jnp.abs(out - ref))))
    print("KERNEL_OK")
</pallas_src>

<mosaic_0001>
module attributes {stable_mosaic.version = 11 : i64} {
  func.func @kernel(%arg0: i32, %arg1: memref<1x8x384xf32, #tpu.memory_space<vmem>>, %arg2: memref<8x72xf32, #tpu.memory_space<vmem>>, %arg3: memref<8x8xf32, #tpu.memory_space<vmem>>, %arg4: memref<8x128xf32, #tpu.memory_space<vmem>>, %arg5: memref<4x288x83xf32, #tpu.memory_space<vmem>>, %arg6: memref<72x102xf32, #tpu.memory_space<vmem>>, %arg7: memref<16x72xf32, #tpu.memory_space<vmem>>, %arg8: memref<16x8xf32, #tpu.memory_space<vmem>>, %arg9: memref<16x256xf32, #tpu.memory_space<vmem>>, %arg10: memref<4x80x27xf32, #tpu.memory_space<vmem>>, %arg11: memref<16x20x128xf32, #tpu.memory_space<vmem>>, %arg12: memref<1x128xf32, #tpu.memory_space<vmem>>, %arg13: memref<1x1x128xf32, #tpu.memory_space<vmem>>) attributes {dimension_semantics = [#tpu.dimension_semantics<parallel>], iteration_bounds = array<i64: 2>, scalar_prefetch = 0 : i64, scratch_operands = 0 : i64, tpu.core_type = #tpu.core_type<tc>, window_params = [{transform_indices = @transform_0, window_bounds = array<i64: 1, 8, 384>}, {pipeline_mode = #tpu.pipeline_mode<synchronous>, transform_indices = @transform_1, window_bounds = array<i64: 8, 72>}, {pipeline_mode = #tpu.pipeline_mode<synchronous>, transform_indices = @transform_2, window_bounds = array<i64: 8, 8>}, {pipeline_mode = #tpu.pipeline_mode<synchronous>, transform_indices = @transform_3, window_bounds = array<i64: 8, 128>}, {pipeline_mode = #tpu.pipeline_mode<synchronous>, transform_indices = @transform_4, window_bounds = array<i64: 4, 288, 83>}, {pipeline_mode = #tpu.pipeline_mode<synchronous>, transform_indices = @transform_5, window_bounds = array<i64: 72, 102>}, {pipeline_mode = #tpu.pipeline_mode<synchronous>, transform_indices = @transform_6, window_bounds = array<i64: 16, 72>}, {pipeline_mode = #tpu.pipeline_mode<synchronous>, transform_indices = @transform_7, window_bounds = array<i64: 16, 8>}, {pipeline_mode = #tpu.pipeline_mode<synchronous>, transform_indices = @transform_8, window_bounds = array<i64: 16, 256>}, {pipeline_mode = #tpu.pipeline_mode<synchronous>, transform_indices = @transform_9, window_bounds = array<i64: 4, 80, 27>}, {pipeline_mode = #tpu.pipeline_mode<synchronous>, transform_indices = @transform_10, window_bounds = array<i64: 16, 20, 128>}, {pipeline_mode = #tpu.pipeline_mode<synchronous>, transform_indices = @transform_11, window_bounds = array<i64: 1, 128>}, {transform_indices = @transform_12, window_bounds = array<i64: 1, 1, 128>}]} {
    %c0 = arith.constant 0 : index
    %c0_0 = arith.constant 0 : index
    %c0_1 = arith.constant 0 : index
    %0 = vector.load %arg1[%c0, %c0_0, %c0_1] : memref<1x8x384xf32, #tpu.memory_space<vmem>>, vector<1x8x384xf32>
    %1 = vector.shape_cast %0 : vector<1x8x384xf32> to vector<8x384xf32>
    %c0_2 = arith.constant 0 : index
    %c0_3 = arith.constant 0 : index
    %2 = vector.load %arg3[%c0_2, %c0_3] : memref<8x8xf32, #tpu.memory_space<vmem>>, vector<8x8xf32>
    %3 = vector.extract_strided_slice %1 {offsets = [0, 0], sizes = [8, 288], strides = [1, 1]} : vector<8x384xf32> to vector<8x288xf32>
    %4 = vector.extract_strided_slice %1 {offsets = [0, 1], sizes = [8, 288], strides = [1, 1]} : vector<8x384xf32> to vector<8x288xf32>
    %5 = vector.extract_strided_slice %1 {offsets = [0, 2], sizes = [8, 288], strides = [1, 1]} : vector<8x384xf32> to vector<8x288xf32>
    %6 = vector.extract_strided_slice %1 {offsets = [0, 18], sizes = [8, 288], strides = [1, 1]} : vector<8x384xf32> to vector<8x288xf32>
    %7 = vector.extract_strided_slice %1 {offsets = [0, 19], sizes = [8, 288], strides = [1, 1]} : vector<8x384xf32> to vector<8x288xf32>
    %8 = vector.extract_strided_slice %1 {offsets = [0, 20], sizes = [8, 288], strides = [1, 1]} : vector<8x384xf32> to vector<8x288xf32>
    %9 = vector.extract_strided_slice %1 {offsets = [0, 36], sizes = [8, 288], strides = [1, 1]} : vector<8x384xf32> to vector<8x288xf32>
    %10 = vector.extract_strided_slice %1 {offsets = [0, 37], sizes = [8, 288], strides = [1, 1]} : vector<8x384xf32> to vector<8x288xf32>
    %11 = vector.extract_strided_slice %1 {offsets = [0, 38], sizes = [8, 288], strides = [1, 1]} : vector<8x384xf32> to vector<8x288xf32>
    %12 = tpu.concatenate %3, %4, %5, %6, %7, %8, %9, %10, %11 in 0 : vector<8x288xf32>, vector<8x288xf32>, vector<8x288xf32>, vector<8x288xf32>, vector<8x288xf32>, vector<8x288xf32>, vector<8x288xf32>, vector<8x288xf32>, vector<8x288xf32> -> vector<72x288xf32>
    %c0_4 = arith.constant 0 : index
    %c0_5 = arith.constant 0 : index
    %13 = vector.load %arg2[%c0_4, %c0_5] : memref<8x72xf32, #tpu.memory_space<vmem>>, vector<8x72xf32>
    %cst = arith.constant dense<0.000000e+00> : vector<8x288xf32>
    %14 = tpu.matmul %13, %12, %cst {dimension_numbers = #tpu.dot_dimension_numbers<[1], [0], [0], [1], [0, 0, 1, 1], [], []>} : vector<8x72xf32>, vector<72x288xf32>, vector<8x288xf32> -> vector<8x288xf32>
    %15 = vector.extract_strided_slice %2 {offsets = [0, 0], sizes = [8, 1], strides = [1, 1]} : vector<8x8xf32> to vector<8x1xf32>
    %16 = vector.broadcast %15 : vector<8x1xf32> to vector<8x288xf32>
    %17 = arith.addf %14, %16 : vector<8x288xf32>
    %18 = vector.extract_strided_slice %2 {offsets = [0, 1], sizes = [8, 1], strides = [1, 1]} : vector<8x8xf32> to vector<8x1xf32>
    %19 = vector.extract_strided_slice %2 {offsets = [0, 2], sizes = [8, 1], strides = [1, 1]} : vector<8x8xf32> to vector<8x1xf32>
    %20 = tpu.iota {dimensions = array<i32: 1>} : vector<1x288xi32>
    %c18_i32 = arith.constant 18 : i32
    %c0_i32 = arith.constant 0 : i32
    %21 = arith.cmpi eq, %c18_i32, %c0_i32 : i32
    %c1_i32 = arith.constant 1 : i32
    %22 = arith.select %21, %c1_i32, %c18_i32 : i32
    %23 = vector.broadcast %22 : i32 to vector<1x288xi32>
    %24 = arith.remsi %20, %23 : vector<1x288xi32>
    %c0_i32_6 = arith.constant 0 : i32
    %25 = vector.broadcast %c0_i32_6 : i32 to vector<1x288xi32>
    %26 = arith.cmpi ne, %24, %25 : vector<1x288xi32>
    %c0_i32_7 = arith.constant 0 : i32
    %27 = vector.broadcast %c0_i32_7 : i32 to vector<1x288xi32>
    %28 = arith.cmpi slt, %24, %27 : vector<1x288xi32>
    %c0_i32_8 = arith.constant 0 : i32
    %29 = arith.cmpi slt, %22, %c0_i32_8 : i32
    %30 = vector.broadcast %29 : i1 to vector<1x288xi1>
    %31 = vector.broadcast %30 : vector<1x288xi1> to vector<1x288xi1>
    %32 = arith.xori %28, %31 : vector<1x288xi1>
    %33 = arith.andi %32, %26 : vector<1x288xi1>
    %34 = vector.broadcast %22 : i32 to vector<1x288xi32>
    %35 = arith.addi %24, %34 : vector<1x288xi32>
    %36 = arith.select %33, %35, %24 : vector<1x288xi1>, vector<1x288xi32>
    %c16_i32 = arith.constant 16 : i32
    %37 = vector.broadcast %c16_i32 : i32 to vector<1x288xi32>
    %38 = arith.cmpi slt, %36, %37 : vector<1x288xi32>
    %cst_9 = arith.constant 0.000000e+00 : f32
    %39 = vector.shape_cast %38 : vector<1x288xi1> to vector<1x288xi1>
    %40 = vector.broadcast %39 : vector<1x288xi1> to vector<8x288xi1>
    %41 = vector.broadcast %cst_9 : f32 to vector<8x288xf32>
    %42 = arith.select %40, %17, %41 : vector<8x288xi1>, vector<8x288xf32>
    %cst_10 = arith.constant dense<0.000000e+00> : vector<8xf32>
    %43 = vector.multi_reduction <add>, %42, %cst_10 [1] : vector<8x288xf32> to vector<8xf32>
    %44 = vector.shape_cast %43 : vector<8xf32> to vector<8x1xf32>
    %cst_11 = arith.constant dense<0.000000e+00> : vector<1xf32>
    %45 = vector.multi_reduction <add>, %44, %cst_11 [0] : vector<8x1xf32> to vector<1xf32>
    %46 = vector.shape_cast %45 : vector<1xf32> to vector<1x1xf32>
    %cst_12 = arith.constant 4.8828125E-4 : f32
    %47 = vector.broadcast %cst_12 : f32 to vector<1x1xf32>
    %48 = arith.mulf %46, %47 : vector<1x1xf32>
    %49 = vector.broadcast %48 : vector<1x1xf32> to vector<8x288xf32>
    %50 = arith.subf %17, %49 : vector<8x288xf32>
    %cst_13 = arith.constant 0.000000e+00 : f32
    %51 = vector.shape_cast %38 : vector<1x288xi1> to vector<1x288xi1>
    %52 = vector.broadcast %51 : vector<1x288xi1> to vector<8x288xi1>
    %53 = vector.broadcast %cst_13 : f32 to vector<8x288xf32>
    %54 = arith.select %52, %50, %53 : vector<8x288xi1>, vector<8x288xf32>
    %55 = arith.mulf %54, %54 : vector<8x288xf32>
    %cst_14 = arith.constant dense<0.000000e+00> : vector<8xf32>
    %56 = vector.multi_reduction <add>, %55, %cst_14 [1] : vector<8x288xf32> to vector<8xf32>
    %57 = vector.shape_cast %56 : vector<8xf32> to vector<8x1xf32>
    %cst_15 = arith.constant dense<0.000000e+00> : vector<1xf32>
    %58 = vector.multi_reduction <add>, %57, %cst_15 [0] : vector<8x1xf32> to vector<1xf32>
    %59 = vector.shape_cast %58 : vector<1xf32> to vector<1x1xf32>
    %cst_16 = arith.constant 4.8828125E-4 : f32
    %60 = vector.broadcast %cst_16 : f32 to vector<1x1xf32>
    %61 = arith.mulf %59, %60 : vector<1x1xf32>
    %cst_17 = arith.constant 9.99999974E-6 : f32
    %62 = vector.broadcast %cst_17 : f32 to vector<1x1xf32>
    %63 = arith.addf %61, %62 : vector<1x1xf32>
    %64 = math.rsqrt %63 : vector<1x1xf32>
    %65 = vector.broadcast %64 : vector<1x1xf32> to vector<8x1xf32>
    %66 = arith.mulf %18, %65 : vector<8x1xf32>
    %67 = vector.broadcast %66 : vector<8x1xf32> to vector<8x288xf32>
    %68 = arith.mulf %17, %67 : vector<8x288xf32>
    %69 = vector.broadcast %48 : vector<1x1xf32> to vector<8x1xf32>
    %70 = arith.mulf %69, %66 : vector<8x1xf32>
    %71 = arith.subf %19, %70 : vector<8x1xf32>
    %72 = vector.broadcast %71 : vector<8x1xf32> to vector<8x288xf32>
    %73 = arith.addf %68, %72 : vector<8x288xf32>
    %74 = arith.negf %73 : vector<8x288xf32>
    %75 = math.exp %74 : vector<8x288xf32>
    %cst_18 = arith.constant 1.000000e+00 : f32
    %76 = vector.broadcast %cst_18 : f32 to vector<8x288xf32>
    %77 = arith.addf %76, %75 : vector<8x288xf32>
    %78 = arith.divf %76, %77 : vector<8x288xf32>
    %79 = arith.mulf %73, %78 : vector<8x288xf32>
    %c0_19 = arith.constant 0 : index
    %c0_20 = arith.constant 0 : index
    %c0_21 = arith.constant 0 : index
    %80 = vector.load %arg5[%c0_19, %c0_20, %c0_21] : memref<4x288x83xf32, #tpu.memory_space<vmem>>, vector<1x288x83xf32>
    %81 = vector.shape_cast %80 : vector<1x288x83xf32> to vector<288x83xf32>
    %cst_22 = arith.constant dense<0.000000e+00> : vector<8x83xf32>
    %82 = tpu.matmul %79, %81, %cst_22 {dimension_numbers = #tpu.dot_dimension_numbers<[1], [0], [0], [1], [0, 0, 1, 1], [], []>} : vector<8x288xf32>, vector<288x83xf32>, vector<8x83xf32> -> vector<8x83xf32>
    %c1 = arith.constant 1 : index
    %c0_23 = arith.constant 0 : index
    %c0_24 = arith.constant 0 : index
    %83 = vector.load %arg5[%c1, %c0_23, %c0_24] : memref<4x288x83xf32, #tpu.memory_space<vmem>>, vector<1x288x83xf32>
    %84 = vector.shape_cast %83 : vector<1x288x83xf32> to vector<288x83xf32>
    %cst_25 = arith.constant dense<0.000000e+00> : vector<8x83xf32>
    %85 = tpu.matmul %79, %84, %cst_25 {dimension_numbers = #tpu.dot_dimension_numbers<[1], [0], [0], [1], [0, 0, 1, 1], [], []>} : vector<8x288xf32>, vector<288x83xf32>, vector<8x83xf32> -> vector<8x83xf32>
    %c2 = arith.constant 2 : index
    %c0_26 = arith.constant 0 : index
    %c0_27 = arith.constant 0 : index
    %86 = vector.load %arg5[%c2, %c0_26, %c0_27] : memref<4x288x83xf32, #tpu.memory_space<vmem>>, vector<1x288x83xf32>
    %87 = vector.shape_cast %86 : vector<1x288x83xf32> to vector<288x83xf32>
    %cst_28 = arith.constant dense<0.000000e+00> : vector<8x83xf32>
    %88 = tpu.matmul %79, %87, %cst_28 {dimension_numbers = #tpu.dot_dimension_numbers<[1], [0], [0], [1], [0, 0, 1, 1], [], []>} : vector<8x288xf32>, vector<288x83xf32>, vector<8x83xf32> -> vector<8x83xf32>
    %c3 = arith.constant 3 : index
    %c0_29 = arith.constant 0 : index
    %c0_30 = arith.constant 0 : index
    %89 = vector.load %arg5[%c3, %c0_29, %c0_30] : memref<4x288x83xf32, #tpu.memory_space<vmem>>, vector<1x288x83xf32>
    %90 = vector.shape_cast %89 : vector<1x288x83xf32> to vector<288x83xf32>
    %cst_31 = arith.constant dense<0.000000e+00> : vector<8x83xf32>
    %91 = tpu.matmul %79, %90, %cst_31 {dimension_numbers = #tpu.dot_dimension_numbers<[1], [0], [0], [1], [0, 0, 1, 1], [], []>} : vector<8x288xf32>, vector<288x83xf32>, vector<8x83xf32> -> vector<8x83xf32>
    %92 = vector.extract_strided_slice %82 {offsets = [0, 0], sizes = [8, 72], strides = [1, 1]} : vector<8x83xf32> to vector<8x72xf32>
    %93 = vector.extract_strided_slice %82 {offsets = [0, 1], sizes = [8, 72], strides = [1, 1]} : vector<8x83xf32> to vector<8x72xf32>
    %94 = vector.extract_strided_slice %82 {offsets = [0, 9], sizes = [8, 72], strides = [1, 1]} : vector<8x83xf32> to vector<8x72xf32>
    %95 = vector.extract_strided_slice %82 {offsets = [0, 10], sizes = [8, 72], strides = [1, 1]} : vector<8x83xf32> to vector<8x72xf32>
    %96 = vector.extract_strided_slice %85 {offsets = [0, 0], sizes = [8, 72], strides = [1, 1]} : vector<8x83xf32> to vector<8x72xf32>
    %97 = vector.extract_strided_slice %85 {offsets = [0, 1], sizes = [8, 72], strides = [1, 1]} : vector<8x83xf32> to vector<8x72xf32>
    %98 = vector.extract_strided_slice %85 {offsets = [0, 9], sizes = [8, 72], strides = [1, 1]} : vector<8x83xf32> to vector<8x72xf32>
    %99 = vector.extract_strided_slice %85 {offsets = [0, 10], sizes = [8, 72], strides = [1, 1]} : vector<8x83xf32> to vector<8x72xf32>
    %100 = vector.extract_strided_slice %88 {offsets = [0, 0], sizes = [8, 72], strides = [1, 1]} : vector<8x83xf32> to vector<8x72xf32>
    %101 = vector.extract_strided_slice %88 {offsets = [0, 1], sizes = [8, 72], strides = [1, 1]} : vector<8x83xf32> to vector<8x72xf32>
    %102 = vector.extract_strided_slice %88 {offsets = [0, 9], sizes = [8, 72], strides = [1, 1]} : vector<8x83xf32> to vector<8x72xf32>
    %103 = vector.extract_strided_slice %88 {offsets = [0, 10], sizes = [8, 72], strides = [1, 1]} : vector<8x83xf32> to vector<8x72xf32>
    %104 = vector.extract_strided_slice %91 {offsets = [0, 0], sizes = [8, 72], strides = [1, 1]} : vector<8x83xf32> to vector<8x72xf32>
    %105 = vector.extract_strided_slice %91 {offsets = [0, 1], sizes = [8, 72], strides = [1, 1]} : vector<8x83xf32> to vector<8x72xf32>
    %106 = vector.extract_strided_slice %91 {offsets = [0, 9], sizes = [8, 72], strides = [1, 1]} : vector<8x83xf32> to vector<8x72xf32>
    %107 = vector.extract_strided_slice %91 {offsets = [0, 10], sizes = [8, 72], strides = [1, 1]} : vector<8x83xf32> to vector<8x72xf32>
    %108 = tpu.concatenate %92, %93, %94, %95, %96, %97, %98, %99, %100, %101, %102, %103, %104, %105, %106, %107 in 0 : vector<8x72xf32>, vector<8x72xf32>, vector<8x72xf32>, vector<8x72xf32>, vector<8x72xf32>, vector<8x72xf32>, vector<8x72xf32>, vector<8x72xf32>, vector<8x72xf32>, vector<8x72xf32>, vector<8x72xf32>, vector<8x72xf32>, vector<8x72xf32>, vector<8x72xf32>, vector<8x72xf32>, vector<8x72xf32> -> vector<128x72xf32>
    %c0_32 = arith.constant 0 : index
    %c0_33 = arith.constant 0 : index
    %109 = vector.load %arg4[%c0_32, %c0_33] : memref<8x128xf32, #tpu.memory_space<vmem>>, vector<8x128xf32>
    %cst_34 = arith.constant dense<0.000000e+00> : vector<8x72xf32>
    %110 = tpu.matmul %109, %108, %cst_34 {dimension_numbers = #tpu.dot_dimension_numbers<[1], [0], [0], [1], [0, 0, 1, 1], [], []>} : vector<8x128xf32>, vector<128x72xf32>, vector<8x72xf32> -> vector<8x72xf32>
    %111 = vector.extract_strided_slice %2 {offsets = [0, 4], sizes = [8, 1], strides = [1, 1]} : vector<8x8xf32> to vector<8x1xf32>
    %112 = vector.broadcast %111 : vector<8x1xf32> to vector<8x72xf32>
    %113 = arith.addf %110, %112 : vector<8x72xf32>
    %114 = vector.extract_strided_slice %2 {offsets = [0, 5], sizes = [8, 1], strides = [1, 1]} : vector<8x8xf32> to vector<8x1xf32>
    %115 = vector.extract_strided_slice %2 {offsets = [0, 6], sizes = [8, 1], strides = [1, 1]} : vector<8x8xf32> to vector<8x1xf32>
    %116 = tpu.iota {dimensions = array<i32: 1>} : vector<1x72xi32>
    %c9_i32 = arith.constant 9 : i32
    %c0_i32_35 = arith.constant 0 : i32
    %117 = arith.cmpi eq, %c9_i32, %c0_i32_35 : i32
    %c1_i32_36 = arith.constant 1 : i32
    %118 = arith.select %117, %c1_i32_36, %c9_i32 : i32
    %119 = vector.broadcast %118 : i32 to vector<1x72xi32>
    %120 = arith.remsi %116, %119 : vector<1x72xi32>
    %c0_i32_37 = arith.constant 0 : i32
    %121 = vector.broadcast %c0_i32_37 : i32 to vector<1x72xi32>
    %122 = arith.cmpi ne, %120, %121 : vector<1x72xi32>
    %c0_i32_38 = arith.constant 0 : i32
    %123 = vector.broadcast %c0_i32_38 : i32 to vector<1x72xi32>
    %124 = arith.cmpi slt, %120, %123 : vector<1x72xi32>
    %c0_i32_39 = arith.constant 0 : i32
    %125 = arith.cmpi slt, %118, %c0_i32_39 : i32
    %126 = vector.broadcast %125 : i1 to vector<1x72xi1>
    %127 = vector.broadcast %126 : vector<1x72xi1> to vector<1x72xi1>
    %128 = arith.xori %124, %127 : vector<1x72xi1>
    %129 = arith.andi %128, %122 : vector<1x72xi1>
    %130 = vector.broadcast %118 : i32 to vector<1x72xi32>
    %131 = arith.addi %120, %130 : vector<1x72xi32>
    %132 = arith.select %129, %131, %120 : vector<1x72xi1>, vector<1x72xi32>
    %c8_i32 = arith.constant 8 : i32
    %133 = vector.broadcast %c8_i32 : i32 to vector<1x72xi32>
    %134 = arith.cmpi slt, %132, %133 : vector<1x72xi32>
    %cst_40 = arith.constant 0.000000e+00 : f32
    %135 = vector.shape_cast %134 : vector<1x72xi1> to vector<1x72xi1>
    %136 = vector.broadcast %135 : vector<1x72xi1> to vector<8x72xi1>
    %137 = vector.broadcast %cst_40 : f32 to vector<8x72xf32>
    %138 = arith.select %136, %113, %137 : vector<8x72xi1>, vector<8x72xf32>
    %cst_41 = arith.constant dense<0.000000e+00> : vector<8xf32>
    %139 = vector.multi_reduction <add>, %138, %cst_41 [1] : vector<8x72xf32> to vector<8xf32>
    %140 = vector.shape_cast %139 : vector<8xf32> to vector<8x1xf32>
    %cst_42 = arith.constant dense<0.000000e+00> : vector<1xf32>
    %141 = vector.multi_reduction <add>, %140, %cst_42 [0] : vector<8x1xf32> to vector<1xf32>
    %142 = vector.shape_cast %141 : vector<1xf32> to vector<1x1xf32>
    %cst_43 = arith.constant 0.001953125 : f32
    %143 = vector.broadcast %cst_43 : f32 to vector<1x1xf32>
    %144 = arith.mulf %142, %143 : vector<1x1xf32>
    %145 = vector.broadcast %144 : vector<1x1xf32> to vector<8x72xf32>
    %146 = arith.subf %113, %145 : vector<8x72xf32>
    %cst_44 = arith.constant 0.000000e+00 : f32
    %147 = vector.shape_cast %134 : vector<1x72xi1> to vector<1x72xi1>
    %148 = vector.broadcast %147 : vector<1x72xi1> to vector<8x72xi1>
    %149 = vector.broadcast %cst_44 : f32 to vector<8x72xf32>
    %150 = arith.select %148, %146, %149 : vector<8x72xi1>, vector<8x72xf32>
    %151 = arith.mulf %150, %150 : vector<8x72xf32>
    %cst_45 = arith.constant dense<0.000000e+00> : vector<8xf32>
    %152 = vector.multi_reduction <add>, %151, %cst_45 [1] : vector<8x72xf32> to vector<8xf32>
    %153 = vector.shape_cast %152 : vector<8xf32> to vector<8x1xf32>
    %cst_46 = arith.constant dense<0.000000e+00> : vector<1xf32>
    %154 = vector.multi_reduction <add>, %153, %cst_46 [0] : vector<8x1xf32> to vector<1xf32>
    %155 = vector.shape_cast %154 : vector<1xf32> to vector<1x1xf32>
    %cst_47 = arith.constant 0.001953125 : f32
    %156 = vector.broadcast %cst_47 : f32 to vector<1x1xf32>
    %157 = arith.mulf %155, %156 : vector<1x1xf32>
    %cst_48 = arith.constant 9.99999974E-6 : f32
    %158 = vector.broadcast %cst_48 : f32 to vector<1x1xf32>
    %159 = arith.addf %157, %158 : vector<1x1xf32>
    %160 = math.rsqrt %159 : vector<1x1xf32>
    %161 = vector.broadcast %160 : vector<1x1xf32> to vector<8x1xf32>
    %162 = arith.mulf %114, %161 : vector<8x1xf32>
    %163 = vector.broadcast %162 : vector<8x1xf32> to vector<8x72xf32>
    %164 = arith.mulf %113, %163 : vector<8x72xf32>
    %165 = vector.broadcast %144 : vector<1x1xf32> to vector<8x1xf32>
    %166 = arith.mulf %165, %162 : vector<8x1xf32>
    %167 = arith.subf %115, %166 : vector<8x1xf32>
    %168 = vector.broadcast %167 : vector<8x1xf32> to vector<8x72xf32>
    %169 = arith.addf %164, %168 : vector<8x72xf32>
    %170 = arith.negf %169 : vector<8x72xf32>
    %171 = math.exp %170 : vector<8x72xf32>
    %cst_49 = arith.constant 1.000000e+00 : f32
    %172 = vector.broadcast %cst_49 : f32 to vector<8x72xf32>
    %173 = arith.addf %172, %171 : vector<8x72xf32>
    %174 = arith.divf %172, %173 : vector<8x72xf32>
    %175 = arith.mulf %169, %174 : vector<8x72xf32>
    %c0_50 = arith.constant 0 : index
    %c0_51 = arith.constant 0 : index
    %176 = vector.load %arg6[%c0_50, %c0_51] : memref<72x102xf32, #tpu.memory_space<vmem>>, vector<72x102xf32>
    %cst_52 = arith.constant dense<0.000000e+00> : vector<8x102xf32>
    %177 = tpu.matmul %175, %176, %cst_52 {dimension_numbers = #tpu.dot_dimension_numbers<[1], [0], [0], [1], [0, 0, 1, 1], [], []>} : vector<8x72xf32>, vector<72x102xf32>, vector<8x102xf32> -> vector<8x102xf32>
    %c0_53 = arith.constant 0 : index
    %c0_54 = arith.constant 0 : index
    %178 = vector.load %arg8[%c0_53, %c0_54] : memref<16x8xf32, #tpu.memory_space<vmem>>, vector<16x8xf32>
    %179 = vector.extract_strided_slice %177 {offsets = [0, 0], sizes = [8, 80], strides = [1, 1]} : vector<8x102xf32> to vector<8x80xf32>
    %180 = vector.extract_strided_slice %177 {offsets = [0, 1], sizes = [8, 80], strides = [1, 1]} : vector<8x102xf32> to vector<8x80xf32>
    %181 = vector.extract_strided_slice %177 {offsets = [0, 2], sizes = [8, 80], strides = [1, 1]} : vector<8x102xf32> to vector<8x80xf32>
    %182 = vector.extract_strided_slice %177 {offsets = [0, 10], sizes = [8, 80], strides = [1, 1]} : vector<8x102xf32> to vector<8x80xf32>
    %183 = vector.extract_strided_slice %177 {offsets = [0, 11], sizes = [8, 80], strides = [1, 1]} : vector<8x102xf32> to vector<8x80xf32>
    %184 = vector.extract_strided_slice %177 {offsets = [0, 12], sizes = [8, 80], strides = [1, 1]} : vector<8x102xf32> to vector<8x80xf32>
    %185 = vector.extract_strided_slice %177 {offsets = [0, 20], sizes = [8, 80], strides = [1, 1]} : vector<8x102xf32> to vector<8x80xf32>
    %186 = vector.extract_strided_slice %177 {offsets = [0, 21], sizes = [8, 80], strides = [1, 1]} : vector<8x102xf32> to vector<8x80xf32>
    %187 = vector.extract_strided_slice %177 {offsets = [0, 22], sizes = [8, 80], strides = [1, 1]} : vector<8x102xf32> to vector<8x80xf32>
    %188 = tpu.concatenate %179, %180, %181, %182, %183, %184, %185, %186, %187 in 0 : vector<8x80xf32>, vector<8x80xf32>, vector<8x80xf32>, vector<8x80xf32>, vector<8x80xf32>, vector<8x80xf32>, vector<8x80xf32>, vector<8x80xf32>, vector<8x80xf32> -> vector<72x80xf32>
    %c0_55 = arith.constant 0 : index
    %c0_56 = arith.constant 0 : index
    %189 = vector.load %arg7[%c0_55, %c0_56] : memref<16x72xf32, #tpu.memory_space<vmem>>, vector<16x72xf32>
    %cst_57 = arith.constant dense<0.000000e+00> : vector<16x80xf32>
    %190 = tpu.matmul %189, %188, %cst_57 {dimension_numbers = #tpu.dot_dimension_numbers<[1], [0], [0], [1], [0, 0, 1, 1], [], []>} : vector<16x72xf32>, vector<72x80xf32>, vector<16x80xf32> -> vector<16x80xf32>
    %191 = vector.extract_strided_slice %178 {offsets = [0, 0], sizes = [16, 1], strides = [1, 1]} : vector<16x8xf32> to vector<16x1xf32>
    %192 = vector.broadcast %191 : vector<16x1xf32> to vector<16x80xf32>
    %193 = arith.addf %190, %192 : vector<16x80xf32>
    %194 = vector.extract_strided_slice %178 {offsets = [0, 1], sizes = [16, 1], strides = [1, 1]} : vector<16x8xf32> to vector<16x1xf32>
    %195 = vector.extract_strided_slice %178 {offsets = [0, 2], sizes = [16, 1], strides = [1, 1]} : vector<16x8xf32> to vector<16x1xf32>
    %196 = tpu.iota {dimensions = array<i32: 1>} : vector<1x80xi32>
    %c10_i32 = arith.constant 10 : i32
    %c0_i32_58 = arith.constant 0 : i32
    %197 = arith.cmpi eq, %c10_i32, %c0_i32_58 : i32
    %c1_i32_59 = arith.constant 1 : i32
    %198 = arith.select %197, %c1_i32_59, %c10_i32 : i32
    %199 = vector.broadcast %198 : i32 to vector<1x80xi32>
    %200 = arith.remsi %196, %199 : vector<1x80xi32>
    %c0_i32_60 = arith.constant 0 : i32
    %201 = vector.broadcast %c0_i32_60 : i32 to vector<1x80xi32>
    %202 = arith.cmpi ne, %200, %201 : vector<1x80xi32>
    %c0_i32_61 = arith.constant 0 : i32
    %203 = vector.broadcast %c0_i32_61 : i32 to vector<1x80xi32>
    %204 = arith.cmpi slt, %200, %203 : vector<1x80xi32>
    %c0_i32_62 = arith.constant 0 : i32
    %205 = arith.cmpi slt, %198, %c0_i32_62 : i32
    %206 = vector.broadcast %205 : i1 to vector<1x80xi1>
    %207 = vector.broadcast %206 : vector<1x80xi1> to vector<1x80xi1>
    %208 = arith.xori %204, %207 : vector<1x80xi1>
    %209 = arith.andi %208, %202 : vector<1x80xi1>
    %210 = vector.broadcast %198 : i32 to vector<1x80xi32>
    %211 = arith.addi %200, %210 : vector<1x80xi32>
    %212 = arith.select %209, %211, %200 : vector<1x80xi1>, vector<1x80xi32>
    %c8_i32_63 = arith.constant 8 : i32
    %213 = vector.broadcast %c8_i32_63 : i32 to vector<1x80xi32>
    %214 = arith.cmpi slt, %212, %213 : vector<1x80xi32>
    %cst_64 = arith.constant 0.000000e+00 : f32
    %215 = vector.shape_cast %214 : vector<1x80xi1> to vector<1x80xi1>
    %216 = vector.broadcast %215 : vector<1x80xi1> to vector<16x80xi1>
    %217 = vector.broadcast %cst_64 : f32 to vector<16x80xf32>
    %218 = arith.select %216, %193, %217 : vector<16x80xi1>, vector<16x80xf32>
    %cst_65 = arith.constant dense<0.000000e+00> : vector<16xf32>
    %219 = vector.multi_reduction <add>, %218, %cst_65 [1] : vector<16x80xf32> to vector<16xf32>
    %220 = vector.shape_cast %219 : vector<16xf32> to vector<16x1xf32>
    %cst_66 = arith.constant dense<0.000000e+00> : vector<1xf32>
    %221 = vector.multi_reduction <add>, %220, %cst_66 [0] : vector<16x1xf32> to vector<1xf32>
    %222 = vector.shape_cast %221 : vector<1xf32> to vector<1x1xf32>
    %cst_67 = arith.constant 9.765625E-4 : f32
    %223 = vector.broadcast %cst_67 : f32 to vector<1x1xf32>
    %224 = arith.mulf %222, %223 : vector<1x1xf32>
    %225 = vector.broadcast %224 : vector<1x1xf32> to vector<16x80xf32>
    %226 = arith.subf %193, %225 : vector<16x80xf32>
    %cst_68 = arith.constant 0.000000e+00 : f32
    %227 = vector.shape_cast %214 : vector<1x80xi1> to vector<1x80xi1>
    %228 = vector.broadcast %227 : vector<1x80xi1> to vector<16x80xi1>
    %229 = vector.broadcast %cst_68 : f32 to vector<16x80xf32>
    %230 = arith.select %228, %226, %229 : vector<16x80xi1>, vector<16x80xf32>
    %231 = arith.mulf %230, %230 : vector<16x80xf32>
    %cst_69 = arith.constant dense<0.000000e+00> : vector<16xf32>
    %232 = vector.multi_reduction <add>, %231, %cst_69 [1] : vector<16x80xf32> to vector<16xf32>
    %233 = vector.shape_cast %232 : vector<16xf32> to vector<16x1xf32>
    %cst_70 = arith.constant dense<0.000000e+00> : vector<1xf32>
    %234 = vector.multi_reduction <add>, %233, %cst_70 [0] : vector<16x1xf32> to vector<1xf32>
    %235 = vector.shape_cast %234 : vector<1xf32> to vector<1x1xf32>
    %cst_71 = arith.constant 9.765625E-4 : f32
    %236 = vector.broadcast %cst_71 : f32 to vector<1x1xf32>
    %237 = arith.mulf %235, %236 : vector<1x1xf32>
    %cst_72 = arith.constant 9.99999974E-6 : f32
    %238 = vector.broadcast %cst_72 : f32 to vector<1x1xf32>
    %239 = arith.addf %237, %238 : vector<1x1xf32>
    %240 = math.rsqrt %239 : vector<1x1xf32>
    %241 = vector.broadcast %240 : vector<1x1xf32> to vector<16x1xf32>
    %242 = arith.mulf %194, %241 : vector<16x1xf32>
    %243 = vector.broadcast %242 : vector<16x1xf32> to vector<16x80xf32>
    %244 = arith.mulf %193, %243 : vector<16x80xf32>
    %245 = vector.broadcast %224 : vector<1x1xf32> to vector<16x1xf32>
    %246 = arith.mulf %245, %242 : vector<16x1xf32>
    %247 = arith.subf %195, %246 : vector<16x1xf32>
    %248 = vector.broadcast %247 : vector<16x1xf32> to vector<16x80xf32>
    %249 = arith.addf %244, %248 : vector<16x80xf32>
    %250 = arith.negf %249 : vector<16x80xf32>
    %251 = math.exp %250 : vector<16x80xf32>
    %cst_73 = arith.constant 1.000000e+00 : f32
    %252 = vector.broadcast %cst_73 : f32 to vector<16x80xf32>
    %253 = arith.addf %252, %251 : vector<16x80xf32>
    %254 = arith.divf %252, %253 : vector<16x80xf32>
    %255 = arith.mulf %249, %254 : vector<16x80xf32>
    %c0_74 = arith.constant 0 : index
    %c0_75 = arith.constant 0 : index
    %c0_76 = arith.constant 0 : index
    %256 = vector.load %arg10[%c0_74, %c0_75, %c0_76] : memref<4x80x27xf32, #tpu.memory_space<vmem>>, vector<1x80x27xf32>
    %257 = vector.shape_cast %256 : vector<1x80x27xf32> to vector<80x27xf32>
    %cst_77 = arith.constant dense<0.000000e+00> : vector<16x27xf32>
    %258 = tpu.matmul %255, %257, %cst_77 {dimension_numbers = #tpu.dot_dimension_numbers<[1], [0], [0], [1], [0, 0, 1, 1], [], []>} : vector<16x80xf32>, vector<80x27xf32>, vector<16x27xf32> -> vector<16x27xf32>
    %c1_78 = arith.constant 1 : index
    %c0_79 = arith.constant 0 : index
    %c0_80 = arith.constant 0 : index
    %259 = vector.load %arg10[%c1_78, %c0_79, %c0_80] : memref<4x80x27xf32, #tpu.memory_space<vmem>>, vector<1x80x27xf32>
    %260 = vector.shape_cast %259 : vector<1x80x27xf32> to vector<80x27xf32>
    %cst_81 = arith.constant dense<0.000000e+00> : vector<16x27xf32>
    %261 = tpu.matmul %255, %260, %cst_81 {dimension_numbers = #tpu.dot_dimension_numbers<[1], [0], [0], [1], [0, 0, 1, 1], [], []>} : vector<16x80xf32>, vector<80x27xf32>, vector<16x27xf32> -> vector<16x27xf32>
    %c2_82 = arith.constant 2 : index
    %c0_83 = arith.constant 0 : index
    %c0_84 = arith.constant 0 : index
    %262 = vector.load %arg10[%c2_82, %c0_83, %c0_84] : memref<4x80x27xf32, #tpu.memory_space<vmem>>, vector<1x80x27xf32>
    %263 = vector.shape_cast %262 : vector<1x80x27xf32> to vector<80x27xf32>
    %cst_85 = arith.constant dense<0.000000e+00> : vector<16x27xf32>
    %264 = tpu.matmul %255, %263, %cst_85 {dimension_numbers = #tpu.dot_dimension_numbers<[1], [0], [0], [1], [0, 0, 1, 1], [], []>} : vector<16x80xf32>, vector<80x27xf32>, vector<16x27xf32> -> vector<16x27xf32>
    %c3_86 = arith.constant 3 : index
    %c0_87 = arith.constant 0 : index
    %c0_88 = arith.constant 0 : index
    %265 = vector.load %arg10[%c3_86, %c0_87, %c0_88] : memref<4x80x27xf32, #tpu.memory_space<vmem>>, vector<1x80x27xf32>
    %266 = vector.shape_cast %265 : vector<1x80x27xf32> to vector<80x27xf32>
    %cst_89 = arith.constant dense<0.000000e+00> : vector<16x27xf32>
    %267 = tpu.matmul %255, %266, %cst_89 {dimension_numbers = #tpu.dot_dimension_numbers<[1], [0], [0], [1], [0, 0, 1, 1], [], []>} : vector<16x80xf32>, vector<80x27xf32>, vector<16x27xf32> -> vector<16x27xf32>
    %268 = vector.extract_strided_slice %258 {offsets = [0, 0], sizes = [16, 20], strides = [1, 1]} : vector<16x27xf32> to vector<16x20xf32>
    %269 = vector.extract_strided_slice %258 {offsets = [0, 1], sizes = [16, 20], strides = [1, 1]} : vector<16x27xf32> to vector<16x20xf32>
    %270 = vector.extract_strided_slice %258 {offsets = [0, 5], sizes = [16, 20], strides = [1, 1]} : vector<16x27xf32> to vector<16x20xf32>
    %271 = vector.extract_strided_slice %258 {offsets = [0, 6], sizes = [16, 20], strides = [1, 1]} : vector<16x27xf32> to vector<16x20xf32>
    %272 = vector.extract_strided_slice %261 {offsets = [0, 0], sizes = [16, 20], strides = [1, 1]} : vector<16x27xf32> to vector<16x20xf32>
    %273 = vector.extract_strided_slice %261 {offsets = [0, 1], sizes = [16, 20], strides = [1, 1]} : vector<16x27xf32> to vector<16x20xf32>
    %274 = vector.extract_strided_slice %261 {offsets = [0, 5], sizes = [16, 20], strides = [1, 1]} : vector<16x27xf32> to vector<16x20xf32>
    %275 = vector.extract_strided_slice %261 {offsets = [0, 6], sizes = [16, 20], strides = [1, 1]} : vector<16x27xf32> to vector<16x20xf32>
    %276 = vector.extract_strided_slice %264 {offsets = [0, 0], sizes = [16, 20], strides = [1, 1]} : vector<16x27xf32> to vector<16x20xf32>
    %277 = vector.extract_strided_slice %264 {offsets = [0, 1], sizes = [16, 20], strides = [1, 1]} : vector<16x27xf32> to vector<16x20xf32>
    %278 = vector.extract_strided_slice %264 {offsets = [0, 5], sizes = [16, 20], strides = [1, 1]} : vector<16x27xf32> to vector<16x20xf32>
    %279 = vector.extract_strided_slice %264 {offsets = [0, 6], sizes = [16, 20], strides = [1, 1]} : vector<16x27xf32> to vector<16x20xf32>
    %280 = vector.extract_strided_slice %267 {offsets = [0, 0], sizes = [16, 20], strides = [1, 1]} : vector<16x27xf32> to vector<16x20xf32>
    %281 = vector.extract_strided_slice %267 {offsets = [0, 1], sizes = [16, 20], strides = [1, 1]} : vector<16x27xf32> to vector<16x20xf32>
    %282 = vector.extract_strided_slice %267 {offsets = [0, 5], sizes = [16, 20], strides = [1, 1]} : vector<16x27xf32> to vector<16x20xf32>
    %283 = vector.extract_strided_slice %267 {offsets = [0, 6], sizes = [16, 20], strides = [1, 1]} : vector<16x27xf32> to vector<16x20xf32>
    %284 = tpu.concatenate %268, %269, %270, %271, %272, %273, %274, %275, %276, %277, %278, %279, %280, %281, %282, %283 in 0 : vector<16x20xf32>, vector<16x20xf32>, vector<16x20xf32>, vector<16x20xf32>, vector<16x20xf32>, vector<16x20xf32>, vector<16x20xf32>, vector<16x20xf32>, vector<16x20xf32>, vector<16x20xf32>, vector<16x20xf32>, vector<16x20xf32>, vector<16x20xf32>, vector<16x20xf32>, vector<16x20xf32>, vector<16x20xf32> -> vector<256x20xf32>
    %c0_90 = arith.constant 0 : index
    %c0_91 = arith.constant 0 : index
    %285 = vector.load %arg9[%c0_90, %c0_91] : memref<16x256xf32, #tpu.memory_space<vmem>>, vector<16x256xf32>
    %cst_92 = arith.constant dense<0.000000e+00> : vector<16x20xf32>
    %286 = tpu.matmul %285, %284, %cst_92 {dimension_numbers = #tpu.dot_dimension_numbers<[1], [0], [0], [1], [0, 0, 1, 1], [], []>} : vector<16x256xf32>, vector<256x20xf32>, vector<16x20xf32> -> vector<16x20xf32>
    %287 = vector.extract_strided_slice %178 {offsets = [0, 4], sizes = [16, 1], strides = [1, 1]} : vector<16x8xf32> to vector<16x1xf32>
    %288 = vector.broadcast %287 : vector<16x1xf32> to vector<16x20xf32>
    %289 = arith.addf %286, %288 : vector<16x20xf32>
    %290 = vector.extract_strided_slice %178 {offsets = [0, 5], sizes = [16, 1], strides = [1, 1]} : vector<16x8xf32> to vector<16x1xf32>
    %291 = vector.extract_strided_slice %178 {offsets = [0, 6], sizes = [16, 1], strides = [1, 1]} : vector<16x8xf32> to vector<16x1xf32>
    %292 = tpu.iota {dimensions = array<i32: 1>} : vector<1x20xi32>
    %c5_i32 = arith.constant 5 : i32
    %c0_i32_93 = arith.constant 0 : i32
    %293 = arith.cmpi eq, %c5_i32, %c0_i32_93 : i32
    %c1_i32_94 = arith.constant 1 : i32
    %294 = arith.select %293, %c1_i32_94, %c5_i32 : i32
    %295 = vector.broadcast %294 : i32 to vector<1x20xi32>
    %296 = arith.remsi %292, %295 : vector<1x20xi32>
    %c0_i32_95 = arith.constant 0 : i32
    %297 = vector.broadcast %c0_i32_95 : i32 to vector<1x20xi32>
    %298 = arith.cmpi ne, %296, %297 : vector<1x20xi32>
    %c0_i32_96 = arith.constant 0 : i32
    %299 = vector.broadcast %c0_i32_96 : i32 to vector<1x20xi32>
    %300 = arith.cmpi slt, %296, %299 : vector<1x20xi32>
    %c0_i32_97 = arith.constant 0 : i32
    %301 = arith.cmpi slt, %294, %c0_i32_97 : i32
    %302 = vector.broadcast %301 : i1 to vector<1x20xi1>
    %303 = vector.broadcast %302 : vector<1x20xi1> to vector<1x20xi1>
    %304 = arith.xori %300, %303 : vector<1x20xi1>
    %305 = arith.andi %304, %298 : vector<1x20xi1>
    %306 = vector.broadcast %294 : i32 to vector<1x20xi32>
    %307 = arith.addi %296, %306 : vector<1x20xi32>
    %308 = arith.select %305, %307, %296 : vector<1x20xi1>, vector<1x20xi32>
    %c4_i32 = arith.constant 4 : i32
    %309 = vector.broadcast %c4_i32 : i32 to vector<1x20xi32>
    %310 = arith.cmpi slt, %308, %309 : vector<1x20xi32>
    %cst_98 = arith.constant 0.000000e+00 : f32
    %311 = vector.shape_cast %310 : vector<1x20xi1> to vector<1x20xi1>
    %312 = vector.broadcast %311 : vector<1x20xi1> to vector<16x20xi1>
    %313 = vector.broadcast %cst_98 : f32 to vector<16x20xf32>
    %314 = arith.select %312, %289, %313 : vector<16x20xi1>, vector<16x20xf32>
    %cst_99 = arith.constant dense<0.000000e+00> : vector<16xf32>
    %315 = vector.multi_reduction <add>, %314, %cst_99 [1] : vector<16x20xf32> to vector<16xf32>
    %316 = vector.shape_cast %315 : vector<16xf32> to vector<16x1xf32>
    %cst_100 = arith.constant dense<0.000000e+00> : vector<1xf32>
    %317 = vector.multi_reduction <add>, %316, %cst_100 [0] : vector<16x1xf32> to vector<1xf32>
    %318 = vector.shape_cast %317 : vector<1xf32> to vector<1x1xf32>
    %cst_101 = arith.constant 3.906250e-03 : f32
    %319 = vector.broadcast %cst_101 : f32 to vector<1x1xf32>
    %320 = arith.mulf %318, %319 : vector<1x1xf32>
    %321 = vector.broadcast %320 : vector<1x1xf32> to vector<16x20xf32>
    %322 = arith.subf %289, %321 : vector<16x20xf32>
    %cst_102 = arith.constant 0.000000e+00 : f32
    %323 = vector.shape_cast %310 : vector<1x20xi1> to vector<1x20xi1>
    %324 = vector.broadcast %323 : vector<1x20xi1> to vector<16x20xi1>
    %325 = vector.broadcast %cst_102 : f32 to vector<16x20xf32>
    %326 = arith.select %324, %322, %325 : vector<16x20xi1>, vector<16x20xf32>
    %327 = arith.mulf %326, %326 : vector<16x20xf32>
    %cst_103 = arith.constant dense<0.000000e+00> : vector<16xf32>
    %328 = vector.multi_reduction <add>, %327, %cst_103 [1] : vector<16x20xf32> to vector<16xf32>
    %329 = vector.shape_cast %328 : vector<16xf32> to vector<16x1xf32>
    %cst_104 = arith.constant dense<0.000000e+00> : vector<1xf32>
    %330 = vector.multi_reduction <add>, %329, %cst_104 [0] : vector<16x1xf32> to vector<1xf32>
    %331 = vector.shape_cast %330 : vector<1xf32> to vector<1x1xf32>
    %cst_105 = arith.constant 3.906250e-03 : f32
    %332 = vector.broadcast %cst_105 : f32 to vector<1x1xf32>
    %333 = arith.mulf %331, %332 : vector<1x1xf32>
    %cst_106 = arith.constant 9.99999974E-6 : f32
    %334 = vector.broadcast %cst_106 : f32 to vector<1x1xf32>
    %335 = arith.addf %333, %334 : vector<1x1xf32>
    %336 = math.rsqrt %335 : vector<1x1xf32>
    %337 = vector.broadcast %336 : vector<1x1xf32> to vector<16x1xf32>
    %338 = arith.mulf %290, %337 : vector<16x1xf32>
    %339 = vector.broadcast %338 : vector<16x1xf32> to vector<16x20xf32>
    %340 = arith.mulf %289, %339 : vector<16x20xf32>
    %341 = vector.broadcast %320 : vector<1x1xf32> to vector<16x1xf32>
    %342 = arith.mulf %341, %338 : vector<16x1xf32>
    %343 = arith.subf %291, %342 : vector<16x1xf32>
    %344 = vector.broadcast %343 : vector<16x1xf32> to vector<16x20xf32>
    %345 = arith.addf %340, %344 : vector<16x20xf32>
    %346 = arith.negf %345 : vector<16x20xf32>
    %347 = math.exp %346 : vector<16x20xf32>
    %cst_107 = arith.constant 1.000000e+00 : f32
    %348 = vector.broadcast %cst_107 : f32 to vector<16x20xf32>
    %349 = arith.addf %348, %347 : vector<16x20xf32>
    %350 = arith.divf %348, %349 : vector<16x20xf32>
    %351 = arith.mulf %345, %350 : vector<16x20xf32>
    %c0_108 = arith.constant 0 : index
    %c0_109 = arith.constant 0 : index
    %352 = vector.load %arg12[%c0_108, %c0_109] : memref<1x128xf32, #tpu.memory_space<vmem>>, vector<1x128xf32>
    %353 = vector.extract_strided_slice %351 {offsets = [0, 0], sizes = [1, 20], strides = [1, 1]} : vector<16x20xf32> to vector<1x20xf32>
    %c0_110 = arith.constant 0 : index
    %c0_111 = arith.constant 0 : index
    %c0_112 = arith.constant 0 : index
    %354 = vector.load %arg11[%c0_110, %c0_111, %c0_112] : memref<16x20x128xf32, #tpu.memory_space<vmem>>, vector<1x20x128xf32>
    %355 = vector.shape_cast %354 : vector<1x20x128xf32> to vector<20x128xf32>
    %cst_113 = arith.constant dense<0.000000e+00> : vector<1x128xf32>
    %356 = tpu.matmul %353, %355, %cst_113 {dimension_numbers = #tpu.dot_dimension_numbers<[1], [0], [0], [1], [0, 0, 1, 1], [], []>} : vector<1x20xf32>, vector<20x128xf32>, vector<1x128xf32> -> vector<1x128xf32>
    %357 = arith.addf %352, %356 : vector<1x128xf32>
    %358 = vector.extract_strided_slice %351 {offsets = [1, 0], sizes = [1, 20], strides = [1, 1]} : vector<16x20xf32> to vector<1x20xf32>
    %c1_114 = arith.constant 1 : index
    %c0_115 = arith.constant 0 : index
    %c0_116 = arith.constant 0 : index
    %359 = vector.load %arg11[%c1_114, %c0_115, %c0_116] : memref<16x20x128xf32, #tpu.memory_space<vmem>>, vector<1x20x128xf32>
    %360 = vector.shape_cast %359 : vector<1x20x128xf32> to vector<20x128xf32>
    %cst_117 = arith.constant dense<0.000000e+00> : vector<1x128xf32>
    %361 = tpu.matmul %358, %360, %cst_117 {dimension_numbers = #tpu.dot_dimension_numbers<[1], [0], [0], [1], [0, 0, 1, 1], [], []>} : vector<1x20xf32>, vector<20x128xf32>, vector<1x128xf32> -> vector<1x128xf32>
    %362 = arith.addf %357, %361 : vector<1x128xf32>
    %363 = vector.extract_strided_slice %351 {offsets = [2, 0], sizes = [1, 20], strides = [1, 1]} : vector<16x20xf32> to vector<1x20xf32>
    %c2_118 = arith.constant 2 : index
    %c0_119 = arith.constant 0 : index
    %c0_120 = arith.constant 0 : index
    %364 = vector.load %arg11[%c2_118, %c0_119, %c0_120] : memref<16x20x128xf32, #tpu.memory_space<vmem>>, vector<1x20x128xf32>
    %365 = vector.shape_cast %364 : vector<1x20x128xf32> to vector<20x128xf32>
    %cst_121 = arith.constant dense<0.000000e+00> : vector<1x128xf32>
    %366 = tpu.matmul %363, %365, %cst_121 {dimension_numbers = #tpu.dot_dimension_numbers<[1], [0], [0], [1], [0, 0, 1, 1], [], []>} : vector<1x20xf32>, vector<20x128xf32>, vector<1x128xf32> -> vector<1x128xf32>
    %367 = arith.addf %362, %366 : vector<1x128xf32>
    %368 = vector.extract_strided_slice %351 {offsets = [3, 0], sizes = [1, 20], strides = [1, 1]} : vector<16x20xf32> to vector<1x20xf32>
    %c3_122 = arith.constant 3 : index
    %c0_123 = arith.constant 0 : index
    %c0_124 = arith.constant 0 : index
    %369 = vector.load %arg11[%c3_122, %c0_123, %c0_124] : memref<16x20x128xf32, #tpu.memory_space<vmem>>, vector<1x20x128xf32>
    %370 = vector.shape_cast %369 : vector<1x20x128xf32> to vector<20x128xf32>
    %cst_125 = arith.constant dense<0.000000e+00> : vector<1x128xf32>
    %371 = tpu.matmul %368, %370, %cst_125 {dimension_numbers = #tpu.dot_dimension_numbers<[1], [0], [0], [1], [0, 0, 1, 1], [], []>} : vector<1x20xf32>, vector<20x128xf32>, vector<1x128xf32> -> vector<1x128xf32>
    %372 = arith.addf %367, %371 : vector<1x128xf32>
    %373 = vector.extract_strided_slice %351 {offsets = [4, 0], sizes = [1, 20], strides = [1, 1]} : vector<16x20xf32> to vector<1x20xf32>
    %c4 = arith.constant 4 : index
    %c0_126 = arith.constant 0 : index
    %c0_127 = arith.constant 0 : index
    %374 = vector.load %arg11[%c4, %c0_126, %c0_127] : memref<16x20x128xf32, #tpu.memory_space<vmem>>, vector<1x20x128xf32>
    %375 = vector.shape_cast %374 : vector<1x20x128xf32> to vector<20x128xf32>
    %cst_128 = arith.constant dense<0.000000e+00> : vector<1x128xf32>
    %376 = tpu.matmul %373, %375, %cst_128 {dimension_numbers = #tpu.dot_dimension_numbers<[1], [0], [0], [1], [0, 0, 1, 1], [], []>} : vector<1x20xf32>, vector<20x128xf32>, vector<1x128xf32> -> vector<1x128xf32>
    %377 = arith.addf %372, %376 : vector<1x128xf32>
    %378 = vector.extract_strided_slice %351 {offsets = [5, 0], sizes = [1, 20], strides = [1, 1]} : vector<16x20xf32> to vector<1x20xf32>
    %c5 = arith.constant 5 : index
    %c0_129 = arith.constant 0 : index
    %c0_130 = arith.constant 0 : index
    %379 = vector.load %arg11[%c5, %c0_129, %c0_130] : memref<16x20x128xf32, #tpu.memory_space<vmem>>, vector<1x20x128xf32>
    %380 = vector.shape_cast %379 : vector<1x20x128xf32> to vector<20x128xf32>
    %cst_131 = arith.constant dense<0.000000e+00> : vector<1x128xf32>
    %381 = tpu.matmul %378, %380, %cst_131 {dimension_numbers = #tpu.dot_dimension_numbers<[1], [0], [0], [1], [0, 0, 1, 1], [], []>} : vector<1x20xf32>, vector<20x128xf32>, vector<1x128xf32> -> vector<1x128xf32>
    %382 = arith.addf %377, %381 : vector<1x128xf32>
    %383 = vector.extract_strided_slice %351 {offsets = [6, 0], sizes = [1, 20], strides = [1, 1]} : vector<16x20xf32> to vector<1x20xf32>
    %c6 = arith.constant 6 : index
    %c0_132 = arith.constant 0 : index
    %c0_133 = arith.constant 0 : index
    %384 = vector.load %arg11[%c6, %c0_132, %c0_133] : memref<16x20x128xf32, #tpu.memory_space<vmem>>, vector<1x20x128xf32>
    %385 = vector.shape_cast %384 : vector<1x20x128xf32> to vector<20x128xf32>
    %cst_134 = arith.constant dense<0.000000e+00> : vector<1x128xf32>
    %386 = tpu.matmul %383, %385, %cst_134 {dimension_numbers = #tpu.dot_dimension_numbers<[1], [0], [0], [1], [0, 0, 1, 1], [], []>} : vector<1x20xf32>, vector<20x128xf32>, vector<1x128xf32> -> vector<1x128xf32>
    %387 = arith.addf %382, %386 : vector<1x128xf32>
    %388 = vector.extract_strided_slice %351 {offsets = [7, 0], sizes = [1, 20], strides = [1, 1]} : vector<16x20xf32> to vector<1x20xf32>
    %c7 = arith.constant 7 : index
    %c0_135 = arith.constant 0 : index
    %c0_136 = arith.constant 0 : index
    %389 = vector.load %arg11[%c7, %c0_135, %c0_136] : memref<16x20x128xf32, #tpu.memory_space<vmem>>, vector<1x20x128xf32>
    %390 = vector.shape_cast %389 : vector<1x20x128xf32> to vector<20x128xf32>
    %cst_137 = arith.constant dense<0.000000e+00> : vector<1x128xf32>
    %391 = tpu.matmul %388, %390, %cst_137 {dimension_numbers = #tpu.dot_dimension_numbers<[1], [0], [0], [1], [0, 0, 1, 1], [], []>} : vector<1x20xf32>, vector<20x128xf32>, vector<1x128xf32> -> vector<1x128xf32>
    %392 = arith.addf %387, %391 : vector<1x128xf32>
    %393 = vector.extract_strided_slice %351 {offsets = [8, 0], sizes = [1, 20], strides = [1, 1]} : vector<16x20xf32> to vector<1x20xf32>
    %c8 = arith.constant 8 : index
    %c0_138 = arith.constant 0 : index
    %c0_139 = arith.constant 0 : index
    %394 = vector.load %arg11[%c8, %c0_138, %c0_139] : memref<16x20x128xf32, #tpu.memory_space<vmem>>, vector<1x20x128xf32>
    %395 = vector.shape_cast %394 : vector<1x20x128xf32> to vector<20x128xf32>
    %cst_140 = arith.constant dense<0.000000e+00> : vector<1x128xf32>
    %396 = tpu.matmul %393, %395, %cst_140 {dimension_numbers = #tpu.dot_dimension_numbers<[1], [0], [0], [1], [0, 0, 1, 1], [], []>} : vector<1x20xf32>, vector<20x128xf32>, vector<1x128xf32> -> vector<1x128xf32>
    %397 = arith.addf %392, %396 : vector<1x128xf32>
    %398 = vector.extract_strided_slice %351 {offsets = [9, 0], sizes = [1, 20], strides = [1, 1]} : vector<16x20xf32> to vector<1x20xf32>
    %c9 = arith.constant 9 : index
    %c0_141 = arith.constant 0 : index
    %c0_142 = arith.constant 0 : index
    %399 = vector.load %arg11[%c9, %c0_141, %c0_142] : memref<16x20x128xf32, #tpu.memory_space<vmem>>, vector<1x20x128xf32>
    %400 = vector.shape_cast %399 : vector<1x20x128xf32> to vector<20x128xf32>
    %cst_143 = arith.constant dense<0.000000e+00> : vector<1x128xf32>
    %401 = tpu.matmul %398, %400, %cst_143 {dimension_numbers = #tpu.dot_dimension_numbers<[1], [0], [0], [1], [0, 0, 1, 1], [], []>} : vector<1x20xf32>, vector<20x128xf32>, vector<1x128xf32> -> vector<1x128xf32>
    %402 = arith.addf %397, %401 : vector<1x128xf32>
    %403 = vector.extract_strided_slice %351 {offsets = [10, 0], sizes = [1, 20], strides = [1, 1]} : vector<16x20xf32> to vector<1x20xf32>
    %c10 = arith.constant 10 : index
    %c0_144 = arith.constant 0 : index
    %c0_145 = arith.constant 0 : index
    %404 = vector.load %arg11[%c10, %c0_144, %c0_145] : memref<16x20x128xf32, #tpu.memory_space<vmem>>, vector<1x20x128xf32>
    %405 = vector.shape_cast %404 : vector<1x20x128xf32> to vector<20x128xf32>
    %cst_146 = arith.constant dense<0.000000e+00> : vector<1x128xf32>
    %406 = tpu.matmul %403, %405, %cst_146 {dimension_numbers = #tpu.dot_dimension_numbers<[1], [0], [0], [1], [0, 0, 1, 1], [], []>} : vector<1x20xf32>, vector<20x128xf32>, vector<1x128xf32> -> vector<1x128xf32>
    %407 = arith.addf %402, %406 : vector<1x128xf32>
    %408 = vector.extract_strided_slice %351 {offsets = [11, 0], sizes = [1, 20], strides = [1, 1]} : vector<16x20xf32> to vector<1x20xf32>
    %c11 = arith.constant 11 : index
    %c0_147 = arith.constant 0 : index
    %c0_148 = arith.constant 0 : index
    %409 = vector.load %arg11[%c11, %c0_147, %c0_148] : memref<16x20x128xf32, #tpu.memory_space<vmem>>, vector<1x20x128xf32>
    %410 = vector.shape_cast %409 : vector<1x20x128xf32> to vector<20x128xf32>
    %cst_149 = arith.constant dense<0.000000e+00> : vector<1x128xf32>
    %411 = tpu.matmul %408, %410, %cst_149 {dimension_numbers = #tpu.dot_dimension_numbers<[1], [0], [0], [1], [0, 0, 1, 1], [], []>} : vector<1x20xf32>, vector<20x128xf32>, vector<1x128xf32> -> vector<1x128xf32>
    %412 = arith.addf %407, %411 : vector<1x128xf32>
    %413 = vector.extract_strided_slice %351 {offsets = [12, 0], sizes = [1, 20], strides = [1, 1]} : vector<16x20xf32> to vector<1x20xf32>
    %c12 = arith.constant 12 : index
    %c0_150 = arith.constant 0 : index
    %c0_151 = arith.constant 0 : index
    %414 = vector.load %arg11[%c12, %c0_150, %c0_151] : memref<16x20x128xf32, #tpu.memory_space<vmem>>, vector<1x20x128xf32>
    %415 = vector.shape_cast %414 : vector<1x20x128xf32> to vector<20x128xf32>
    %cst_152 = arith.constant dense<0.000000e+00> : vector<1x128xf32>
    %416 = tpu.matmul %413, %415, %cst_152 {dimension_numbers = #tpu.dot_dimension_numbers<[1], [0], [0], [1], [0, 0, 1, 1], [], []>} : vector<1x20xf32>, vector<20x128xf32>, vector<1x128xf32> -> vector<1x128xf32>
    %417 = arith.addf %412, %416 : vector<1x128xf32>
    %418 = vector.extract_strided_slice %351 {offsets = [13, 0], sizes = [1, 20], strides = [1, 1]} : vector<16x20xf32> to vector<1x20xf32>
    %c13 = arith.constant 13 : index
    %c0_153 = arith.constant 0 : index
    %c0_154 = arith.constant 0 : index
    %419 = vector.load %arg11[%c13, %c0_153, %c0_154] : memref<16x20x128xf32, #tpu.memory_space<vmem>>, vector<1x20x128xf32>
    %420 = vector.shape_cast %419 : vector<1x20x128xf32> to vector<20x128xf32>
    %cst_155 = arith.constant dense<0.000000e+00> : vector<1x128xf32>
    %421 = tpu.matmul %418, %420, %cst_155 {dimension_numbers = #tpu.dot_dimension_numbers<[1], [0], [0], [1], [0, 0, 1, 1], [], []>} : vector<1x20xf32>, vector<20x128xf32>, vector<1x128xf32> -> vector<1x128xf32>
    %422 = arith.addf %417, %421 : vector<1x128xf32>
    %423 = vector.extract_strided_slice %351 {offsets = [14, 0], sizes = [1, 20], strides = [1, 1]} : vector<16x20xf32> to vector<1x20xf32>
    %c14 = arith.constant 14 : index
    %c0_156 = arith.constant 0 : index
    %c0_157 = arith.constant 0 : index
    %424 = vector.load %arg11[%c14, %c0_156, %c0_157] : memref<16x20x128xf32, #tpu.memory_space<vmem>>, vector<1x20x128xf32>
    %425 = vector.shape_cast %424 : vector<1x20x128xf32> to vector<20x128xf32>
    %cst_158 = arith.constant dense<0.000000e+00> : vector<1x128xf32>
    %426 = tpu.matmul %423, %425, %cst_158 {dimension_numbers = #tpu.dot_dimension_numbers<[1], [0], [0], [1], [0, 0, 1, 1], [], []>} : vector<1x20xf32>, vector<20x128xf32>, vector<1x128xf32> -> vector<1x128xf32>
    %427 = arith.addf %422, %426 : vector<1x128xf32>
    %428 = vector.extract_strided_slice %351 {offsets = [15, 0], sizes = [1, 20], strides = [1, 1]} : vector<16x20xf32> to vector<1x20xf32>
    %c15 = arith.constant 15 : index
    %c0_159 = arith.constant 0 : index
    %c0_160 = arith.constant 0 : index
    %429 = vector.load %arg11[%c15, %c0_159, %c0_160] : memref<16x20x128xf32, #tpu.memory_space<vmem>>, vector<1x20x128xf32>
    %430 = vector.shape_cast %429 : vector<1x20x128xf32> to vector<20x128xf32>
    %cst_161 = arith.constant dense<0.000000e+00> : vector<1x128xf32>
    %431 = tpu.matmul %428, %430, %cst_161 {dimension_numbers = #tpu.dot_dimension_numbers<[1], [0], [0], [1], [0, 0, 1, 1], [], []>} : vector<1x20xf32>, vector<20x128xf32>, vector<1x128xf32> -> vector<1x128xf32>
    %432 = arith.addf %427, %431 : vector<1x128xf32>
    %c0_162 = arith.constant 0 : index
    %c0_163 = arith.constant 0 : index
    %c0_164 = arith.constant 0 : index
    %433 = vector.load %arg13[%c0_162, %c0_163, %c0_164] : memref<1x1x128xf32, #tpu.memory_space<vmem>>, vector<1x1x128xf32>
    %434 = vector.shape_cast %433 : vector<1x1x128xf32> to vector<1x128xf32>
    %435 = vector.shape_cast %432 : vector<1x128xf32> to vector<1x1x128xf32>
    tpu.vector_store %arg13[%c0_162, %c0_163, %c0_164], %435 {strides = array<i32>} : memref<1x1x128xf32, #tpu.memory_space<vmem>>, vector<1x1x128xf32>,
    return
  }
  func.func @transform_0(%arg0: i32) -> (i32, i32, i32) {
    %c0_i32 = arith.constant 0 : i32
    %c0_i32_0 = arith.constant 0 : i32
    %c0_i32_1 = arith.constant 0 : i32
    return %arg0, %c0_i32, %c0_i32_0 : i32, i32, i32
  }
  func.func @transform_1(%arg0: i32) -> (i32, i32) {
    %c0_i32 = arith.constant 0 : i32
    %c0_i32_0 = arith.constant 0 : i32
    %c0_i32_1 = arith.constant 0 : i32
    return %c0_i32, %c0_i32_0 : i32, i32
  }
  func.func @transform_2(%arg0: i32) -> (i32, i32) {
    %c0_i32 = arith.constant 0 : i32
    %c0_i32_0 = arith.constant 0 : i32
    %c0_i32_1 = arith.constant 0 : i32
    return %c0_i32, %c0_i32_0 : i32, i32
  }
  func.func @transform_3(%arg0: i32) -> (i32, i32) {
    %c0_i32 = arith.constant 0 : i32
    %c0_i32_0 = arith.constant 0 : i32
    %c0_i32_1 = arith.constant 0 : i32
    return %c0_i32, %c0_i32_0 : i32, i32
  }
  func.func @transform_4(%arg0: i32) -> (i32, i32, i32) {
    %c0_i32 = arith.constant 0 : i32
    %c0_i32_0 = arith.constant 0 : i32
    %c0_i32_1 = arith.constant 0 : i32
    %c0_i32_2 = arith.constant 0 : i32
    return %c0_i32, %c0_i32_0, %c0_i32_1 : i32, i32, i32
  }
  func.func @transform_5(%arg0: i32) -> (i32, i32) {
    %c0_i32 = arith.constant 0 : i32
    %c0_i32_0 = arith.constant 0 : i32
    %c0_i32_1 = arith.constant 0 : i32
    return %c0_i32, %c0_i32_0 : i32, i32
  }
  func.func @transform_6(%arg0: i32) -> (i32, i32) {
    %c0_i32 = arith.constant 0 : i32
    %c0_i32_0 = arith.constant 0 : i32
    %c0_i32_1 = arith.constant 0 : i32
    return %c0_i32, %c0_i32_0 : i32, i32
  }
  func.func @transform_7(%arg0: i32) -> (i32, i32) {
    %c0_i32 = arith.constant 0 : i32
    %c0_i32_0 = arith.constant 0 : i32
    %c0_i32_1 = arith.constant 0 : i32
    return %c0_i32, %c0_i32_0 : i32, i32
  }
  func.func @transform_8(%arg0: i32) -> (i32, i32) {
    %c0_i32 = arith.constant 0 : i32
    %c0_i32_0 = arith.constant 0 : i32
    %c0_i32_1 = arith.constant 0 : i32
    return %c0_i32, %c0_i32_0 : i32, i32
  }
  func.func @transform_9(%arg0: i32) -> (i32, i32, i32) {
    %c0_i32 = arith.constant 0 : i32
    %c0_i32_0 = arith.constant 0 : i32
    %c0_i32_1 = arith.constant 0 : i32
    %c0_i32_2 = arith.constant 0 : i32
    return %c0_i32, %c0_i32_0, %c0_i32_1 : i32, i32, i32
  }
  func.func @transform_10(%arg0: i32) -> (i32, i32, i32) {
    %c0_i32 = arith.constant 0 : i32
    %c0_i32_0 = arith.constant 0 : i32
    %c0_i32_1 = arith.constant 0 : i32
    %c0_i32_2 = arith.constant 0 : i32
    return %c0_i32, %c0_i32_0, %c0_i32_1 : i32, i32, i32
  }
  func.func @transform_11(%arg0: i32) -> (i32, i32) {
    %c0_i32 = arith.constant 0 : i32
    %c0_i32_0 = arith.constant 0 : i32
    %c0_i32_1 = arith.constant 0 : i32
    return %c0_i32, %c0_i32_0 : i32, i32
  }
  func.func @transform_12(%arg0: i32) -> (i32, i32, i32) {
    %c0_i32 = arith.constant 0 : i32
    %c0_i32_0 = arith.constant 0 : i32
    %c0_i32_1 = arith.constant 0 : i32
    return %arg0, %c0_i32, %c0_i32_0 : i32, i32, i32
  }
}

</mosaic_0001>

<llo_original>
// kernel: encoder_forward.1
$region0: #{encoder_forward.1}
  #allocation0 [shape = 'u32[]', space=smem, size = 0x4, offset = 0x4, fixed_abs, tag = 'smem constant byte address 0x4 - core index']
  #allocation1 [shape = 'u32[144,128]{1,0:T(1,128)}', space=vmem, size = 0x12000, scoped, tag = 'internal scratch']
  %s0 = inlined_call_operand.vmem [shape: f32[2,8,384], index: 0, kind: input, shape index: {}]
  %s1 = inlined_call_operand.vmem [shape: f32[8,72], index: 1, kind: input, shape index: {}]
  %s2 = inlined_call_operand.vmem [shape: f32[8,8], index: 2, kind: input, shape index: {}]
  %s3 = inlined_call_operand.vmem [shape: f32[8,128], index: 3, kind: input, shape index: {}]
  %s4 = inlined_call_operand.vmem [shape: f32[4,288,83], index: 4, kind: input, shape index: {}]
  %s5 = inlined_call_operand.vmem [shape: f32[72,102], index: 5, kind: input, shape index: {}]
  %s6 = inlined_call_operand.vmem [shape: f32[16,72], index: 6, kind: input, shape index: {}]
  %s7 = inlined_call_operand.vmem [shape: f32[16,8], index: 7, kind: input, shape index: {}]
  %s8 = inlined_call_operand.vmem [shape: f32[16,256], index: 8, kind: input, shape index: {}]
  %s9 = inlined_call_operand.vmem [shape: f32[4,80,27], index: 9, kind: input, shape index: {}]
  %s10 = inlined_call_operand.vmem [shape: f32[16,20,128], index: 10, kind: input, shape index: {}]
  %s11 = inlined_call_operand.vmem [shape: f32[1,128], index: 11, kind: input, shape index: {}]
  %s12 = inlined_call_operand.hbm [shape: f32[2,1,128], index: 12, kind: output, shape index: {}]
  %s13 = sld [smem:[#allocation0]]
  $region81: #{encoder_forward.1} parent=0
    _
  %s15 = ssub.s32 1, %s13
  %s16 = scalar_select 0, %s15, %s13
  $region1: #{encoder_forward.1} parent=0
    #allocation2 [shape = 'u8[1024]{0}', space=vmem, size = 0x400, scoped, tag = 'output window, operand 0']
    #allocation3 [shape = 's32[2]{0}', space=sflag, size = 0x8, scoped, tag = 'scoped memory for encoder_forward.1']
    %17 = vsyncpa [#allocation3], 0
    %s18 = scalar_lea.sflag [#allocation3], 1
    %19 = vsyncpa %s18, 0
    loop: start=0, step=1, limit=4
    $region2: #{encoder_forward.1} parent=1 // loop_pre_header
      _
    $region3: #{encoder_forward.1} parent=1 // loop_header
      %s21 = sphi 0, %s25
      %p22 = scmp.ge.s32.totalorder %s21, 4
      %s31 = sphi 0, %s33
      %s34 = sphi 0, %s31
      %s35 = sphi 0, %s34
      %s51 = sphi 0, %s35
      %s55 = sphi 0, %s55
      %s57 = sphi 0, %s55
      %s58 = sphi 0, %s57
      %s72 = sphi 0, %s58
      %s76 = sphi 0, %s76
      %s78 = sphi 0, %s76
      %s79 = sphi 0, %s78
      %s93 = sphi 0, %s79
      %s97 = sphi 0, %s97
      %s99 = sphi 0, %s97
      %s100 = sphi 0, %s99
      %s114 = sphi 0, %s100
      %s118 = sphi 0, %s118
      %s120 = sphi 0, %s118
      %s121 = sphi 0, %s120
      %s135 = sphi 0, %s121
      %s139 = sphi 0, %s139
      %s141 = sphi 0, %s139
      %s142 = sphi 0, %s141
      %s156 = sphi 0, %s142
      %s160 = sphi 0, %s160
      %s162 = sphi 0, %s160
      %s163 = sphi 0, %s162
      %s177 = sphi 0, %s163
      %s181 = sphi 0, %s181
      %s183 = sphi 0, %s181
      %s184 = sphi 0, %s183
      %s198 = sphi 0, %s184
      %s202 = sphi 0, %s202
      %s204 = sphi 0, %s202
      %s205 = sphi 0, %s204
      %s219 = sphi 0, %s205
      %s223 = sphi 0, %s223
      %s225 = sphi 0, %s223
      %s226 = sphi 0, %s225
      %s240 = sphi 0, %s226
      %s244 = sphi 0, %s244
      %s246 = sphi 0, %s244
      %s247 = sphi 0, %s246
      %s261 = sphi 0, %s247
      %s265 = sphi 0, %s265
      %s267 = sphi 0, %s265
      %s268 = sphi 0, %s267
      %s282 = sphi 0, %s268
      %s288 = sphi 0, %s290
      %s291 = sphi 0, %s288
      %s292 = sphi 0, %s291
      %s308 = sphi 0, %s292
    $region4: #{encoder_forward.1} parent=1 // loop_header_branch
      %24 = sbr.rel (%p22) target = $region8
    $region5: #{encoder_forward.1} parent=1 // loop_body
      %s26 = ssub.s32 %s21, 1
      %s27 = ssub.s32 %s21, 2
      %s28 = sadd.s32 %s21, 1
      %s29 = ssub.s32 %s21, %s28
      %p30 = scmp.eq.s32.totalorder %s29, 0
      %s32 = sadd.s32 %s31, 1
      %s33 = scalar_select %p30, %s31, %s32
      %p36 = pneg %p30
      %p37 = scmp.eq.s32.totalorder %s21, 1
      %p38 = por %p36, %p37
      %p39 = scmp.ne.s32.totalorder %s31, %s34
      %p40 = scmp.eq.s32.totalorder %s21, 0
      %p41 = por %p39, %p40
      %p42 = scmp.ne.s32.totalorder %s31, %s34
      %p43 = scmp.eq.s32.totalorder %s26, 1
      %p44 = por %p42, %p43
      %p45 = scmp.ne.s32.totalorder %s34, %s35
      %p46 = scmp.eq.s32.totalorder %s26, 0
      %p47 = por %p45, %p46
      %p48 = scmp.ne.s32.totalorder %s34, %s35
      %p49 = scmp.eq.s32.totalorder %s27, 1
      %p50 = por %p48, %p49
      %p52 = scmp.ne.s32.totalorder %s35, %s51
      %p53 = scmp.eq.s32.totalorder %s27, 0
      %p54 = por %p52, %p53
      %s56 = sadd.s32 %s55, 1
      %p59 = scmp.eq.s32.totalorder %s21, 1
      %p60 = scmp.ne.s32.totalorder %s55, %s57
      %p61 = scmp.eq.s32.totalorder %s21, 0
      %p62 = por %p60, %p61
      %p63 = scmp.ne.s32.totalorder %s55, %s57
      %p64 = scmp.eq.s32.totalorder %s26, 1
      %p65 = por %p63, %p64
      %p66 = scmp.ne.s32.totalorder %s57, %s58
      %p67 = scmp.eq.s32.totalorder %s26, 0
      %p68 = por %p66, %p67
      %p69 = scmp.ne.s32.totalorder %s57, %s58
      %p70 = scmp.eq.s32.totalorder %s27, 1
      %p71 = por %p69, %p70
      %p73 = scmp.ne.s32.totalorder %s58, %s72
      %p74 = scmp.eq.s32.totalorder %s27, 0
      %p75 = por %p73, %p74
      %s77 = sadd.s32 %s76, 1
      %p80 = scmp.eq.s32.totalorder %s21, 1
      %p81 = scmp.ne.s32.totalorder %s76, %s78
      %p82 = scmp.eq.s32.totalorder %s21, 0
      %p83 = por %p81, %p82
      %p84 = scmp.ne.s32.totalorder %s76, %s78
      %p85 = scmp.eq.s32.totalorder %s26, 1
      %p86 = por %p84, %p85
      %p87 = scmp.ne.s32.totalorder %s78, %s79
      %p88 = scmp.eq.s32.totalorder %s26, 0
      %p89 = por %p87, %p88
      %p90 = scmp.ne.s32.totalorder %s78, %s79
      %p91 = scmp.eq.s32.totalorder %s27, 1
      %p92 = por %p90, %p91
      %p94 = scmp.ne.s32.totalorder %s79, %s93
      %p95 = scmp.eq.s32.totalorder %s27, 0
      %p96 = por %p94, %p95
      %s98 = sadd.s32 %s97, 1
      %p101 = scmp.eq.s32.totalorder %s21, 1
      %p102 = scmp.ne.s32.totalorder %s97, %s99
      %p103 = scmp.eq.s32.totalorder %s21, 0
      %p104 = por %p102, %p103
      %p105 = scmp.ne.s32.totalorder %s97, %s99
      %p106 = scmp.eq.s32.totalorder %s26, 1
      %p107 = por %p105, %p106
      %p108 = scmp.ne.s32.totalorder %s99, %s100
      %p109 = scmp.eq.s32.totalorder %s26, 0
      %p110 = por %p108, %p109
      %p111 = scmp.ne.s32.totalorder %s99, %s100
      %p112 = scmp.eq.s32.totalorder %s27, 1
      %p113 = por %p111, %p112
      %p115 = scmp.ne.s32.totalorder %s100, %s114
      %p116 = scmp.eq.s32.totalorder %s27, 0
      %p117 = por %p115, %p116
      %s119 = sadd.s32 %s118, 1
      %p122 = scmp.eq.s32.totalorder %s21, 1
      %p123 = scmp.ne.s32.totalorder %s118, %s120
      %p124 = scmp.eq.s32.totalorder %s21, 0
      %p125 = por %p123, %p124
      %p126 = scmp.ne.s32.totalorder %s118, %s120
      %p127 = scmp.eq.s32.totalorder %s26, 1
      %p128 = por %p126, %p127
      %p129 = scmp.ne.s32.totalorder %s120, %s121
      %p130 = scmp.eq.s32.totalorder %s26, 0
      %p131 = por %p129, %p130
      %p132 = scmp.ne.s32.totalorder %s120, %s121
      %p133 = scmp.eq.s32.totalorder %s27, 1
      %p134 = por %p132, %p133
      %p136 = scmp.ne.s32.totalorder %s121, %s135
      %p137 = scmp.eq.s32.totalorder %s27, 0
      %p138 = por %p136, %p137
      %s140 = sadd.s32 %s139, 1
      %p143 = scmp.eq.s32.totalorder %s21, 1
      %p144 = scmp.ne.s32.totalorder %s139, %s141
      %p145 = scmp.eq.s32.totalorder %s21, 0
      %p146 = por %p144, %p145
      %p147 = scmp.ne.s32.totalorder %s139, %s141
      %p148 = scmp.eq.s32.totalorder %s26, 1
      %p149 = por %p147, %p148
      %p150 = scmp.ne.s32.totalorder %s141, %s142
      %p151 = scmp.eq.s32.totalorder %s26, 0
      %p152 = por %p150, %p151
      %p153 = scmp.ne.s32.totalorder %s141, %s142
      %p154 = scmp.eq.s32.totalorder %s27, 1
      %p155 = por %p153, %p154
      %p157 = scmp.ne.s32.totalorder %s142, %s156
      %p158 = scmp.eq.s32.totalorder %s27, 0
      %p159 = por %p157, %p158
      %s161 = sadd.s32 %s160, 1
      %p164 = scmp.eq.s32.totalorder %s21, 1
      %p165 = scmp.ne.s32.totalorder %s160, %s162
      %p166 = scmp.eq.s32.totalorder %s21, 0
      %p167 = por %p165, %p166
      %p168 = scmp.ne.s32.totalorder %s160, %s162
      %p169 = scmp.eq.s32.totalorder %s26, 1
      %p170 = por %p168, %p169
      %p171 = scmp.ne.s32.totalorder %s162, %s163
      %p172 = scmp.eq.s32.totalorder %s26, 0
      %p173 = por %p171, %p172
      %p174 = scmp.ne.s32.totalorder %s162, %s163
      %p175 = scmp.eq.s32.totalorder %s27, 1
      %p176 = por %p174, %p175
      %p178 = scmp.ne.s32.totalorder %s163, %s177
      %p179 = scmp.eq.s32.totalorder %s27, 0
      %p180 = por %p178, %p179
      %s182 = sadd.s32 %s181, 1
      %p185 = scmp.eq.s32.totalorder %s21, 1
      %p186 = scmp.ne.s32.totalorder %s181, %s183
      %p187 = scmp.eq.s32.totalorder %s21, 0
      %p188 = por %p186, %p187
      %p189 = scmp.ne.s32.totalorder %s181, %s183
      %p190 = scmp.eq.s32.totalorder %s26, 1
      %p191 = por %p189, %p190
      %p192 = scmp.ne.s32.totalorder %s183, %s184
      %p193 = scmp.eq.s32.totalorder %s26, 0
      %p194 = por %p192, %p193
      %p195 = scmp.ne.s32.totalorder %s183, %s184
      %p196 = scmp.eq.s32.totalorder %s27, 1
      %p197 = por %p195, %p196
      %p199 = scmp.ne.s32.totalorder %s184, %s198
      %p200 = scmp.eq.s32.totalorder %s27, 0
      %p201 = por %p199, %p200
      %s203 = sadd.s32 %s202, 1
      %p206 = scmp.eq.s32.totalorder %s21, 1
      %p207 = scmp.ne.s32.totalorder %s202, %s204
      %p208 = scmp.eq.s32.totalorder %s21, 0
      %p209 = por %p207, %p208
      %p210 = scmp.ne.s32.totalorder %s202, %s204
      %p211 = scmp.eq.s32.totalorder %s26, 1
      %p212 = por %p210, %p211
      %p213 = scmp.ne.s32.totalorder %s204, %s205
      %p214 = scmp.eq.s32.totalorder %s26, 0
      %p215 = por %p213, %p214
      %p216 = scmp.ne.s32.totalorder %s204, %s205
      %p217 = scmp.eq.s32.totalorder %s27, 1
      %p218 = por %p216, %p217
      %p220 = scmp.ne.s32.totalorder %s205, %s219
      %p221 = scmp.eq.s32.totalorder %s27, 0
      %p222 = por %p220, %p221
      %s224 = sadd.s32 %s223, 1
      %p227 = scmp.eq.s32.totalorder %s21, 1
      %p228 = scmp.ne.s32.totalorder %s223, %s225
      %p229 = scmp.eq.s32.totalorder %s21, 0
      %p230 = por %p228, %p229
      %p231 = scmp.ne.s32.totalorder %s223, %s225
      %p232 = scmp.eq.s32.totalorder %s26, 1
      %p233 = por %p231, %p232
      %p234 = scmp.ne.s32.totalorder %s225, %s226
      %p235 = scmp.eq.s32.totalorder %s26, 0
      %p236 = por %p234, %p235
      %p237 = scmp.ne.s32.totalorder %s225, %s226
      %p238 = scmp.eq.s32.totalorder %s27, 1
      %p239 = por %p237, %p238
      %p241 = scmp.ne.s32.totalorder %s226, %s240
      %p242 = scmp.eq.s32.totalorder %s27, 0
      %p243 = por %p241, %p242
      %s245 = sadd.s32 %s244, 1
      %p248 = scmp.eq.s32.totalorder %s21, 1
      %p249 = scmp.ne.s32.totalorder %s244, %s246
      %p250 = scmp.eq.s32.totalorder %s21, 0
      %p251 = por %p249, %p250
      %p252 = scmp.ne.s32.totalorder %s244, %s246
      %p253 = scmp.eq.s32.totalorder %s26, 1
      %p254 = por %p252, %p253
      %p255 = scmp.ne.s32.totalorder %s246, %s247
      %p256 = scmp.eq.s32.totalorder %s26, 0
      %p257 = por %p255, %p256
      %p258 = scmp.ne.s32.totalorder %s246, %s247
      %p259 = scmp.eq.s32.totalorder %s27, 1
      %p260 = por %p258, %p259
      %p262 = scmp.ne.s32.totalorder %s247, %s261
      %p263 = scmp.eq.s32.totalorder %s27, 0
      %p264 = por %p262, %p263
      %s266 = sadd.s32 %s265, 1
      %p269 = scmp.eq.s32.totalorder %s21, 1
      %p270 = scmp.ne.s32.totalorder %s265, %s267
      %p271 = scmp.eq.s32.totalorder %s21, 0
      %p272 = por %p270, %p271
      %p273 = scmp.ne.s32.totalorder %s265, %s267
      %p274 = scmp.eq.s32.totalorder %s26, 1
      %p275 = por %p273, %p274
      %p276 = scmp.ne.s32.totalorder %s267, %s268
      %p277 = scmp.eq.s32.totalorder %s26, 0
      %p278 = por %p276, %p277
      %p279 = scmp.ne.s32.totalorder %s267, %s268
      %p280 = scmp.eq.s32.totalorder %s27, 1
      %p281 = por %p279, %p280
      %p283 = scmp.ne.s32.totalorder %s268, %s282
      %p284 = scmp.eq.s32.totalorder %s27, 0
      %p285 = por %p283, %p284
      %s286 = ssub.s32 %s21, %s28
      %p287 = scmp.eq.s32.totalorder %s286, 0
      %s289 = sadd.s32 %s288, 1
      %s290 = scalar_select %p287, %s288, %s289
      %p293 = pneg %p287
      %p294 = scmp.eq.s32.totalorder %s21, 1
      %p295 = por %p293, %p294
      %p296 = scmp.ne.s32.totalorder %s288, %s291
      %p297 = scmp.eq.s32.totalorder %s21, 0
      %p298 = por %p296, %p297
      %p299 = scmp.ne.s32.totalorder %s288, %s291
      %p300 = scmp.eq.s32.totalorder %s26, 1
      %p301 = por %p299, %p300
      %p302 = scmp.ne.s32.totalorder %s291, %s292
      %p303 = scmp.eq.s32.totalorder %s26, 0
      %p304 = por %p302, %p303
      %p305 = scmp.ne.s32.totalorder %s291, %s292
      %p306 = scmp.eq.s32.totalorder %s27, 1
      %p307 = por %p305, %p306
      %p309 = scmp.ne.s32.totalorder %s292, %s308
      %p310 = scmp.eq.s32.totalorder %s27, 0
      %p311 = por %p309, %p310
      %p312 = scmp.le.s32.totalorder 1, %s21
      %p313 = scmp.lt.s32.totalorder %s21, 3
      %p314 = pnand %p312, %p313
      %p315 = pneg %p314
      // Predicated region
      $region9: #{encoder_forward.1} parent=5 // pred_check
        _
      $region10: #{encoder_forward.1} parent=5 // pred_check_branch
        %317 = sbr.rel (%p314) target = $region12
      $region11: #{encoder_forward.1} parent=5 // pred_region
        %s318 = ssub.s32 %s21, 1
        // Predicated region
        $region13: #{encoder_forward.1} parent=11 // pred_check
          %p319 = pneg %p68
        $region14: #{encoder_forward.1} parent=11 // pred_check_branch
          %321 = sbr.rel (%p319) target = $region16
        $region15: #{encoder_forward.1} parent=11 // pred_region
          _
        $region16: #{encoder_forward.1} parent=11 // pred_fallthru
          _
        // Predicated region
        $region17: #{encoder_forward.1} parent=11 // pred_check
          %p322 = pneg %p89
        $region18: #{encoder_forward.1} parent=11 // pred_check_branch
          %324 = sbr.rel (%p322) target = $region20
        $region19: #{encoder_forward.1} parent=11 // pred_region
          _
        $region20: #{encoder_forward.1} parent=11 // pred_fallthru
          _
        // Predicated region
        $region21: #{encoder_forward.1} parent=11 // pred_check
          %p325 = pneg %p110
        $region22: #{encoder_forward.1} parent=11 // pred_check_branch
          %327 = sbr.rel (%p325) target = $region24
        $region23: #{encoder_forward.1} parent=11 // pred_region
          _
        $region24: #{encoder_forward.1} parent=11 // pred_fallthru
          _
        // Predicated region
        $region25: #{encoder_forward.1} parent=11 // pred_check
          %p328 = pneg %p131
        $region26: #{encoder_forward.1} parent=11 // pred_check_branch
          %330 = sbr.rel (%p328) target = $region28
        $region27: #{encoder_forward.1} parent=11 // pred_region
          _
        $region28: #{encoder_forward.1} parent=11 // pred_fallthru
          _
        // Predicated region
        $region29: #{encoder_forward.1} parent=11 // pred_check
          %p331 = pneg %p152
        $region30: #{encoder_forward.1} parent=11 // pred_check_branch
          %333 = sbr.rel (%p331) target = $region32
        $region31: #{encoder_forward.1} parent=11 // pred_region
          _
        $region32: #{encoder_forward.1} parent=11 // pred_fallthru
          _
        // Predicated region
        $region33: #{encoder_forward.1} parent=11 // pred_check
          %p334 = pneg %p173
        $region34: #{encoder_forward.1} parent=11 // pred_check_branch
          %336 = sbr.rel (%p334) target = $region36
        $region35: #{encoder_forward.1} parent=11 // pred_region
          _
        $region36: #{encoder_forward.1} parent=11 // pred_fallthru
          _
        // Predicated region
        $region37: #{encoder_forward.1} parent=11 // pred_check
          %p337 = pneg %p194
        $region38: #{encoder_forward.1} parent=11 // pred_check_branch
          %339 = sbr.rel (%p337) target = $region40
        $region39: #{encoder_forward.1} parent=11 // pred_region
          _
        $region40: #{encoder_forward.1} parent=11 // pred_fallthru
          _
        // Predicated region
        $region41: #{encoder_forward.1} parent=11 // pred_check
          %p340 = pneg %p215
        $region42: #{encoder_forward.1} parent=11 // pred_check_branch
          %342 = sbr.rel (%p340) target = $region44
        $region43: #{encoder_forward.1} parent=11 // pred_region
          _
        $region44: #{encoder_forward.1} parent=11 // pred_fallthru
          _
        // Predicated region
        $region45: #{encoder_forward.1} parent=11 // pred_check
          %p343 = pneg %p236
        $region46: #{encoder_forward.1} parent=11 // pred_check_branch
          %345 = sbr.rel (%p343) target = $region48
        $region47: #{encoder_forward.1} parent=11 // pred_region
          _
        $region48: #{encoder_forward.1} parent=11 // pred_fallthru
          _
        // Predicated region
        $region49: #{encoder_forward.1} parent=11 // pred_check
          %p346 = pneg %p257
        $region50: #{encoder_forward.1} parent=11 // pred_check_branch
          %348 = sbr.rel (%p346) target = $region52
        $region51: #{encoder_forward.1} parent=11 // pred_region
          _
        $region52: #{encoder_forward.1} parent=11 // pred_fallthru
          _
        // Predicated region
        $region53: #{encoder_forward.1} parent=11 // pred_check
          %p349 = pneg %p278
        $region54: #{encoder_forward.1} parent=11 // pred_check_branch
          %351 = sbr.rel (%p349) target = $region56
        $region55: #{encoder_forward.1} parent=11 // pred_region
          _
        $region56: #{encoder_forward.1} parent=11 // pred_fallthru
          _
      $region12: #{encoder_forward.1} parent=5 // pred_fallthru
        _
      %p352 = scmp.lt.s32.totalorder %s21, 2
      // Predicated region
      $region57: #{encoder_forward.1} parent=5 // pred_check
        %p353 = pneg %p352
      $region58: #{encoder_forward.1} parent=5 // pred_check_branch
        %355 = sbr.rel (%p353) target = $region60
      $region59: #{encoder_forward.1} parent=5 // pred_region
        // Predicated region
        $region61: #{encoder_forward.1} parent=59 // pred_check
          %p356 = pneg %p41
        $region62: #{encoder_forward.1} parent=59 // pred_check_branch
          %358 = sbr.rel (%p356) target = $region64
        $region63: #{encoder_forward.1} parent=59 // pred_region
          %p359 = scmp.lt.s32.totalorder %s21, 1
          %s360 = scalar_select %p359, %s21, 1
          %s361 = smul.addr %s360, 3
          %s362 = smul.addr %s361, 8
          %s363 = scalar_lea.vmem %s0, %s362
        $region64: #{encoder_forward.1} parent=59 // pred_fallthru
          _
      $region60: #{encoder_forward.1} parent=5 // pred_fallthru
        _
      %p364 = scmp.le.s32.totalorder 1, %s21
      %p365 = scmp.lt.s32.totalorder %s21, 3
      %p366 = pnand %p364, %p365
      %p367 = pneg %p366
      // Predicated region
      $region65: #{encoder_forward.1} parent=5 // pred_check
        _
      $region66: #{encoder_forward.1} parent=5 // pred_check_branch
        %369 = sbr.rel (%p366) target = $region68
      $region67: #{encoder_forward.1} parent=5 // pred_region
        %s370 = ssub.s32 %s21, 1
        %p371 = scmp.lt.s32.totalorder %s26, 1
        %s372 = scalar_select %p371, %s26, 1
        %s373 = smul.addr %s372, 3
        %s374 = smul.addr %s373, 8
        %s375 = scalar_lea.vmem %s0, %s374
        %p376 = pneg %p47
        %p377 = pneg %p44
        %p378 = pneg %p68
        %p379 = pneg %p65
        %p380 = pneg %p89
        %p381 = pneg %p86
        %p382 = pneg %p110
        %p383 = pneg %p107
        %p384 = pneg %p131
        %p385 = pneg %p128
        %p386 = pneg %p152
        %p387 = pneg %p149
        %p388 = pneg %p173
        %p389 = pneg %p170
        %p390 = pneg %p194
        %p391 = pneg %p191
        %p392 = pneg %p215
        %p393 = pneg %p212
        %p394 = pneg %p236
        %p395 = pneg %p233
        %p396 = pneg %p257
        %p397 = pneg %p254
        %p398 = pneg %p278
        %p399 = pneg %p275
        %p400 = pneg %p304
        %p401 = pneg %p301
        %s402 = sand.u32 %s291, 1
        %s403 = scalar_lea.sflag [#allocation3], %s402
        %s404 = sand.u32 %s291, 1
        %s405 = scalar_lea.vmem [#allocation2], %s404
        %p406 = scmp.lt.s32.totalorder %s26, 1
        %s407 = scalar_select %p406, %s26, 1
        %s408 = smul.addr %s407, 3
        %s409 = smul.addr %s408, 8
        %s410 = scalar_lea.vmem %s0, %s409
        %v411 = vld [vmem:[%s410] sm:$0xff]
        %v412 = vld [vmem:[%s410 + $0x8] sm:$0xff]
        %v413 = vld [vmem:[%s410 + $0x10] sm:$0xff]
        %v414 = vld [vmem:[%s2] sm:$0xff]
        %418 = vrot.lane.b32.xlu0 %v411, 127
        %v419 = vpop.permute.xlu0 %418
        %420 = vrot.lane.b32.xlu0 %v412, 127
        %v421 = vpop.permute.xlu0 %420
        %422 = vrot.lane.b32.xlu0 %v413, 127
        %v423 = vpop.permute.xlu0 %422
        %vm424 = vcmask 1039360
        %v425 = vsel %vm424, %v419, %v421
        %v426 = vsel %vm424, %v421, %v423
        %430 = vrot.lane.b32.xlu0 %v411, 126
        %v431 = vpop.permute.xlu0 %430
        %432 = vrot.lane.b32.xlu0 %v412, 126
        %v433 = vpop.permute.xlu0 %432
        %434 = vrot.lane.b32.xlu0 %v413, 126
        %v435 = vpop.permute.xlu0 %434
        %vm436 = vcmask 1031168
        %v437 = vsel %vm436, %v431, %v433
        %v438 = vsel %vm436, %v433, %v435
        %442 = vrot.lane.b32.xlu0 %v411, 110
        %v443 = vpop.permute.xlu0 %442
        %444 = vrot.lane.b32.xlu0 %v412, 110
        %v445 = vpop.permute.xlu0 %444
        %446 = vrot.lane.b32.xlu0 %v413, 110
        %v447 = vpop.permute.xlu0 %446
        %vm448 = vcmask 900096
        %v449 = vsel %vm448, %v443, %v445
        %v450 = vsel %vm448, %v445, %v447
        %454 = vrot.lane.b32.xlu0 %v411, 109
        %v455 = vpop.permute.xlu0 %454
        %456 = vrot.lane.b32.xlu0 %v412, 109
        %v457 = vpop.permute.xlu0 %456
        %458 = vrot.lane.b32.xlu0 %v413, 109
        %v459 = vpop.permute.xlu0 %458
        %vm460 = vcmask 891904
        %v461 = vsel %vm460, %v455, %v457
        %v462 = vsel %vm460, %v457, %v459
        %466 = vrot.lane.b32.xlu0 %v411, 108
        %v467 = vpop.permute.xlu0 %466
        %468 = vrot.lane.b32.xlu0 %v412, 108
        %v469 = vpop.permute.xlu0 %468
        %470 = vrot.lane.b32.xlu0 %v413, 108
        %v471 = vpop.permute.xlu0 %470
        %vm472 = vcmask 883712
        %v473 = vsel %vm472, %v467, %v469
        %v474 = vsel %vm472, %v469, %v471
        %478 = vrot.lane.b32.xlu0 %v411, 92
        %v479 = vpop.permute.xlu0 %478
        %480 = vrot.lane.b32.xlu0 %v412, 92
        %v481 = vpop.permute.xlu0 %480
        %482 = vrot.lane.b32.xlu0 %v413, 92
        %v483 = vpop.permute.xlu0 %482
        %vm484 = vcmask 752640
        %v485 = vsel %vm484, %v479, %v481
        %v486 = vsel %vm484, %v481, %v483
        %490 = vrot.lane.b32.xlu0 %v411, 91
        %v491 = vpop.permute.xlu0 %490
        %492 = vrot.lane.b32.xlu0 %v412, 91
        %v493 = vpop.permute.xlu0 %492
        %494 = vrot.lane.b32.xlu0 %v413, 91
        %v495 = vpop.permute.xlu0 %494
        %vm496 = vcmask 744448
        %v497 = vsel %vm496, %v491, %v493
        %v498 = vsel %vm496, %v493, %v495
        %502 = vrot.lane.b32.xlu0 %v411, 90
        %v503 = vpop.permute.xlu0 %502
        %504 = vrot.lane.b32.xlu0 %v412, 90
        %v505 = vpop.permute.xlu0 %504
        %506 = vrot.lane.b32.xlu0 %v413, 90
        %v507 = vpop.permute.xlu0 %506
        %vm508 = vcmask 736256
        %v509 = vsel %vm508, %v503, %v505
        %v510 = vsel %vm508, %v505, %v507
        %v514 = vld [vmem:[%s1] sm:$0xff]
        %516 = vset.pattern.permute.xlu0 0
        %517 = vperm.xlu0 %516, %v414
        %v518 = vpop.permute.xlu0 %517
        %vm520 = vcmask 588800
        %v522 = vsel %vm520, %v514, 0
        %524 = vmatprep.subr.mxu0 0.0
        %525 = vmatpush1.msra.mxu0 0.0
        %526 = vmatprep.subr.mxu0 0.0
        %527 = vmatpush1.msra.mxu0 0.0
        %528 = vmatprep.subr.mxu0 0.0
        %529 = vmatpush1.msra.mxu0 0.0
        %530 = vmatprep.subr.mxu0 0.0
        %531 = vmatpush1.msra.mxu0 0.0
        %532 = vmatprep.subr.mxu0 0.0
        %533 = vmatpush1.msra.mxu0 0.0
        %534 = vmatprep.subr.mxu0 0.0
        %535 = vmatpush1.msra.mxu0 0.0
        %536 = vmatprep.subr.mxu0 0.0
        %537 = vmatpush1.msra.mxu0 0.0
        %538 = vmatprep.subr.mxu0 %v510
        %539 = vmatpush1.msra.mxu0 %v509
        %540 = vmatprep.subr.mxu0 %v498
        %541 = vmatpush1.msra.mxu0 %v497
        %542 = vmatprep.subr.mxu0 %v486
        %543 = vmatpush1.msra.mxu0 %v485
        %544 = vmatprep.subr.mxu0 %v474
        %545 = vmatpush1.msra.mxu0 %v473
        %546 = vmatprep.subr.mxu0 %v462
        %547 = vmatpush1.msra.mxu0 %v461
        %548 = vmatprep.subr.mxu0 %v450
        %549 = vmatpush1.msra.mxu0 %v449
        %550 = vmatprep.subr.mxu0 %v438
        %551 = vmatpush1.msra.mxu0 %v437
        %552 = vmatprep.subr.mxu0 %v426
        %553 = vmatpush1.msra.mxu0 %v425
        %554 = vmatprep.subr.mxu0 %v412
        %555 = vmatpush1.msra.mxu0 %v411
        %556 = vmatprep.subr.mxu0 0.0
        %557 = vmatpush2.msra.mxu0 0.0
        %558 = vmatprep.subr.mxu0 0.0
        %559 = vmatpush2.msra.mxu0 0.0
        %560 = vmatprep.subr.mxu0 0.0
        %561 = vmatpush2.msra.mxu0 0.0
        %562 = vmatprep.subr.mxu0 0.0
        %563 = vmatpush2.msra.mxu0 0.0
        %564 = vmatprep.subr.mxu0 0.0
        %565 = vmatpush2.msra.mxu0 0.0
        %566 = vmatprep.subr.mxu0 0.0
        %567 = vmatpush2.msra.mxu0 0.0
        %568 = vmatprep.subr.mxu0 0.0
        %569 = vmatpush2.msra.mxu0 0.0
        %570 = vmatprep.subr.mxu0 0.0
        %571 = vmatpush2.msra.mxu0 0.0
        %572 = vmatprep.subr.mxu0 0.0
        %573 = vmatpush2.msra.mxu0 0.0
        %574 = vmatprep.subr.mxu0 0.0
        %575 = vmatpush2.msra.mxu0 0.0
        %576 = vmatprep.subr.mxu0 0.0
        %577 = vmatpush2.msra.mxu0 0.0
        %578 = vmatprep.subr.mxu0 0.0
        %579 = vmatpush2.msra.mxu0 0.0
        %580 = vmatprep.subr.mxu0 0.0
        %581 = vmatpush2.msra.mxu0 0.0
        %582 = vmatprep.subr.mxu0 0.0
        %583 = vmatpush2.msra.mxu0 0.0
        %584 = vmatprep.subr.mxu0 0.0
        %585 = vmatpush2.msra.mxu0 0.0
        %586 = vmatprep.subr.mxu0 0.0
        %587 = vmatpush2.msra.mxu0 0.0
        %588 = vmatprep.mubr.f32.mxu0 0.0
        %589 = vmatmul.mubr.f32.gmra.mxu0 %v522
        %v590 = vpop.f32.mrf.mxu0
        %v591 = vadd.f32 %v518, %v590
        %v592 = vpop.f32.mrf.mxu0
        %v593 = vadd.f32 %v518, %v592
        %594 = vdwg.mxu0
        %595 = vmatprep.subr.mxu0 0.0
        %596 = vmatpush1.msra.mxu0 0.0
        %597 = vmatprep.subr.mxu0 0.0
        %598 = vmatpush1.msra.mxu0 0.0
        %599 = vmatprep.subr.mxu0 0.0
        %600 = vmatpush1.msra.mxu0 0.0
        %601 = vmatprep.subr.mxu0 0.0
        %602 = vmatpush1.msra.mxu0 0.0
        %603 = vmatprep.subr.mxu0 0.0
        %604 = vmatpush1.msra.mxu0 0.0
        %605 = vmatprep.subr.mxu0 0.0
        %606 = vmatpush1.msra.mxu0 0.0
        %607 = vmatprep.subr.mxu0 0.0
        %608 = vmatpush1.msra.mxu0 0.0
        %609 = vmatprep.subr.mxu0 0.0
        %610 = vmatpush1.msra.mxu0 %v507
        %611 = vmatprep.subr.mxu0 0.0
        %612 = vmatpush1.msra.mxu0 %v495
        %613 = vmatprep.subr.mxu0 0.0
        %614 = vmatpush1.msra.mxu0 %v483
        %615 = vmatprep.subr.mxu0 0.0
        %616 = vmatpush1.msra.mxu0 %v471
        %617 = vmatprep.subr.mxu0 0.0
        %618 = vmatpush1.msra.mxu0 %v459
        %619 = vmatprep.subr.mxu0 0.0
        %620 = vmatpush1.msra.mxu0 %v447
        %621 = vmatprep.subr.mxu0 0.0
        %622 = vmatpush1.msra.mxu0 %v435
        %623 = vmatprep.subr.mxu0 0.0
        %624 = vmatpush1.msra.mxu0 %v423
        %625 = vmatprep.subr.mxu0 0.0
        %626 = vmatpush1.msra.mxu0 %v413
        %627 = vmatprep.subr.mxu0 0.0
        %628 = vmatpush2.msra.mxu0 0.0
        %629 = vmatprep.subr.mxu0 0.0
        %630 = vmatpush2.msra.mxu0 0.0
        %631 = vmatprep.subr.mxu0 0.0
        %632 = vmatpush2.msra.mxu0 0.0
        %633 = vmatprep.subr.mxu0 0.0
        %634 = vmatpush2.msra.mxu0 0.0
        %635 = vmatprep.subr.mxu0 0.0
        %636 = vmatpush2.msra.mxu0 0.0
        %637 = vmatprep.subr.mxu0 0.0
        %638 = vmatpush2.msra.mxu0 0.0
        %639 = vmatprep.subr.mxu0 0.0
        %640 = vmatpush2.msra.mxu0 0.0
        %641 = vmatprep.subr.mxu0 0.0
        %642 = vmatpush2.msra.mxu0 0.0
        %643 = vmatprep.subr.mxu0 0.0
        %644 = vmatpush2.msra.mxu0 0.0
        %645 = vmatprep.subr.mxu0 0.0
        %646 = vmatpush2.msra.mxu0 0.0
        %647 = vmatprep.subr.mxu0 0.0
        %648 = vmatpush2.msra.mxu0 0.0
        %649 = vmatprep.subr.mxu0 0.0
        %650 = vmatpush2.msra.mxu0 0.0
        %651 = vmatprep.subr.mxu0 0.0
        %652 = vmatpush2.msra.mxu0 0.0
        %653 = vmatprep.subr.mxu0 0.0
        %654 = vmatpush2.msra.mxu0 0.0
        %655 = vmatprep.subr.mxu0 0.0
        %656 = vmatpush2.msra.mxu0 0.0
        %657 = vmatprep.subr.mxu0 0.0
        %658 = vmatpush2.msra.mxu0 0.0
        %659 = vmatprep.mubr.f32.mxu0 0.0
        %660 = vmatmul.mubr.f32.gmra.mxu0 %v522
        %v661 = vpop.f32.mrf.mxu0
        %v662 = vadd.f32 %v518, %v661
        %v663 = vpop.f32.mrf.mxu0
        %664 = vdwg.mxu0
        %v665 = vlaneseq
        %v666 = vand.u32 %v665, 127
        %v667 = vadd.s32 %v666, 128
        %v668 = vadd.s32 %v666, 256
        %vm669 = vcmp.lt.s32.totalorder %v666, 0
        %v670 = vsub.s32 0, %v666
        %v671 = vsel %vm669, %v670, %v666
        %v672 = vmul.u32.u64.compose %v671, 3817748708
        %v673 = vextract.low.u32 %v672
        %v674 = vextract.high.u32 %v672
        %v675 = vshrl.u32 %v674, 4
        %v676 = vmul.u32 %v675, 18
        %v677 = vsub.s32 %v671, %v676
        %v678 = vsub.s32 0, %v677
        %v679 = vsel %vm669, %v678, %v677
        %vm680 = vcmp.lt.s32.totalorder %v667, 0
        %v681 = vsub.s32 0, %v667
        %v682 = vsel %vm680, %v681, %v667
        %v683 = vmul.u32.u64.compose %v682, 3817748708
        %v684 = vextract.low.u32 %v683
        %v685 = vextract.high.u32 %v683
        %v686 = vshrl.u32 %v685, 4
        %v687 = vmul.u32 %v686, 18
        %v688 = vsub.s32 %v682, %v687
        %v689 = vsub.s32 0, %v688
        %v690 = vsel %vm680, %v689, %v688
        %vm691 = vcmp.lt.s32.totalorder %v668, 0
        %v692 = vsub.s32 0, %v668
        %v693 = vsel %vm691, %v692, %v668
        %v694 = vmul.u32.u64.compose %v693, 3817748708
        %v695 = vextract.low.u32 %v694
        %v696 = vextract.high.u32 %v694
        %v697 = vshrl.u32 %v696, 4
        %v698 = vmul.u32 %v697, 18
        %v699 = vsub.s32 %v693, %v698
        %v700 = vsub.s32 0, %v699
        %v701 = vsel %vm691, %v700, %v699
        %vm702 = vcmp.ne.s32.totalorder %v679, 0
        %vm703 = vcmp.ne.s32.totalorder %v690, 0
        %vm704 = vcmp.ne.s32.totalorder %v701, 0
        %vm705 = vcmp.lt.s32.totalorder %v679, 0
        %vm706 = vcmp.lt.s32.totalorder %v690, 0
        %vm707 = vcmp.lt.s32.totalorder %v701, 0
        %vm708 = vmand %vm705, %vm702
        %vm709 = vmand %vm706, %vm703
        %vm710 = vmand %vm707, %vm704
        %v711 = vadd.s32 %v679, 18
        %v712 = vadd.s32 %v690, 18
        %v713 = vadd.s32 %v701, 18
        %v714 = vsel %vm708, %v711, %v679
        %v715 = vsel %vm709, %v712, %v690
        %v716 = vsel %vm710, %v713, %v701
        %vm717 = vcmp.lt.s32.totalorder %v714, 16
        %vm718 = vcmp.lt.s32.totalorder %v715, 16
        %vm719 = vcmp.lt.s32.totalorder %v716, 16
        %v720 = vsel %vm717, 1, 0
        %v721 = vsel %vm718, 1, 0
        %v722 = vsel %vm719, 1, 0
        %vm723 = vcmp.eq.s32.totalorder %v720, 1
        %vm724 = vcmp.eq.s32.totalorder %v721, 1
        %vm725 = vcmp.eq.s32.totalorder %v722, 1
        %v726 = vsel %vm723, %v591, 0.0
        %v727 = vsel %vm724, %v593, 0.0
        %v728 = vsel %vm725, %v662, 0.0
        %v729 = vadd.f32 %v726, %v727
        %vm730 = vcmask 261120
        %v731 = vsel %vm730, %v728, 0.0
        %v732 = vadd.f32 %v729, %v731
        %733 = vadd.xlane.f32.xlu0 %v732
        %v734 = vpop.xlane.xlu0 %733
        %v735 = vrot.slane %v734, 4
        %v736 = vadd.f32 %v734, %v735
        %v737 = vrot.slane %v736, 2
        %v738 = vadd.f32 %v736, %v737
        %v739 = vrot.slane %v738, 1
        %v740 = vadd.f32 %v738, %v739
        %v741 = vmul.f32 %v740, 0.00048828125
        %v742 = vsub.f32 %v591, %v741
        %v743 = vsub.f32 %v593, %v741
        %v744 = vsub.f32 %v662, %v741
        %v745 = vsel %vm723, %v742, 0.0
        %v746 = vsel %vm724, %v743, 0.0
        %v747 = vsel %vm725, %v744, 0.0
        %v748 = vmul.f32 %v745, %v745
        %v749 = vmul.f32 %v746, %v746
        %v750 = vmul.f32 %v747, %v747
        %v751 = vadd.f32 %v748, %v749
        %v752 = vsel %vm730, %v750, 0.0
        %v753 = vadd.f32 %v751, %v752
        %754 = vadd.xlane.f32.xlu0 %v753
        %v755 = vpop.xlane.xlu0 %754
        %v756 = vrot.slane %v755, 4
        %v757 = vadd.f32 %v755, %v756
        %v758 = vrot.slane %v757, 2
        %v759 = vadd.f32 %v757, %v758
        %v760 = vrot.slane %v759, 1
        %v761 = vadd.f32 %v759, %v760
        %v762 = vmul.f32 %v761, 0.00048828125
        %v763 = vadd.f32 %v762, 1e-05
        %v764 = vrsqrt.pop %v763
        %v765 = vmul.f32 %v414, %v764
        %767 = vset.pattern.permute.xlu0 1
        %768 = vperm.xlu0 %767, %v765
        %v769 = vpop.permute.xlu0 %768
        %v771 = vmul.f32 %v591, %v769
        %v772 = vmul.f32 %v593, %v769
        %v773 = vmul.f32 %v662, %v769
        %v774 = vmul.f32 %v741, %v765
        %776 = vrot.lane.b32.xlu0 %v774, 1
        %v777 = vpop.permute.xlu0 %776
        %v779 = vsub.f32 %v414, %v777
        %781 = vset.pattern.permute.xlu0 2
        %782 = vperm.xlu0 %781, %v779
        %v783 = vpop.permute.xlu0 %782
        %v785 = vadd.f32 %v771, %v783
        %v786 = vadd.f32 %v772, %v783
        %v787 = vadd.f32 %v773, %v783
        %v788 = vxor.u32 %v785, 2147483648
        %v789 = vxor.u32 %v786, 2147483648
        %v790 = vxor.u32 %v787, 2147483648
        %v791 = vmul.f32 %v788, 1.442695
        %v792 = vpow.pop %v791
        %v793 = vmul.f32 %v789, 1.442695
        %v794 = vpow.pop %v793
        %v795 = vmul.f32 %v790, 1.442695
        %v796 = vpow.pop %v795
        %v797 = vadd.f32 %v792, 1.0
        %v798 = vadd.f32 %v794, 1.0
        %v799 = vadd.f32 %v796, 1.0
        %v800 = vrcp.pop %v797
        %v801 = vmul.f32 1.0, %v800
        %v802 = vrcp.pop %v798
        %v803 = vmul.f32 1.0, %v802
        %v804 = vrcp.pop %v799
        %v805 = vmul.f32 1.0, %v804
        %v806 = vmul.f32 %v785, %v801
        %v807 = vmul.f32 %v786, %v803
        %v808 = vmul.f32 %v787, %v805
        %v809 = vld [vmem:[%s4] sm:$0xff]
        %v810 = vld [vmem:[%s4 + $0x8] sm:$0xff]
        %v811 = vld [vmem:[%s4 + $0x10] sm:$0xff]
        %v812 = vld [vmem:[%s4 + $0x18] sm:$0xff]
        %v813 = vld [vmem:[%s4 + $0x20] sm:$0xff]
        %v814 = vld [vmem:[%s4 + $0x28] sm:$0xff]
        %v815 = vld [vmem:[%s4 + $0x30] sm:$0xff]
        %v816 = vld [vmem:[%s4 + $0x38] sm:$0xff]
        %v817 = vld [vmem:[%s4 + $0x40] sm:$0xff]
        %v818 = vld [vmem:[%s4 + $0x48] sm:$0xff]
        %v819 = vld [vmem:[%s4 + $0x50] sm:$0xff]
        %v820 = vld [vmem:[%s4 + $0x58] sm:$0xff]
        %v821 = vld [vmem:[%s4 + $0x60] sm:$0xff]
        %v822 = vld [vmem:[%s4 + $0x68] sm:$0xff]
        %v823 = vld [vmem:[%s4 + $0x70] sm:$0xff]
        %v824 = vld [vmem:[%s4 + $0x78] sm:$0xff]
        %v825 = vld [vmem:[%s4 + $0x80] sm:$0xff]
        %v826 = vld [vmem:[%s4 + $0x88] sm:$0xff]
        %v827 = vld [vmem:[%s4 + $0x90] sm:$0xff]
        %v828 = vld [vmem:[%s4 + $0x98] sm:$0xff]
        %v829 = vld [vmem:[%s4 + $0xa0] sm:$0xff]
        %v830 = vld [vmem:[%s4 + $0xa8] sm:$0xff]
        %v831 = vld [vmem:[%s4 + $0xb0] sm:$0xff]
        %v832 = vld [vmem:[%s4 + $0xb8] sm:$0xff]
        %v833 = vld [vmem:[%s4 + $0xc0] sm:$0xff]
        %v834 = vld [vmem:[%s4 + $0xc8] sm:$0xff]
        %v835 = vld [vmem:[%s4 + $0xd0] sm:$0xff]
        %v836 = vld [vmem:[%s4 + $0xd8] sm:$0xff]
        %v837 = vld [vmem:[%s4 + $0xe0] sm:$0xff]
        %v838 = vld [vmem:[%s4 + $0xe8] sm:$0xff]
        %v839 = vld [vmem:[%s4 + $0xf0] sm:$0xff]
        %v840 = vld [vmem:[%s4 + $0xf8] sm:$0xff]
        %v841 = vld [vmem:[%s4 + $0x100] sm:$0xff]
        %v842 = vld [vmem:[%s4 + $0x108] sm:$0xff]
        %v843 = vld [vmem:[%s4 + $0x110] sm:$0xff]
        %v844 = vld [vmem:[%s4 + $0x118] sm:$0xff]
        %v846 = vsel %vm730, %v808, 0
        %848 = vmatprep.subr.mxu0 0.0
        %849 = vmatpush1.msra.mxu0 %v824
        %850 = vmatprep.subr.mxu0 0.0
        %851 = vmatpush1.msra.mxu0 %v823
        %852 = vmatprep.subr.mxu0 0.0
        %853 = vmatpush1.msra.mxu0 %v822
        %854 = vmatprep.subr.mxu0 0.0
        %855 = vmatpush1.msra.mxu0 %v821
        %856 = vmatprep.subr.mxu0 0.0
        %857 = vmatpush1.msra.mxu0 %v820
        %858 = vmatprep.subr.mxu0 0.0
        %859 = vmatpush1.msra.mxu0 %v819
        %860 = vmatprep.subr.mxu0 0.0
        %861 = vmatpush1.msra.mxu0 %v818
        %862 = vmatprep.subr.mxu0 0.0
        %863 = vmatpush1.msra.mxu0 %v817
        %864 = vmatprep.subr.mxu0 0.0
        %865 = vmatpush1.msra.mxu0 %v816
        %866 = vmatprep.subr.mxu0 0.0
        %867 = vmatpush1.msra.mxu0 %v815
        %868 = vmatprep.subr.mxu0 0.0
        %869 = vmatpush1.msra.mxu0 %v814
        %870 = vmatprep.subr.mxu0 0.0
        %871 = vmatpush1.msra.mxu0 %v813
        %872 = vmatprep.subr.mxu0 0.0
        %873 = vmatpush1.msra.mxu0 %v812
        %874 = vmatprep.subr.mxu0 0.0
        %875 = vmatpush1.msra.mxu0 %v811
        %876 = vmatprep.subr.mxu0 0.0
        %877 = vmatpush1.msra.mxu0 %v810
        %878 = vmatprep.subr.mxu0 0.0
        %879 = vmatpush1.msra.mxu0 %v809
        %880 = vmatprep.subr.mxu0 0.0
        %881 = vmatpush2.msra.mxu0 %v840
        %882 = vmatprep.subr.mxu0 0.0
        %883 = vmatpush2.msra.mxu0 %v839
        %884 = vmatprep.subr.mxu0 0.0
        %885 = vmatpush2.msra.mxu0 %v838
        %886 = vmatprep.subr.mxu0 0.0
        %887 = vmatpush2.msra.mxu0 %v837
        %888 = vmatprep.subr.mxu0 0.0
        %889 = vmatpush2.msra.mxu0 %v836
        %890 = vmatprep.subr.mxu0 0.0
        %891 = vmatpush2.msra.mxu0 %v835
        %892 = vmatprep.subr.mxu0 0.0
        %893 = vmatpush2.msra.mxu0 %v834
        %894 = vmatprep.subr.mxu0 0.0
        %895 = vmatpush2.msra.mxu0 %v833
        %896 = vmatprep.subr.mxu0 0.0
        %897 = vmatpush2.msra.mxu0 %v832
        %898 = vmatprep.subr.mxu0 0.0
        %899 = vmatpush2.msra.mxu0 %v831
        %900 = vmatprep.subr.mxu0 0.0
        %901 = vmatpush2.msra.mxu0 %v830
        %902 = vmatprep.subr.mxu0 0.0
        %903 = vmatpush2.msra.mxu0 %v829
        %904 = vmatprep.subr.mxu0 0.0
        %905 = vmatpush2.msra.mxu0 %v828
        %906 = vmatprep.subr.mxu0 0.0
        %907 = vmatpush2.msra.mxu0 %v827
        %908 = vmatprep.subr.mxu0 0.0
        %909 = vmatpush2.msra.mxu0 %v826
        %910 = vmatprep.subr.mxu0 0.0
        %911 = vmatpush2.msra.mxu0 %v825
        %912 = vmatprep.mubr.f32.mxu0 %v807
        %913 = vmatmul.mubr.f32.gmra.mxu0 %v806
        %v914 = vpop.f32.mrf.mxu0
        %v915 = vadd.f32 0.0, %v914
        %v916 = vpop.f32.mrf.mxu0
        %917 = vdwg.mxu0
        %918 = vmatprep.subr.mxu0 0.0
        %919 = vmatpush1.msra.mxu0 0.0
        %920 = vmatprep.subr.mxu0 0.0
        %921 = vmatpush1.msra.mxu0 0.0
        %922 = vmatprep.subr.mxu0 0.0
        %923 = vmatpush1.msra.mxu0 0.0
        %924 = vmatprep.subr.mxu0 0.0
        %925 = vmatpush1.msra.mxu0 0.0
        %926 = vmatprep.subr.mxu0 0.0
        %927 = vmatpush1.msra.mxu0 0.0
        %928 = vmatprep.subr.mxu0 0.0
        %929 = vmatpush1.msra.mxu0 0.0
        %930 = vmatprep.subr.mxu0 0.0
        %931 = vmatpush1.msra.mxu0 0.0
        %932 = vmatprep.subr.mxu0 0.0
        %933 = vmatpush1.msra.mxu0 0.0
        %934 = vmatprep.subr.mxu0 0.0
        %935 = vmatpush1.msra.mxu0 0.0
        %936 = vmatprep.subr.mxu0 0.0
        %937 = vmatpush1.msra.mxu0 0.0
        %938 = vmatprep.subr.mxu0 0.0
        %939 = vmatpush1.msra.mxu0 0.0
        %940 = vmatprep.subr.mxu0 0.0
        %941 = vmatpush1.msra.mxu0 0.0
        %942 = vmatprep.subr.mxu0 0.0
        %943 = vmatpush1.msra.mxu0 %v844
        %944 = vmatprep.subr.mxu0 0.0
        %945 = vmatpush1.msra.mxu0 %v843
        %946 = vmatprep.subr.mxu0 0.0
        %947 = vmatpush1.msra.mxu0 %v842
        %948 = vmatprep.subr.mxu0 0.0
        %949 = vmatpush1.msra.mxu0 %v841
        %950 = vmatprep.subr.mxu0 0.0
        %951 = vmatpush2.msra.mxu0 0.0
        %952 = vmatprep.subr.mxu0 0.0
        %953 = vmatpush2.msra.mxu0 0.0
        %954 = vmatprep.subr.mxu0 0.0
        %955 = vmatpush2.msra.mxu0 0.0
        %956 = vmatprep.subr.mxu0 0.0
        %957 = vmatpush2.msra.mxu0 0.0
        %958 = vmatprep.subr.mxu0 0.0
        %959 = vmatpush2.msra.mxu0 0.0
        %960 = vmatprep.subr.mxu0 0.0
        %961 = vmatpush2.msra.mxu0 0.0
        %962 = vmatprep.subr.mxu0 0.0
        %963 = vmatpush2.msra.mxu0 0.0
        %964 = vmatprep.subr.mxu0 0.0
        %965 = vmatpush2.msra.mxu0 0.0
        %966 = vmatprep.subr.mxu0 0.0
        %967 = vmatpush2.msra.mxu0 0.0
        %968 = vmatprep.subr.mxu0 0.0
        %969 = vmatpush2.msra.mxu0 0.0
        %970 = vmatprep.subr.mxu0 0.0
        %971 = vmatpush2.msra.mxu0 0.0
        %972 = vmatprep.subr.mxu0 0.0
        %973 = vmatpush2.msra.mxu0 0.0
        %974 = vmatprep.subr.mxu0 0.0
        %975 = vmatpush2.msra.mxu0 0.0
        %976 = vmatprep.subr.mxu0 0.0
        %977 = vmatpush2.msra.mxu0 0.0
        %978 = vmatprep.subr.mxu0 0.0
        %979 = vmatpush2.msra.mxu0 0.0
        %980 = vmatprep.subr.mxu0 0.0
        %981 = vmatpush2.msra.mxu0 0.0
        %982 = vmatprep.mubr.f32.mxu0 0.0
        %983 = vmatmul.mubr.f32.gmra.mxu0 %v846
        %v984 = vpop.f32.mrf.mxu0
        %v985 = vadd.f32 %v915, %v984
        %v986 = vpop.f32.mrf.mxu0
        %987 = vdwg.mxu0
        %s988 = scalar_lea.vmem %s4, 288
        %v989 = vld [vmem:[%s988] sm:$0xff]
        %v990 = vld [vmem:[%s988 + $0x8] sm:$0xff]
        %v991 = vld [vmem:[%s988 + $0x10] sm:$0xff]
        %v992 = vld [vmem:[%s988 + $0x18] sm:$0xff]
        %v993 = vld [vmem:[%s988 + $0x20] sm:$0xff]
        %v994 = vld [vmem:[%s988 + $0x28] sm:$0xff]
        %v995 = vld [vmem:[%s988 + $0x30] sm:$0xff]
        %v996 = vld [vmem:[%s988 + $0x38] sm:$0xff]
        %v997 = vld [vmem:[%s988 + $0x40] sm:$0xff]
        %v998 = vld [vmem:[%s988 + $0x48] sm:$0xff]
        %v999 = vld [vmem:[%s988 + $0x50] sm:$0xff]
        %v1000 = vld [vmem:[%s988 + $0x58] sm:$0xff]
        %v1001 = vld [vmem:[%s988 + $0x60] sm:$0xff]
        %v1002 = vld [vmem:[%s988 + $0x68] sm:$0xff]
        %v1003 = vld [vmem:[%s988 + $0x70] sm:$0xff]
        %v1004 = vld [vmem:[%s988 + $0x78] sm:$0xff]
        %v1005 = vld [vmem:[%s988 + $0x80] sm:$0xff]
        %v1006 = vld [vmem:[%s988 + $0x88] sm:$0xff]
        %v1007 = vld [vmem:[%s988 + $0x90] sm:$0xff]
        %v1008 = vld [vmem:[%s988 + $0x98] sm:$0xff]
        %v1009 = vld [vmem:[%s988 + $0xa0] sm:$0xff]
        %v1010 = vld [vmem:[%s988 + $0xa8] sm:$0xff]
        %v1011 = vld [vmem:[%s988 + $0xb0] sm:$0xff]
        %v1012 = vld [vmem:[%s988 + $0xb8] sm:$0xff]
        %v1013 = vld [vmem:[%s988 + $0xc0] sm:$0xff]
        %v1014 = vld [vmem:[%s988 + $0xc8] sm:$0xff]
        %v1015 = vld [vmem:[%s988 + $0xd0] sm:$0xff]
        %v1016 = vld [vmem:[%s988 + $0xd8] sm:$0xff]
        %v1017 = vld [vmem:[%s988 + $0xe0] sm:$0xff]
        %v1018 = vld [vmem:[%s988 + $0xe8] sm:$0xff]
        %v1019 = vld [vmem:[%s988 + $0xf0] sm:$0xff]
        %v1020 = vld [vmem:[%s988 + $0xf8] sm:$0xff]
        %v1021 = vld [vmem:[%s988 + $0x100] sm:$0xff]
        %v1022 = vld [vmem:[%s988 + $0x108] sm:$0xff]
        %v1023 = vld [vmem:[%s988 + $0x110] sm:$0xff]
        %v1024 = vld [vmem:[%s988 + $0x118] sm:$0xff]
        %1025 = vmatprep.subr.mxu0 0.0
        %1026 = vmatpush1.msra.mxu0 %v1004
        %1027 = vmatprep.subr.mxu0 0.0
        %1028 = vmatpush1.msra.mxu0 %v1003
        %1029 = vmatprep.subr.mxu0 0.0
        %1030 = vmatpush1.msra.mxu0 %v1002
        %1031 = vmatprep.subr.mxu0 0.0
        %1032 = vmatpush1.msra.mxu0 %v1001
        %1033 = vmatprep.subr.mxu0 0.0
        %1034 = vmatpush1.msra.mxu0 %v1000
        %1035 = vmatprep.subr.mxu0 0.0
        %1036 = vmatpush1.msra.mxu0 %v999
        %1037 = vmatprep.subr.mxu0 0.0
        %1038 = vmatpush1.msra.mxu0 %v998
        %1039 = vmatprep.subr.mxu0 0.0
        %1040 = vmatpush1.msra.mxu0 %v997
        %1041 = vmatprep.subr.mxu0 0.0
        %1042 = vmatpush1.msra.mxu0 %v996
        %1043 = vmatprep.subr.mxu0 0.0
        %1044 = vmatpush1.msra.mxu0 %v995
        %1045 = vmatprep.subr.mxu0 0.0
        %1046 = vmatpush1.msra.mxu0 %v994
        %1047 = vmatprep.subr.mxu0 0.0
        %1048 = vmatpush1.msra.mxu0 %v993
        %1049 = vmatprep.subr.mxu0 0.0
        %1050 = vmatpush1.msra.mxu0 %v992
        %1051 = vmatprep.subr.mxu0 0.0
        %1052 = vmatpush1.msra.mxu0 %v991
        %1053 = vmatprep.subr.mxu0 0.0
        %1054 = vmatpush1.msra.mxu0 %v990
        %1055 = vmatprep.subr.mxu0 0.0
        %1056 = vmatpush1.msra.mxu0 %v989
        %1057 = vmatprep.subr.mxu0 0.0
        %1058 = vmatpush2.msra.mxu0 %v1020
        %1059 = vmatprep.subr.mxu0 0.0
        %1060 = vmatpush2.msra.mxu0 %v1019
        %1061 = vmatprep.subr.mxu0 0.0
        %1062 = vmatpush2.msra.mxu0 %v1018
        %1063 = vmatprep.subr.mxu0 0.0
        %1064 = vmatpush2.msra.mxu0 %v1017
        %1065 = vmatprep.subr.mxu0 0.0
        %1066 = vmatpush2.msra.mxu0 %v1016
        %1067 = vmatprep.subr.mxu0 0.0
        %1068 = vmatpush2.msra.mxu0 %v1015
        %1069 = vmatprep.subr.mxu0 0.0
        %1070 = vmatpush2.msra.mxu0 %v1014
        %1071 = vmatprep.subr.mxu0 0.0
        %1072 = vmatpush2.msra.mxu0 %v1013
        %1073 = vmatprep.subr.mxu0 0.0
        %1074 = vmatpush2.msra.mxu0 %v1012
        %1075 = vmatprep.subr.mxu0 0.0
        %1076 = vmatpush2.msra.mxu0 %v1011
        %1077 = vmatprep.subr.mxu0 0.0
        %1078 = vmatpush2.msra.mxu0 %v1010
        %1079 = vmatprep.subr.mxu0 0.0
        %1080 = vmatpush2.msra.mxu0 %v1009
        %1081 = vmatprep.subr.mxu0 0.0
        %1082 = vmatpush2.msra.mxu0 %v1008
        %1083 = vmatprep.subr.mxu0 0.0
        %1084 = vmatpush2.msra.mxu0 %v1007
        %1085 = vmatprep.subr.mxu0 0.0
        %1086 = vmatpush2.msra.mxu0 %v1006
        %1087 = vmatprep.subr.mxu0 0.0
        %1088 = vmatpush2.msra.mxu0 %v1005
        %1089 = vmatprep.mubr.f32.mxu0 %v807
        %1090 = vmatmul.mubr.f32.gmra.mxu0 %v806
        %v1091 = vpop.f32.mrf.mxu0
        %v1092 = vadd.f32 0.0, %v1091
        %v1093 = vpop.f32.mrf.mxu0
        %1094 = vdwg.mxu0
        %1095 = vmatprep.subr.mxu0 0.0
        %1096 = vmatpush1.msra.mxu0 0.0
        %1097 = vmatprep.subr.mxu0 0.0
        %1098 = vmatpush1.msra.mxu0 0.0
        %1099 = vmatprep.subr.mxu0 0.0
        %1100 = vmatpush1.msra.mxu0 0.0
        %1101 = vmatprep.subr.mxu0 0.0
        %1102 = vmatpush1.msra.mxu0 0.0
        %1103 = vmatprep.subr.mxu0 0.0
        %1104 = vmatpush1.msra.mxu0 0.0
        %1105 = vmatprep.subr.mxu0 0.0
        %1106 = vmatpush1.msra.mxu0 0.0
        %1107 = vmatprep.subr.mxu0 0.0
        %1108 = vmatpush1.msra.mxu0 0.0
        %1109 = vmatprep.subr.mxu0 0.0
        %1110 = vmatpush1.msra.mxu0 0.0
        %1111 = vmatprep.subr.mxu0 0.0
        %1112 = vmatpush1.msra.mxu0 0.0
        %1113 = vmatprep.subr.mxu0 0.0
        %1114 = vmatpush1.msra.mxu0 0.0
        %1115 = vmatprep.subr.mxu0 0.0
        %1116 = vmatpush1.msra.mxu0 0.0
        %1117 = vmatprep.subr.mxu0 0.0
        %1118 = vmatpush1.msra.mxu0 0.0
        %1119 = vmatprep.subr.mxu0 0.0
        %1120 = vmatpush1.msra.mxu0 %v1024
        %1121 = vmatprep.subr.mxu0 0.0
        %1122 = vmatpush1.msra.mxu0 %v1023
        %1123 = vmatprep.subr.mxu0 0.0
        %1124 = vmatpush1.msra.mxu0 %v1022
        %1125 = vmatprep.subr.mxu0 0.0
        %1126 = vmatpush1.msra.mxu0 %v1021
        %1127 = vmatprep.subr.mxu0 0.0
        %1128 = vmatpush2.msra.mxu0 0.0
        %1129 = vmatprep.subr.mxu0 0.0
        %1130 = vmatpush2.msra.mxu0 0.0
        %1131 = vmatprep.subr.mxu0 0.0
        %1132 = vmatpush2.msra.mxu0 0.0
        %1133 = vmatprep.subr.mxu0 0.0
        %1134 = vmatpush2.msra.mxu0 0.0
        %1135 = vmatprep.subr.mxu0 0.0
        %1136 = vmatpush2.msra.mxu0 0.0
        %1137 = vmatprep.subr.mxu0 0.0
        %1138 = vmatpush2.msra.mxu0 0.0
        %1139 = vmatprep.subr.mxu0 0.0
        %1140 = vmatpush2.msra.mxu0 0.0
        %1141 = vmatprep.subr.mxu0 0.0
        %1142 = vmatpush2.msra.mxu0 0.0
        %1143 = vmatprep.subr.mxu0 0.0
        %1144 = vmatpush2.msra.mxu0 0.0
        %1145 = vmatprep.subr.mxu0 0.0
        %1146 = vmatpush2.msra.mxu0 0.0
        %1147 = vmatprep.subr.mxu0 0.0
        %1148 = vmatpush2.msra.mxu0 0.0
        %1149 = vmatprep.subr.mxu0 0.0
        %1150 = vmatpush2.msra.mxu0 0.0
        %1151 = vmatprep.subr.mxu0 0.0
        %1152 = vmatpush2.msra.mxu0 0.0
        %1153 = vmatprep.subr.mxu0 0.0
        %1154 = vmatpush2.msra.mxu0 0.0
        %1155 = vmatprep.subr.mxu0 0.0
        %1156 = vmatpush2.msra.mxu0 0.0
        %1157 = vmatprep.subr.mxu0 0.0
        %1158 = vmatpush2.msra.mxu0 0.0
        %1159 = vmatprep.mubr.f32.mxu0 0.0
        %1160 = vmatmul.mubr.f32.gmra.mxu0 %v846
        %v1161 = vpop.f32.mrf.mxu0
        %v1162 = vadd.f32 %v1092, %v1161
        %v1163 = vpop.f32.mrf.mxu0
        %1164 = vdwg.mxu0
        %s1165 = scalar_lea.vmem %s4, 576
        %v1166 = vld [vmem:[%s1165] sm:$0xff]
        %v1167 = vld [vmem:[%s1165 + $0x8] sm:$0xff]
        %v1168 = vld [vmem:[%s1165 + $0x10] sm:$0xff]
        %v1169 = vld [vmem:[%s1165 + $0x18] sm:$0xff]
        %v1170 = vld [vmem:[%s1165 + $0x20] sm:$0xff]
        %v1171 = vld [vmem:[%s1165 + $0x28] sm:$0xff]
        %v1172 = vld [vmem:[%s1165 + $0x30] sm:$0xff]
        %v1173 = vld [vmem:[%s1165 + $0x38] sm:$0xff]
        %v1174 = vld [vmem:[%s1165 + $0x40] sm:$0xff]
        %v1175 = vld [vmem:[%s1165 + $0x48] sm:$0xff]
        %v1176 = vld [vmem:[%s1165 + $0x50] sm:$0xff]
        %v1177 = vld [vmem:[%s1165 + $0x58] sm:$0xff]
        %v1178 = vld [vmem:[%s1165 + $0x60] sm:$0xff]
        %v1179 = vld [vmem:[%s1165 + $0x68] sm:$0xff]
        %v1180 = vld [vmem:[%s1165 + $0x70] sm:$0xff]
        %v1181 = vld [vmem:[%s1165 + $0x78] sm:$0xff]
        %v1182 = vld [vmem:[%s1165 + $0x80] sm:$0xff]
        %v1183 = vld [vmem:[%s1165 + $0x88] sm:$0xff]
        %v1184 = vld [vmem:[%s1165 + $0x90] sm:$0xff]
        %v1185 = vld [vmem:[%s1165 + $0x98] sm:$0xff]
        %v1186 = vld [vmem:[%s1165 + $0xa0] sm:$0xff]
        %v1187 = vld [vmem:[%s1165 + $0xa8] sm:$0xff]
        %v1188 = vld [vmem:[%s1165 + $0xb0] sm:$0xff]
        %v1189 = vld [vmem:[%s1165 + $0xb8] sm:$0xff]
        %v1190 = vld [vmem:[%s1165 + $0xc0] sm:$0xff]
        %v1191 = vld [vmem:[%s1165 + $0xc8] sm:$0xff]
        %v1192 = vld [vmem:[%s1165 + $0xd0] sm:$0xff]
        %v1193 = vld [vmem:[%s1165 + $0xd8] sm:$0xff]
        %v1194 = vld [vmem:[%s1165 + $0xe0] sm:$0xff]
        %v1195 = vld [vmem:[%s1165 + $0xe8] sm:$0xff]
        %v1196 = vld [vmem:[%s1165 + $0xf0] sm:$0xff]
        %v1197 = vld [vmem:[%s1165 + $0xf8] sm:$0xff]
        %v1198 = vld [vmem:[%s1165 + $0x100] sm:$0xff]
        %v1199 = vld [vmem:[%s1165 + $0x108] sm:$0xff]
        %v1200 = vld [vmem:[%s1165 + $0x110] sm:$0xff]
        %v1201 = vld [vmem:[%s1165 + $0x118] sm:$0xff]
        %1202 = vmatprep.subr.mxu0 0.0
        %1203 = vmatpush1.msra.mxu0 %v1181
        %1204 = vmatprep.subr.mxu0 0.0
        %1205 = vmatpush1.msra.mxu0 %v1180
        %1206 = vmatprep.subr.mxu0 0.0
        %1207 = vmatpush1.msra.mxu0 %v1179
        %1208 = vmatprep.subr.mxu0 0.0
        %1209 = vmatpush1.msra.mxu0 %v1178
        %1210 = vmatprep.subr.mxu0 0.0
        %1211 = vmatpush1.msra.mxu0 %v1177
        %1212 = vmatprep.subr.mxu0 0.0
        %1213 = vmatpush1.msra.mxu0 %v1176
        %1214 = vmatprep.subr.mxu0 0.0
        %1215 = vmatpush1.msra.mxu0 %v1175
        %1216 = vmatprep.subr.mxu0 0.0
        %1217 = vmatpush1.msra.mxu0 %v1174
        %1218 = vmatprep.subr.mxu0 0.0
        %1219 = vmatpush1.msra.mxu0 %v1173
        %1220 = vmatprep.subr.mxu0 0.0
        %1221 = vmatpush1.msra.mxu0 %v1172
        %1222 = vmatprep.subr.mxu0 0.0
        %1223 = vmatpush1.msra.mxu0 %v1171
        %1224 = vmatprep.subr.mxu0 0.0
        %1225 = vmatpush1.msra.mxu0 %v1170
        %1226 = vmatprep.subr.mxu0 0.0
        %1227 = vmatpush1.msra.mxu0 %v1169
        %1228 = vmatprep.subr.mxu0 0.0
        %1229 = vmatpush1.msra.mxu0 %v1168
        %1230 = vmatprep.subr.mxu0 0.0
        %1231 = vmatpush1.msra.mxu0 %v1167
        %1232 = vmatprep.subr.mxu0 0.0
        %1233 = vmatpush1.msra.mxu0 %v1166
        %1234 = vmatprep.subr.mxu0 0.0
        %1235 = vmatpush2.msra.mxu0 %v1197
        %1236 = vmatprep.subr.mxu0 0.0
        %1237 = vmatpush2.msra.mxu0 %v1196
        %1238 = vmatprep.subr.mxu0 0.0
        %1239 = vmatpush2.msra.mxu0 %v1195
        %1240 = vmatprep.subr.mxu0 0.0
        %1241 = vmatpush2.msra.mxu0 %v1194
        %1242 = vmatprep.subr.mxu0 0.0
        %1243 = vmatpush2.msra.mxu0 %v1193
        %1244 = vmatprep.subr.mxu0 0.0
        %1245 = vmatpush2.msra.mxu0 %v1192
        %1246 = vmatprep.subr.mxu0 0.0
        %1247 = vmatpush2.msra.mxu0 %v1191
        %1248 = vmatprep.subr.mxu0 0.0
        %1249 = vmatpush2.msra.mxu0 %v1190
        %1250 = vmatprep.subr.mxu0 0.0
        %1251 = vmatpush2.msra.mxu0 %v1189
        %1252 = vmatprep.subr.mxu0 0.0
        %1253 = vmatpush2.msra.mxu0 %v1188
        %1254 = vmatprep.subr.mxu0 0.0
        %1255 = vmatpush2.msra.mxu0 %v1187
        %1256 = vmatprep.subr.mxu0 0.0
        %1257 = vmatpush2.msra.mxu0 %v1186
        %1258 = vmatprep.subr.mxu0 0.0
        %1259 = vmatpush2.msra.mxu0 %v1185
        %1260 = vmatprep.subr.mxu0 0.0
        %1261 = vmatpush2.msra.mxu0 %v1184
        %1262 = vmatprep.subr.mxu0 0.0
        %1263 = vmatpush2.msra.mxu0 %v1183
        %1264 = vmatprep.subr.mxu0 0.0
        %1265 = vmatpush2.msra.mxu0 %v1182
        %1266 = vmatprep.mubr.f32.mxu0 %v807
        %1267 = vmatmul.mubr.f32.gmra.mxu0 %v806
        %v1268 = vpop.f32.mrf.mxu0
        %v1269 = vadd.f32 0.0, %v1268
        %v1270 = vpop.f32.mrf.mxu0
        %1271 = vdwg.mxu0
        %1272 = vmatprep.subr.mxu0 0.0
        %1273 = vmatpush1.msra.mxu0 0.0
        %1274 = vmatprep.subr.mxu0 0.0
        %1275 = vmatpush1.msra.mxu0 0.0
        %1276 = vmatprep.subr.mxu0 0.0
        %1277 = vmatpush1.msra.mxu0 0.0
        %1278 = vmatprep.subr.mxu0 0.0
        %1279 = vmatpush1.msra.mxu0 0.0
        %1280 = vmatprep.subr.mxu0 0.0
        %1281 = vmatpush1.msra.mxu0 0.0
        %1282 = vmatprep.subr.mxu0 0.0
        %1283 = vmatpush1.msra.mxu0 0.0
        %1284 = vmatprep.subr.mxu0 0.0
        %1285 = vmatpush1.msra.mxu0 0.0
        %1286 = vmatprep.subr.mxu0 0.0
        %1287 = vmatpush1.msra.mxu0 0.0
        %1288 = vmatprep.subr.mxu0 0.0
        %1289 = vmatpush1.msra.mxu0 0.0
        %1290 = vmatprep.subr.mxu0 0.0
        %1291 = vmatpush1.msra.mxu0 0.0
        %1292 = vmatprep.subr.mxu0 0.0
        %1293 = vmatpush1.msra.mxu0 0.0
        %1294 = vmatprep.subr.mxu0 0.0
        %1295 = vmatpush1.msra.mxu0 0.0
        %1296 = vmatprep.subr.mxu0 0.0
        %1297 = vmatpush1.msra.mxu0 %v1201
        %1298 = vmatprep.subr.mxu0 0.0
        %1299 = vmatpush1.msra.mxu0 %v1200
        %1300 = vmatprep.subr.mxu0 0.0
        %1301 = vmatpush1.msra.mxu0 %v1199
        %1302 = vmatprep.subr.mxu0 0.0
        %1303 = vmatpush1.msra.mxu0 %v1198
        %1304 = vmatprep.subr.mxu0 0.0
        %1305 = vmatpush2.msra.mxu0 0.0
        %1306 = vmatprep.subr.mxu0 0.0
        %1307 = vmatpush2.msra.mxu0 0.0
        %1308 = vmatprep.subr.mxu0 0.0
        %1309 = vmatpush2.msra.mxu0 0.0
        %1310 = vmatprep.subr.mxu0 0.0
        %1311 = vmatpush2.msra.mxu0 0.0
        %1312 = vmatprep.subr.mxu0 0.0
        %1313 = vmatpush2.msra.mxu0 0.0
        %1314 = vmatprep.subr.mxu0 0.0
        %1315 = vmatpush2.msra.mxu0 0.0
        %1316 = vmatprep.subr.mxu0 0.0
        %1317 = vmatpush2.msra.mxu0 0.0
        %1318 = vmatprep.subr.mxu0 0.0
        %1319 = vmatpush2.msra.mxu0 0.0
        %1320 = vmatprep.subr.mxu0 0.0
        %1321 = vmatpush2.msra.mxu0 0.0
        %1322 = vmatprep.subr.mxu0 0.0
        %1323 = vmatpush2.msra.mxu0 0.0
        %1324 = vmatprep.subr.mxu0 0.0
        %1325 = vmatpush2.msra.mxu0 0.0
        %1326 = vmatprep.subr.mxu0 0.0
        %1327 = vmatpush2.msra.mxu0 0.0
        %1328 = vmatprep.subr.mxu0 0.0
        %1329 = vmatpush2.msra.mxu0 0.0
        %1330 = vmatprep.subr.mxu0 0.0
        %1331 = vmatpush2.msra.mxu0 0.0
        %1332 = vmatprep.subr.mxu0 0.0
        %1333 = vmatpush2.msra.mxu0 0.0
        %1334 = vmatprep.subr.mxu0 0.0
        %1335 = vmatpush2.msra.mxu0 0.0
        %1336 = vmatprep.mubr.f32.mxu0 0.0
        %1337 = vmatmul.mubr.f32.gmra.mxu0 %v846
        %v1338 = vpop.f32.mrf.mxu0
        %v1339 = vadd.f32 %v1269, %v1338
        %v1340 = vpop.f32.mrf.mxu0
        %1341 = vdwg.mxu0
        %s1342 = scalar_lea.vmem %s4, 864
        %v1343 = vld [vmem:[%s1342] sm:$0xff]
        %v1344 = vld [vmem:[%s1342 + $0x8] sm:$0xff]
        %v1345 = vld [vmem:[%s1342 + $0x10] sm:$0xff]
        %v1346 = vld [vmem:[%s1342 + $0x18] sm:$0xff]
        %v1347 = vld [vmem:[%s1342 + $0x20] sm:$0xff]
        %v1348 = vld [vmem:[%s1342 + $0x28] sm:$0xff]
        %v1349 = vld [vmem:[%s1342 + $0x30] sm:$0xff]
        %v1350 = vld [vmem:[%s1342 + $0x38] sm:$0xff]
        %v1351 = vld [vmem:[%s1342 + $0x40] sm:$0xff]
        %v1352 = vld [vmem:[%s1342 + $0x48] sm:$0xff]
        %v1353 = vld [vmem:[%s1342 + $0x50] sm:$0xff]
        %v1354 = vld [vmem:[%s1342 + $0x58] sm:$0xff]
        %v1355 = vld [vmem:[%s1342 + $0x60] sm:$0xff]
        %v1356 = vld [vmem:[%s1342 + $0x68] sm:$0xff]
        %v1357 = vld [vmem:[%s1342 + $0x70] sm:$0xff]
        %v1358 = vld [vmem:[%s1342 + $0x78] sm:$0xff]
        %v1359 = vld [vmem:[%s1342 + $0x80] sm:$0xff]
        %v1360 = vld [vmem:[%s1342 + $0x88] sm:$0xff]
        %v1361 = vld [vmem:[%s1342 + $0x90] sm:$0xff]
        %v1362 = vld [vmem:[%s1342 + $0x98] sm:$0xff]
        %v1363 = vld [vmem:[%s1342 + $0xa0] sm:$0xff]
        %v1364 = vld [vmem:[%s1342 + $0xa8] sm:$0xff]
        %v1365 = vld [vmem:[%s1342 + $0xb0] sm:$0xff]
        %v1366 = vld [vmem:[%s1342 + $0xb8] sm:$0xff]
        %v1367 = vld [vmem:[%s1342 + $0xc0] sm:$0xff]
        %v1368 = vld [vmem:[%s1342 + $0xc8] sm:$0xff]
        %v1369 = vld [vmem:[%s1342 + $0xd0] sm:$0xff]
        %v1370 = vld [vmem:[%s1342 + $0xd8] sm:$0xff]
        %v1371 = vld [vmem:[%s1342 + $0xe0] sm:$0xff]
        %v1372 = vld [vmem:[%s1342 + $0xe8] sm:$0xff]
        %v1373 = vld [vmem:[%s1342 + $0xf0] sm:$0xff]
        %v1374 = vld [vmem:[%s1342 + $0xf8] sm:$0xff]
        %v1375 = vld [vmem:[%s1342 + $0x100] sm:$0xff]
        %v1376 = vld [vmem:[%s1342 + $0x108] sm:$0xff]
        %v1377 = vld [vmem:[%s1342 + $0x110] sm:$0xff]
        %v1378 = vld [vmem:[%s1342 + $0x118] sm:$0xff]
        %1379 = vmatprep.subr.mxu0 0.0
        %1380 = vmatpush1.msra.mxu0 %v1358
        %1381 = vmatprep.subr.mxu0 0.0
        %1382 = vmatpush1.msra.mxu0 %v1357
        %1383 = vmatprep.subr.mxu0 0.0
        %1384 = vmatpush1.msra.mxu0 %v1356
        %1385 = vmatprep.subr.mxu0 0.0
        %1386 = vmatpush1.msra.mxu0 %v1355
        %1387 = vmatprep.subr.mxu0 0.0
        %1388 = vmatpush1.msra.mxu0 %v1354
        %1389 = vmatprep.subr.mxu0 0.0
        %1390 = vmatpush1.msra.mxu0 %v1353
        %1391 = vmatprep.subr.mxu0 0.0
        %1392 = vmatpush1.msra.mxu0 %v1352
        %1393 = vmatprep.subr.mxu0 0.0
        %1394 = vmatpush1.msra.mxu0 %v1351
        %1395 = vmatprep.subr.mxu0 0.0
        %1396 = vmatpush1.msra.mxu0 %v1350
        %1397 = vmatprep.subr.mxu0 0.0
        %1398 = vmatpush1.msra.mxu0 %v1349
        %1399 = vmatprep.subr.mxu0 0.0
        %1400 = vmatpush1.msra.mxu0 %v1348
        %1401 = vmatprep.subr.mxu0 0.0
        %1402 = vmatpush1.msra.mxu0 %v1347
        %1403 = vmatprep.subr.mxu0 0.0
        %1404 = vmatpush1.msra.mxu0 %v1346
        %1405 = vmatprep.subr.mxu0 0.0
        %1406 = vmatpush1.msra.mxu0 %v1345
        %1407 = vmatprep.subr.mxu0 0.0
        %1408 = vmatpush1.msra.mxu0 %v1344
        %1409 = vmatprep.subr.mxu0 0.0
        %1410 = vmatpush1.msra.mxu0 %v1343
        %1411 = vmatprep.subr.mxu0 0.0
        %1412 = vmatpush2.msra.mxu0 %v1374
        %1413 = vmatprep.subr.mxu0 0.0
        %1414 = vmatpush2.msra.mxu0 %v1373
        %1415 = vmatprep.subr.mxu0 0.0
        %1416 = vmatpush2.msra.mxu0 %v1372
        %1417 = vmatprep.subr.mxu0 0.0
        %1418 = vmatpush2.msra.mxu0 %v1371
        %1419 = vmatprep.subr.mxu0 0.0
        %1420 = vmatpush2.msra.mxu0 %v1370
        %1421 = vmatprep.subr.mxu0 0.0
        %1422 = vmatpush2.msra.mxu0 %v1369
        %1423 = vmatprep.subr.mxu0 0.0
        %1424 = vmatpush2.msra.mxu0 %v1368
        %1425 = vmatprep.subr.mxu0 0.0
        %1426 = vmatpush2.msra.mxu0 %v1367
        %1427 = vmatprep.subr.mxu0 0.0
        %1428 = vmatpush2.msra.mxu0 %v1366
        %1429 = vmatprep.subr.mxu0 0.0
        %1430 = vmatpush2.msra.mxu0 %v1365
        %1431 = vmatprep.subr.mxu0 0.0
        %1432 = vmatpush2.msra.mxu0 %v1364
        %1433 = vmatprep.subr.mxu0 0.0
        %1434 = vmatpush2.msra.mxu0 %v1363
        %1435 = vmatprep.subr.mxu0 0.0
        %1436 = vmatpush2.msra.mxu0 %v1362
        %1437 = vmatprep.subr.mxu0 0.0
        %1438 = vmatpush2.msra.mxu0 %v1361
        %1439 = vmatprep.subr.mxu0 0.0
        %1440 = vmatpush2.msra.mxu0 %v1360
        %1441 = vmatprep.subr.mxu0 0.0
        %1442 = vmatpush2.msra.mxu0 %v1359
        %1443 = vmatprep.mubr.f32.mxu0 %v807
        %1444 = vmatmul.mubr.f32.gmra.mxu0 %v806
        %v1445 = vpop.f32.mrf.mxu0
        %v1446 = vadd.f32 0.0, %v1445
        %v1447 = vpop.f32.mrf.mxu0
        %1448 = vdwg.mxu0
        %1449 = vmatprep.subr.mxu0 0.0
        %1450 = vmatpush1.msra.mxu0 0.0
        %1451 = vmatprep.subr.mxu0 0.0
        %1452 = vmatpush1.msra.mxu0 0.0
        %1453 = vmatprep.subr.mxu0 0.0
        %1454 = vmatpush1.msra.mxu0 0.0
        %1455 = vmatprep.subr.mxu0 0.0
        %1456 = vmatpush1.msra.mxu0 0.0
        %1457 = vmatprep.subr.mxu0 0.0
        %1458 = vmatpush1.msra.mxu0 0.0
        %1459 = vmatprep.subr.mxu0 0.0
        %1460 = vmatpush1.msra.mxu0 0.0
        %1461 = vmatprep.subr.mxu0 0.0
        %1462 = vmatpush1.msra.mxu0 0.0
        %1463 = vmatprep.subr.mxu0 0.0
        %1464 = vmatpush1.msra.mxu0 0.0
        %1465 = vmatprep.subr.mxu0 0.0
        %1466 = vmatpush1.msra.mxu0 0.0
        %1467 = vmatprep.subr.mxu0 0.0
        %1468 = vmatpush1.msra.mxu0 0.0
        %1469 = vmatprep.subr.mxu0 0.0
        %1470 = vmatpush1.msra.mxu0 0.0
        %1471 = vmatprep.subr.mxu0 0.0
        %1472 = vmatpush1.msra.mxu0 0.0
        %1473 = vmatprep.subr.mxu0 0.0
        %1474 = vmatpush1.msra.mxu0 %v1378
        %1475 = vmatprep.subr.mxu0 0.0
        %1476 = vmatpush1.msra.mxu0 %v1377
        %1477 = vmatprep.subr.mxu0 0.0
        %1478 = vmatpush1.msra.mxu0 %v1376
        %1479 = vmatprep.subr.mxu0 0.0
        %1480 = vmatpush1.msra.mxu0 %v1375
        %1481 = vmatprep.subr.mxu0 0.0
        %1482 = vmatpush2.msra.mxu0 0.0
        %1483 = vmatprep.subr.mxu0 0.0
        %1484 = vmatpush2.msra.mxu0 0.0
        %1485 = vmatprep.subr.mxu0 0.0
        %1486 = vmatpush2.msra.mxu0 0.0
        %1487 = vmatprep.subr.mxu0 0.0
        %1488 = vmatpush2.msra.mxu0 0.0
        %1489 = vmatprep.subr.mxu0 0.0
        %1490 = vmatpush2.msra.mxu0 0.0
        %1491 = vmatprep.subr.mxu0 0.0
        %1492 = vmatpush2.msra.mxu0 0.0
        %1493 = vmatprep.subr.mxu0 0.0
        %1494 = vmatpush2.msra.mxu0 0.0
        %1495 = vmatprep.subr.mxu0 0.0
        %1496 = vmatpush2.msra.mxu0 0.0
        %1497 = vmatprep.subr.mxu0 0.0
        %1498 = vmatpush2.msra.mxu0 0.0
        %1499 = vmatprep.subr.mxu0 0.0
        %1500 = vmatpush2.msra.mxu0 0.0
        %1501 = vmatprep.subr.mxu0 0.0
        %1502 = vmatpush2.msra.mxu0 0.0
        %1503 = vmatprep.subr.mxu0 0.0
        %1504 = vmatpush2.msra.mxu0 0.0
        %1505 = vmatprep.subr.mxu0 0.0
        %1506 = vmatpush2.msra.mxu0 0.0
        %1507 = vmatprep.subr.mxu0 0.0
        %1508 = vmatpush2.msra.mxu0 0.0
        %1509 = vmatprep.subr.mxu0 0.0
        %1510 = vmatpush2.msra.mxu0 0.0
        %1511 = vmatprep.subr.mxu0 0.0
        %1512 = vmatpush2.msra.mxu0 0.0
        %1513 = vmatprep.mubr.f32.mxu0 0.0
        %1514 = vmatmul.mubr.f32.gmra.mxu0 %v846
        %v1515 = vpop.f32.mrf.mxu0
        %v1516 = vadd.f32 %v1446, %v1515
        %v1517 = vpop.f32.mrf.mxu0
        %1518 = vdwg.mxu0
        %1520 = vrot.lane.b32.xlu0 %v985, 127
        %v1521 = vpop.permute.xlu0 %1520
        %1523 = vrot.lane.b32.xlu0 %v985, 119
        %v1524 = vpop.permute.xlu0 %1523
        %1526 = vrot.lane.b32.xlu0 %v985, 118
        %v1527 = vpop.permute.xlu0 %1526
        %1530 = vrot.lane.b32.xlu0 %v1162, 127
        %v1531 = vpop.permute.xlu0 %1530
        %1533 = vrot.lane.b32.xlu0 %v1162, 119
        %v1534 = vpop.permute.xlu0 %1533
        %1536 = vrot.lane.b32.xlu0 %v1162, 118
        %v1537 = vpop.permute.xlu0 %1536
        %1540 = vrot.lane.b32.xlu0 %v1339, 127
        %v1541 = vpop.permute.xlu0 %1540
        %1543 = vrot.lane.b32.xlu0 %v1339, 119
        %v1544 = vpop.permute.xlu0 %1543
        %1546 = vrot.lane.b32.xlu0 %v1339, 118
        %v1547 = vpop.permute.xlu0 %1546
        %1550 = vrot.lane.b32.xlu0 %v1516, 127
        %v1551 = vpop.permute.xlu0 %1550
        %1553 = vrot.lane.b32.xlu0 %v1516, 119
        %v1554 = vpop.permute.xlu0 %1553
        %1556 = vrot.lane.b32.xlu0 %v1516, 118
        %v1557 = vpop.permute.xlu0 %1556
        %v1559 = vld [vmem:[%s3] sm:$0xff]
        %1560 = vset.pattern.permute.xlu0 4
        %1561 = vperm.xlu0 %1560, %v414
        %v1562 = vpop.permute.xlu0 %1561
        %1564 = vmatprep.subr.mxu0 0.0
        %1565 = vmatpush1.msra.mxu0 %v1557
        %1566 = vmatprep.subr.mxu0 0.0
        %1567 = vmatpush1.msra.mxu0 %v1554
        %1568 = vmatprep.subr.mxu0 0.0
        %1569 = vmatpush1.msra.mxu0 %v1551
        %1570 = vmatprep.subr.mxu0 0.0
        %1571 = vmatpush1.msra.mxu0 %v1516
        %1572 = vmatprep.subr.mxu0 0.0
        %1573 = vmatpush1.msra.mxu0 %v1547
        %1574 = vmatprep.subr.mxu0 0.0
        %1575 = vmatpush1.msra.mxu0 %v1544
        %1576 = vmatprep.subr.mxu0 0.0
        %1577 = vmatpush1.msra.mxu0 %v1541
        %1578 = vmatprep.subr.mxu0 0.0
        %1579 = vmatpush1.msra.mxu0 %v1339
        %1580 = vmatprep.subr.mxu0 0.0
        %1581 = vmatpush1.msra.mxu0 %v1537
        %1582 = vmatprep.subr.mxu0 0.0
        %1583 = vmatpush1.msra.mxu0 %v1534
        %1584 = vmatprep.subr.mxu0 0.0
        %1585 = vmatpush1.msra.mxu0 %v1531
        %1586 = vmatprep.subr.mxu0 0.0
        %1587 = vmatpush1.msra.mxu0 %v1162
        %1588 = vmatprep.subr.mxu0 0.0
        %1589 = vmatpush1.msra.mxu0 %v1527
        %1590 = vmatprep.subr.mxu0 0.0
        %1591 = vmatpush1.msra.mxu0 %v1524
        %1592 = vmatprep.subr.mxu0 0.0
        %1593 = vmatpush1.msra.mxu0 %v1521
        %1594 = vmatprep.subr.mxu0 0.0
        %1595 = vmatpush1.msra.mxu0 %v985
        %1596 = vmatprep.subr.mxu0 0.0
        %1597 = vmatpush2.msra.mxu0 0.0
        %1598 = vmatprep.subr.mxu0 0.0
        %1599 = vmatpush2.msra.mxu0 0.0
        %1600 = vmatprep.subr.mxu0 0.0
        %1601 = vmatpush2.msra.mxu0 0.0
        %1602 = vmatprep.subr.mxu0 0.0
        %1603 = vmatpush2.msra.mxu0 0.0
        %1604 = vmatprep.subr.mxu0 0.0
        %1605 = vmatpush2.msra.mxu0 0.0
        %1606 = vmatprep.subr.mxu0 0.0
        %1607 = vmatpush2.msra.mxu0 0.0
        %1608 = vmatprep.subr.mxu0 0.0
        %1609 = vmatpush2.msra.mxu0 0.0
        %1610 = vmatprep.subr.mxu0 0.0
        %1611 = vmatpush2.msra.mxu0 0.0
        %1612 = vmatprep.subr.mxu0 0.0
        %1613 = vmatpush2.msra.mxu0 0.0
        %1614 = vmatprep.subr.mxu0 0.0
        %1615 = vmatpush2.msra.mxu0 0.0
        %1616 = vmatprep.subr.mxu0 0.0
        %1617 = vmatpush2.msra.mxu0 0.0
        %1618 = vmatprep.subr.mxu0 0.0
        %1619 = vmatpush2.msra.mxu0 0.0
        %1620 = vmatprep.subr.mxu0 0.0
        %1621 = vmatpush2.msra.mxu0 0.0
        %1622 = vmatprep.subr.mxu0 0.0
        %1623 = vmatpush2.msra.mxu0 0.0
        %1624 = vmatprep.subr.mxu0 0.0
        %1625 = vmatpush2.msra.mxu0 0.0
        %1626 = vmatprep.subr.mxu0 0.0
        %1627 = vmatpush2.msra.mxu0 0.0
        %1628 = vmatprep.mubr.f32.mxu0 0.0
        %1629 = vmatmul.mubr.f32.gmra.mxu0 %v1559
        %v1630 = vpop.f32.mrf.mxu0
        %v1631 = vadd.f32 %v1562, %v1630
        %v1632 = vpop.f32.mrf.mxu0
        %1633 = vdwg.mxu0
        %vm1634 = vcmp.lt.s32.totalorder %v666, 0
        %v1635 = vsub.s32 0, %v666
        %v1636 = vsel %vm1634, %v1635, %v666
        %v1637 = vmul.u32.u64.compose %v1636, 3817748708
        %v1638 = vextract.low.u32 %v1637
        %v1639 = vextract.high.u32 %v1637
        %v1640 = vshrl.u32 %v1639, 3
        %v1641 = vmul.u32 %v1640, 9
        %v1642 = vsub.s32 %v1636, %v1641
        %v1643 = vsub.s32 0, %v1642
        %v1644 = vsel %vm1634, %v1643, %v1642
        %vm1645 = vcmp.ne.s32.totalorder %v1644, 0
        %vm1646 = vcmp.lt.s32.totalorder %v1644, 0
        %vm1647 = vmand %vm1646, %vm1645
        %v1648 = vadd.s32 %v1644, 9
        %v1649 = vsel %vm1647, %v1648, %v1644
        %vm1650 = vcmp.lt.s32.totalorder %v1649, 8
        %v1651 = vsel %vm1650, 1, 0
        %vm1652 = vcmp.eq.s32.totalorder %v1651, 1
        %v1653 = vsel %vm1652, %v1631, 0.0
        %v1654 = vsel %vm520, %v1653, 0.0
        %1655 = vadd.xlane.f32.xlu0 %v1654
        %v1656 = vpop.xlane.xlu0 %1655
        %v1657 = vrot.slane %v1656, 4
        %v1658 = vadd.f32 %v1656, %v1657
        %v1659 = vrot.slane %v1658, 2
        %v1660 = vadd.f32 %v1658, %v1659
        %v1661 = vrot.slane %v1660, 1
        %v1662 = vadd.f32 %v1660, %v1661
        %v1663 = vmul.f32 %v1662, 0.001953125
        %v1664 = vsub.f32 %v1631, %v1663
        %v1665 = vsel %vm1652, %v1664, 0.0
        %v1666 = vmul.f32 %v1665, %v1665
        %v1667 = vsel %vm520, %v1666, 0.0
        %1668 = vadd.xlane.f32.xlu0 %v1667
        %v1669 = vpop.xlane.xlu0 %1668
        %v1670 = vrot.slane %v1669, 4
        %v1671 = vadd.f32 %v1669, %v1670
        %v1672 = vrot.slane %v1671, 2
        %v1673 = vadd.f32 %v1671, %v1672
        %v1674 = vrot.slane %v1673, 1
        %v1675 = vadd.f32 %v1673, %v1674
        %v1676 = vmul.f32 %v1675, 0.001953125
        %v1677 = vadd.f32 %v1676, 1e-05
        %v1678 = vrsqrt.pop %v1677
        %v1679 = vmul.f32 %v414, %v1678
        %1681 = vset.pattern.permute.xlu0 5
        %1682 = vperm.xlu0 %1681, %v1679
        %v1683 = vpop.permute.xlu0 %1682
        %v1685 = vmul.f32 %v1631, %v1683
        %v1686 = vmul.f32 %v1663, %v1679
        %1688 = vrot.lane.b32.xlu0 %v1686, 1
        %v1689 = vpop.permute.xlu0 %1688
        %v1691 = vsub.f32 %v414, %v1689
        %1693 = vset.pattern.permute.xlu0 6
        %1694 = vperm.xlu0 %1693, %v1691
        %v1695 = vpop.permute.xlu0 %1694
        %v1697 = vadd.f32 %v1685, %v1695
        %v1698 = vxor.u32 %v1697, 2147483648
        %v1699 = vmul.f32 %v1698, 1.442695
        %v1700 = vpow.pop %v1699
        %v1701 = vadd.f32 %v1700, 1.0
        %v1702 = vrcp.pop %v1701
        %v1703 = vmul.f32 1.0, %v1702
        %v1704 = vmul.f32 %v1697, %v1703
        %v1705 = vld [vmem:[%s5] sm:$0xff]
        %v1706 = vld [vmem:[%s5 + $0x8] sm:$0xff]
        %v1707 = vld [vmem:[%s5 + $0x10] sm:$0xff]
        %v1708 = vld [vmem:[%s5 + $0x18] sm:$0xff]
        %v1709 = vld [vmem:[%s5 + $0x20] sm:$0xff]
        %v1710 = vld [vmem:[%s5 + $0x28] sm:$0xff]
        %v1711 = vld [vmem:[%s5 + $0x30] sm:$0xff]
        %v1712 = vld [vmem:[%s5 + $0x38] sm:$0xff]
        %v1713 = vld [vmem:[%s5 + $0x40] sm:$0xff]
        %v1715 = vsel %vm520, %v1704, 0
        %1717 = vmatprep.subr.mxu0 0.0
        %1718 = vmatpush1.msra.mxu0 0.0
        %1719 = vmatprep.subr.mxu0 0.0
        %1720 = vmatpush1.msra.mxu0 0.0
        %1721 = vmatprep.subr.mxu0 0.0
        %1722 = vmatpush1.msra.mxu0 0.0
        %1723 = vmatprep.subr.mxu0 0.0
        %1724 = vmatpush1.msra.mxu0 0.0
        %1725 = vmatprep.subr.mxu0 0.0
        %1726 = vmatpush1.msra.mxu0 0.0
        %1727 = vmatprep.subr.mxu0 0.0
        %1728 = vmatpush1.msra.mxu0 0.0
        %1729 = vmatprep.subr.mxu0 0.0
        %1730 = vmatpush1.msra.mxu0 0.0
        %1731 = vmatprep.subr.mxu0 0.0
        %1732 = vmatpush1.msra.mxu0 %v1713
        %1733 = vmatprep.subr.mxu0 0.0
        %1734 = vmatpush1.msra.mxu0 %v1712
        %1735 = vmatprep.subr.mxu0 0.0
        %1736 = vmatpush1.msra.mxu0 %v1711
        %1737 = vmatprep.subr.mxu0 0.0
        %1738 = vmatpush1.msra.mxu0 %v1710
        %1739 = vmatprep.subr.mxu0 0.0
        %1740 = vmatpush1.msra.mxu0 %v1709
        %1741 = vmatprep.subr.mxu0 0.0
        %1742 = vmatpush1.msra.mxu0 %v1708
        %1743 = vmatprep.subr.mxu0 0.0
        %1744 = vmatpush1.msra.mxu0 %v1707
        %1745 = vmatprep.subr.mxu0 0.0
        %1746 = vmatpush1.msra.mxu0 %v1706
        %1747 = vmatprep.subr.mxu0 0.0
        %1748 = vmatpush1.msra.mxu0 %v1705
        %1749 = vmatprep.subr.mxu0 0.0
        %1750 = vmatpush2.msra.mxu0 0.0
        %1751 = vmatprep.subr.mxu0 0.0
        %1752 = vmatpush2.msra.mxu0 0.0
        %1753 = vmatprep.subr.mxu0 0.0
        %1754 = vmatpush2.msra.mxu0 0.0
        %1755 = vmatprep.subr.mxu0 0.0
        %1756 = vmatpush2.msra.mxu0 0.0
        %1757 = vmatprep.subr.mxu0 0.0
        %1758 = vmatpush2.msra.mxu0 0.0
        %1759 = vmatprep.subr.mxu0 0.0
        %1760 = vmatpush2.msra.mxu0 0.0
        %1761 = vmatprep.subr.mxu0 0.0
        %1762 = vmatpush2.msra.mxu0 0.0
        %1763 = vmatprep.subr.mxu0 0.0
        %1764 = vmatpush2.msra.mxu0 0.0
        %1765 = vmatprep.subr.mxu0 0.0
        %1766 = vmatpush2.msra.mxu0 0.0
        %1767 = vmatprep.subr.mxu0 0.0
        %1768 = vmatpush2.msra.mxu0 0.0
        %1769 = vmatprep.subr.mxu0 0.0
        %1770 = vmatpush2.msra.mxu0 0.0
        %1771 = vmatprep.subr.mxu0 0.0
        %1772 = vmatpush2.msra.mxu0 0.0
        %1773 = vmatprep.subr.mxu0 0.0
        %1774 = vmatpush2.msra.mxu0 0.0
        %1775 = vmatprep.subr.mxu0 0.0
        %1776 = vmatpush2.msra.mxu0 0.0
        %1777 = vmatprep.subr.mxu0 0.0
        %1778 = vmatpush2.msra.mxu0 0.0
        %1779 = vmatprep.subr.mxu0 0.0
        %1780 = vmatpush2.msra.mxu0 0.0
        %1781 = vmatprep.mubr.f32.mxu0 0.0
        %1782 = vmatmul.mubr.f32.gmra.mxu0 %v1715
        %v1783 = vpop.f32.mrf.mxu0
        %v1784 = vadd.f32 0.0, %v1783
        %v1785 = vpop.f32.mrf.mxu0
        %1786 = vdwg.mxu0
        %v1787 = vld [vmem:[%s7] sm:$0xff]
        %v1788 = vld [vmem:[%s7 + $0x8] sm:$0xff]
        %1790 = vrot.lane.b32.xlu0 %v1784, 127
        %v1791 = vpop.permute.xlu0 %1790
        %1793 = vrot.lane.b32.xlu0 %v1784, 126
        %v1794 = vpop.permute.xlu0 %1793
        %1796 = vrot.lane.b32.xlu0 %v1784, 118
        %v1797 = vpop.permute.xlu0 %1796
        %1799 = vrot.lane.b32.xlu0 %v1784, 117
        %v1800 = vpop.permute.xlu0 %1799
        %1802 = vrot.lane.b32.xlu0 %v1784, 116
        %v1803 = vpop.permute.xlu0 %1802
        %1805 = vrot.lane.b32.xlu0 %v1784, 108
        %v1806 = vpop.permute.xlu0 %1805
        %1808 = vrot.lane.b32.xlu0 %v1784, 107
        %v1809 = vpop.permute.xlu0 %1808
        %1811 = vrot.lane.b32.xlu0 %v1784, 106
        %v1812 = vpop.permute.xlu0 %1811
        %v1814 = vld [vmem:[%s6] sm:$0xff]
        %v1815 = vld [vmem:[%s6 + $0x8] sm:$0xff]
        %1817 = vset.pattern.permute.xlu0 0
        %1818 = vperm.xlu0 %1817, %v1787
        %v1819 = vpop.permute.xlu0 %1818
        %1822 = vset.pattern.permute.xlu0 0
        %1823 = vperm.xlu0 %1822, %v1788
        %v1824 = vpop.permute.xlu0 %1823
        %v1827 = vsel %vm520, %v1814, 0
        %v1830 = vsel %vm520, %v1815, 0
        %1832 = vmatprep.subr.mxu0 0.0
        %1833 = vmatpush1.msra.mxu0 0.0
        %1834 = vmatprep.subr.mxu0 0.0
        %1835 = vmatpush1.msra.mxu0 0.0
        %1836 = vmatprep.subr.mxu0 0.0
        %1837 = vmatpush1.msra.mxu0 0.0
        %1838 = vmatprep.subr.mxu0 0.0
        %1839 = vmatpush1.msra.mxu0 0.0
        %1840 = vmatprep.subr.mxu0 0.0
        %1841 = vmatpush1.msra.mxu0 0.0
        %1842 = vmatprep.subr.mxu0 0.0
        %1843 = vmatpush1.msra.mxu0 0.0
        %1844 = vmatprep.subr.mxu0 0.0
        %1845 = vmatpush1.msra.mxu0 0.0
        %1846 = vmatprep.subr.mxu0 0.0
        %1847 = vmatpush1.msra.mxu0 %v1812
        %1848 = vmatprep.subr.mxu0 0.0
        %1849 = vmatpush1.msra.mxu0 %v1809
        %1850 = vmatprep.subr.mxu0 0.0
        %1851 = vmatpush1.msra.mxu0 %v1806
        %1852 = vmatprep.subr.mxu0 0.0
        %1853 = vmatpush1.msra.mxu0 %v1803
        %1854 = vmatprep.subr.mxu0 0.0
        %1855 = vmatpush1.msra.mxu0 %v1800
        %1856 = vmatprep.subr.mxu0 0.0
        %1857 = vmatpush1.msra.mxu0 %v1797
        %1858 = vmatprep.subr.mxu0 0.0
        %1859 = vmatpush1.msra.mxu0 %v1794
        %1860 = vmatprep.subr.mxu0 0.0
        %1861 = vmatpush1.msra.mxu0 %v1791
        %1862 = vmatprep.subr.mxu0 0.0
        %1863 = vmatpush1.msra.mxu0 %v1784
        %1864 = vmatprep.subr.mxu0 0.0
        %1865 = vmatpush2.msra.mxu0 0.0
        %1866 = vmatprep.subr.mxu0 0.0
        %1867 = vmatpush2.msra.mxu0 0.0
        %1868 = vmatprep.subr.mxu0 0.0
        %1869 = vmatpush2.msra.mxu0 0.0
        %1870 = vmatprep.subr.mxu0 0.0
        %1871 = vmatpush2.msra.mxu0 0.0
        %1872 = vmatprep.subr.mxu0 0.0
        %1873 = vmatpush2.msra.mxu0 0.0
        %1874 = vmatprep.subr.mxu0 0.0
        %1875 = vmatpush2.msra.mxu0 0.0
        %1876 = vmatprep.subr.mxu0 0.0
        %1877 = vmatpush2.msra.mxu0 0.0
        %1878 = vmatprep.subr.mxu0 0.0
        %1879 = vmatpush2.msra.mxu0 0.0
        %1880 = vmatprep.subr.mxu0 0.0
        %1881 = vmatpush2.msra.mxu0 0.0
        %1882 = vmatprep.subr.mxu0 0.0
        %1883 = vmatpush2.msra.mxu0 0.0
        %1884 = vmatprep.subr.mxu0 0.0
        %1885 = vmatpush2.msra.mxu0 0.0
        %1886 = vmatprep.subr.mxu0 0.0
        %1887 = vmatpush2.msra.mxu0 0.0
        %1888 = vmatprep.subr.mxu0 0.0
        %1889 = vmatpush2.msra.mxu0 0.0
        %1890 = vmatprep.subr.mxu0 0.0
        %1891 = vmatpush2.msra.mxu0 0.0
        %1892 = vmatprep.subr.mxu0 0.0
        %1893 = vmatpush2.msra.mxu0 0.0
        %1894 = vmatprep.subr.mxu0 0.0
        %1895 = vmatpush2.msra.mxu0 0.0
        %1896 = vmatprep.mubr.f32.mxu0 0.0
        %1897 = vmatmul.mubr.f32.gmra.mxu0 %v1827
        %v1898 = vpop.f32.mrf.mxu0
        %v1899 = vadd.f32 %v1819, %v1898
        %v1900 = vpop.f32.mrf.mxu0
        %1901 = vmatprep.mubr.f32.mxu0 0.0
        %1902 = vmatmul.mubr.f32.gmra.mxu0 %v1830
        %v1903 = vpop.f32.mrf.mxu0
        %v1904 = vadd.f32 %v1824, %v1903
        %v1905 = vpop.f32.mrf.mxu0
        %1906 = vdwg.mxu0
        %vm1907 = vcmp.lt.s32.totalorder %v666, 0
        %v1908 = vsub.s32 0, %v666
        %v1909 = vsel %vm1907, %v1908, %v666
        %v1910 = vmul.u32.u64.compose %v1909, 3435973837
        %v1911 = vextract.low.u32 %v1910
        %v1912 = vextract.high.u32 %v1910
        %v1913 = vshrl.u32 %v1912, 3
        %v1914 = vmul.u32 %v1913, 10
        %v1915 = vsub.s32 %v1909, %v1914
        %v1916 = vsub.s32 0, %v1915
        %v1917 = vsel %vm1907, %v1916, %v1915
        %vm1918 = vcmp.ne.s32.totalorder %v1917, 0
        %vm1919 = vcmp.lt.s32.totalorder %v1917, 0
        %vm1920 = vmand %vm1919, %vm1918
        %v1921 = vadd.s32 %v1917, 10
        %v1922 = vsel %vm1920, %v1921, %v1917
        %vm1923 = vcmp.lt.s32.totalorder %v1922, 8
        %v1924 = vsel %vm1923, 1, 0
        %vm1925 = vcmp.eq.s32.totalorder %v1924, 1
        %v1926 = vsel %vm1925, %v1899, 0.0
        %v1927 = vsel %vm1925, %v1904, 0.0
        %vm1928 = vcmask 654336
        %v1929 = vsel %vm1928, %v1926, 0.0
        %1930 = vadd.xlane.f32.xlu0 %v1929
        %v1931 = vpop.xlane.xlu0 %1930
        %v1932 = vsel %vm1928, %v1927, 0.0
        %1933 = vadd.xlane.f32.xlu0 %v1932
        %v1934 = vpop.xlane.xlu0 %1933
        %v1935 = vadd.f32 %v1931, %v1934
        %v1936 = vrot.slane %v1935, 4
        %v1937 = vadd.f32 %v1935, %v1936
        %v1938 = vrot.slane %v1937, 2
        %v1939 = vadd.f32 %v1937, %v1938
        %v1940 = vrot.slane %v1939, 1
        %v1941 = vadd.f32 %v1939, %v1940
        %v1942 = vmul.f32 %v1941, 0.0009765625
        %v1943 = vsub.f32 %v1899, %v1942
        %v1944 = vsub.f32 %v1904, %v1942
        %v1945 = vsel %vm1925, %v1943, 0.0
        %v1946 = vsel %vm1925, %v1944, 0.0
        %v1947 = vmul.f32 %v1945, %v1945
        %v1948 = vmul.f32 %v1946, %v1946
        %v1949 = vsel %vm1928, %v1947, 0.0
        %1950 = vadd.xlane.f32.xlu0 %v1949
        %v1951 = vpop.xlane.xlu0 %1950
        %v1952 = vsel %vm1928, %v1948, 0.0
        %1953 = vadd.xlane.f32.xlu0 %v1952
        %v1954 = vpop.xlane.xlu0 %1953
        %v1955 = vadd.f32 %v1951, %v1954
        %v1956 = vrot.slane %v1955, 4
        %v1957 = vadd.f32 %v1955, %v1956
        %v1958 = vrot.slane %v1957, 2
        %v1959 = vadd.f32 %v1957, %v1958
        %v1960 = vrot.slane %v1959, 1
        %v1961 = vadd.f32 %v1959, %v1960
        %v1962 = vmul.f32 %v1961, 0.0009765625
        %v1963 = vadd.f32 %v1962, 1e-05
        %v1964 = vrsqrt.pop %v1963
        %v1965 = vmul.f32 %v1787, %v1964
        %v1966 = vmul.f32 %v1788, %v1964
        %1968 = vset.pattern.permute.xlu0 1
        %1969 = vperm.xlu0 %1968, %v1965
        %v1970 = vpop.permute.xlu0 %1969
        %1973 = vset.pattern.permute.xlu0 1
        %1974 = vperm.xlu0 %1973, %v1966
        %v1975 = vpop.permute.xlu0 %1974
        %v1977 = vmul.f32 %v1899, %v1970
        %v1978 = vmul.f32 %v1904, %v1975
        %v1979 = vmul.f32 %v1942, %v1965
        %v1980 = vmul.f32 %v1942, %v1966
        %1983 = vrot.lane.b32.xlu0 %v1979, 1
        %v1984 = vpop.permute.xlu0 %1983
        %1985 = vrot.lane.b32.xlu0 %v1980, 1
        %v1986 = vpop.permute.xlu0 %1985
        %v1989 = vsub.f32 %v1787, %v1984
        %v1990 = vsub.f32 %v1788, %v1986
        %1992 = vset.pattern.permute.xlu0 2
        %1993 = vperm.xlu0 %1992, %v1989
        %v1994 = vpop.permute.xlu0 %1993
        %1997 = vset.pattern.permute.xlu0 2
        %1998 = vperm.xlu0 %1997, %v1990
        %v1999 = vpop.permute.xlu0 %1998
        %v2001 = vadd.f32 %v1977, %v1994
        %v2002 = vadd.f32 %v1978, %v1999
        %v2003 = vxor.u32 %v2001, 2147483648
        %v2004 = vxor.u32 %v2002, 2147483648
        %v2005 = vmul.f32 %v2003, 1.442695
        %v2006 = vpow.pop %v2005
        %v2007 = vmul.f32 %v2004, 1.442695
        %v2008 = vpow.pop %v2007
        %v2009 = vadd.f32 %v2006, 1.0
        %v2010 = vadd.f32 %v2008, 1.0
        %v2011 = vrcp.pop %v2009
        %v2012 = vmul.f32 1.0, %v2011
        %v2013 = vrcp.pop %v2010
        %v2014 = vmul.f32 1.0, %v2013
        %v2015 = vmul.f32 %v2001, %v2012
        %v2016 = vmul.f32 %v2002, %v2014
        %v2017 = vld [vmem:[%s9] sm:$0xff]
        %v2018 = vld [vmem:[%s9 + $0x8] sm:$0xff]
        %v2019 = vld [vmem:[%s9 + $0x10] sm:$0xff]
        %v2020 = vld [vmem:[%s9 + $0x18] sm:$0xff]
        %v2021 = vld [vmem:[%s9 + $0x20] sm:$0xff]
        %v2022 = vld [vmem:[%s9 + $0x28] sm:$0xff]
        %v2023 = vld [vmem:[%s9 + $0x30] sm:$0xff]
        %v2024 = vld [vmem:[%s9 + $0x38] sm:$0xff]
        %v2025 = vld [vmem:[%s9 + $0x40] sm:$0xff]
        %v2026 = vld [vmem:[%s9 + $0x48] sm:$0xff]
        %v2028 = vsel %vm1928, %v2015, 0
        %v2031 = vsel %vm1928, %v2016, 0
        %2033 = vmatprep.subr.mxu0 0.0
        %2034 = vmatpush1.msra.mxu0 0.0
        %2035 = vmatprep.subr.mxu0 0.0
        %2036 = vmatpush1.msra.mxu0 0.0
        %2037 = vmatprep.subr.mxu0 0.0
        %2038 = vmatpush1.msra.mxu0 0.0
        %2039 = vmatprep.subr.mxu0 0.0
        %2040 = vmatpush1.msra.mxu0 0.0
        %2041 = vmatprep.subr.mxu0 0.0
        %2042 = vmatpush1.msra.mxu0 0.0
        %2043 = vmatprep.subr.mxu0 0.0
        %2044 = vmatpush1.msra.mxu0 0.0
        %2045 = vmatprep.subr.mxu0 0.0
        %2046 = vmatpush1.msra.mxu0 %v2026
        %2047 = vmatprep.subr.mxu0 0.0
        %2048 = vmatpush1.msra.mxu0 %v2025
        %2049 = vmatprep.subr.mxu0 0.0
        %2050 = vmatpush1.msra.mxu0 %v2024
        %2051 = vmatprep.subr.mxu0 0.0
        %2052 = vmatpush1.msra.mxu0 %v2023
        %2053 = vmatprep.subr.mxu0 0.0
        %2054 = vmatpush1.msra.mxu0 %v2022
        %2055 = vmatprep.subr.mxu0 0.0
        %2056 = vmatpush1.msra.mxu0 %v2021
        %2057 = vmatprep.subr.mxu0 0.0
        %2058 = vmatpush1.msra.mxu0 %v2020
        %2059 = vmatprep.subr.mxu0 0.0
        %2060 = vmatpush1.msra.mxu0 %v2019
        %2061 = vmatprep.subr.mxu0 0.0
        %2062 = vmatpush1.msra.mxu0 %v2018
        %2063 = vmatprep.subr.mxu0 0.0
        %2064 = vmatpush1.msra.mxu0 %v2017
        %2065 = vmatprep.subr.mxu0 0.0
        %2066 = vmatpush2.msra.mxu0 0.0
        %2067 = vmatprep.subr.mxu0 0.0
        %2068 = vmatpush2.msra.mxu0 0.0
        %2069 = vmatprep.subr.mxu0 0.0
        %2070 = vmatpush2.msra.mxu0 0.0
        %2071 = vmatprep.subr.mxu0 0.0
        %2072 = vmatpush2.msra.mxu0 0.0
        %2073 = vmatprep.subr.mxu0 0.0
        %2074 = vmatpush2.msra.mxu0 0.0
        %2075 = vmatprep.subr.mxu0 0.0
        %2076 = vmatpush2.msra.mxu0 0.0
        %2077 = vmatprep.subr.mxu0 0.0
        %2078 = vmatpush2.msra.mxu0 0.0
        %2079 = vmatprep.subr.mxu0 0.0
        %2080 = vmatpush2.msra.mxu0 0.0
        %2081 = vmatprep.subr.mxu0 0.0
        %2082 = vmatpush2.msra.mxu0 0.0
        %2083 = vmatprep.subr.mxu0 0.0
        %2084 = vmatpush2.msra.mxu0 0.0
        %2085 = vmatprep.subr.mxu0 0.0
        %2086 = vmatpush2.msra.mxu0 0.0
        %2087 = vmatprep.subr.mxu0 0.0
        %2088 = vmatpush2.msra.mxu0 0.0
        %2089 = vmatprep.subr.mxu0 0.0
        %2090 = vmatpush2.msra.mxu0 0.0
        %2091 = vmatprep.subr.mxu0 0.0
        %2092 = vmatpush2.msra.mxu0 0.0
        %2093 = vmatprep.subr.mxu0 0.0
        %2094 = vmatpush2.msra.mxu0 0.0
        %2095 = vmatprep.subr.mxu0 0.0
        %2096 = vmatpush2.msra.mxu0 0.0
        %2097 = vmatprep.mubr.f32.mxu0 0.0
        %2098 = vmatmul.mubr.f32.gmra.mxu0 %v2028
        %v2099 = vpop.f32.mrf.mxu0
        %v2100 = vadd.f32 0.0, %v2099
        %v2101 = vpop.f32.mrf.mxu0
        %2102 = vmatprep.mubr.f32.mxu0 0.0
        %2103 = vmatmul.mubr.f32.gmra.mxu0 %v2031
        %v2104 = vpop.f32.mrf.mxu0
        %v2105 = vadd.f32 0.0, %v2104
        %v2106 = vpop.f32.mrf.mxu0
        %2107 = vdwg.mxu0
        %s2108 = scalar_lea.vmem %s9, 80
        %v2109 = vld [vmem:[%s2108] sm:$0xff]
        %v2110 = vld [vmem:[%s2108 + $0x8] sm:$0xff]
        %v2111 = vld [vmem:[%s2108 + $0x10] sm:$0xff]
        %v2112 = vld [vmem:[%s2108 + $0x18] sm:$0xff]
        %v2113 = vld [vmem:[%s2108 + $0x20] sm:$0xff]
        %v2114 = vld [vmem:[%s2108 + $0x28] sm:$0xff]
        %v2115 = vld [vmem:[%s2108 + $0x30] sm:$0xff]
        %v2116 = vld [vmem:[%s2108 + $0x38] sm:$0xff]
        %v2117 = vld [vmem:[%s2108 + $0x40] sm:$0xff]
        %v2118 = vld [vmem:[%s2108 + $0x48] sm:$0xff]
        %2119 = vmatprep.subr.mxu0 0.0
        %2120 = vmatpush1.msra.mxu0 0.0
        %2121 = vmatprep.subr.mxu0 0.0
        %2122 = vmatpush1.msra.mxu0 0.0
        %2123 = vmatprep.subr.mxu0 0.0
        %2124 = vmatpush1.msra.mxu0 0.0
        %2125 = vmatprep.subr.mxu0 0.0
        %2126 = vmatpush1.msra.mxu0 0.0
        %2127 = vmatprep.subr.mxu0 0.0
        %2128 = vmatpush1.msra.mxu0 0.0
        %2129 = vmatprep.subr.mxu0 0.0
        %2130 = vmatpush1.msra.mxu0 0.0
        %2131 = vmatprep.subr.mxu0 0.0
        %2132 = vmatpush1.msra.mxu0 %v2118
        %2133 = vmatprep.subr.mxu0 0.0
        %2134 = vmatpush1.msra.mxu0 %v2117
        %2135 = vmatprep.subr.mxu0 0.0
        %2136 = vmatpush1.msra.mxu0 %v2116
        %2137 = vmatprep.subr.mxu0 0.0
        %2138 = vmatpush1.msra.mxu0 %v2115
        %2139 = vmatprep.subr.mxu0 0.0
        %2140 = vmatpush1.msra.mxu0 %v2114
        %2141 = vmatprep.subr.mxu0 0.0
        %2142 = vmatpush1.msra.mxu0 %v2113
        %2143 = vmatprep.subr.mxu0 0.0
        %2144 = vmatpush1.msra.mxu0 %v2112
        %2145 = vmatprep.subr.mxu0 0.0
        %2146 = vmatpush1.msra.mxu0 %v2111
        %2147 = vmatprep.subr.mxu0 0.0
        %2148 = vmatpush1.msra.mxu0 %v2110
        %2149 = vmatprep.subr.mxu0 0.0
        %2150 = vmatpush1.msra.mxu0 %v2109
        %2151 = vmatprep.subr.mxu0 0.0
        %2152 = vmatpush2.msra.mxu0 0.0
        %2153 = vmatprep.subr.mxu0 0.0
        %2154 = vmatpush2.msra.mxu0 0.0
        %2155 = vmatprep.subr.mxu0 0.0
        %2156 = vmatpush2.msra.mxu0 0.0
        %2157 = vmatprep.subr.mxu0 0.0
        %2158 = vmatpush2.msra.mxu0 0.0
        %2159 = vmatprep.subr.mxu0 0.0
        %2160 = vmatpush2.msra.mxu0 0.0
        %2161 = vmatprep.subr.mxu0 0.0
        %2162 = vmatpush2.msra.mxu0 0.0
        %2163 = vmatprep.subr.mxu0 0.0
        %2164 = vmatpush2.msra.mxu0 0.0
        %2165 = vmatprep.subr.mxu0 0.0
        %2166 = vmatpush2.msra.mxu0 0.0
        %2167 = vmatprep.subr.mxu0 0.0
        %2168 = vmatpush2.msra.mxu0 0.0
        %2169 = vmatprep.subr.mxu0 0.0
        %2170 = vmatpush2.msra.mxu0 0.0
        %2171 = vmatprep.subr.mxu0 0.0
        %2172 = vmatpush2.msra.mxu0 0.0
        %2173 = vmatprep.subr.mxu0 0.0
        %2174 = vmatpush2.msra.mxu0 0.0
        %2175 = vmatprep.subr.mxu0 0.0
        %2176 = vmatpush2.msra.mxu0 0.0
        %2177 = vmatprep.subr.mxu0 0.0
        %2178 = vmatpush2.msra.mxu0 0.0
        %2179 = vmatprep.subr.mxu0 0.0
        %2180 = vmatpush2.msra.mxu0 0.0
        %2181 = vmatprep.subr.mxu0 0.0
        %2182 = vmatpush2.msra.mxu0 0.0
        %2183 = vmatprep.mubr.f32.mxu0 0.0
        %2184 = vmatmul.mubr.f32.gmra.mxu0 %v2028
        %v2185 = vpop.f32.mrf.mxu0
        %v2186 = vadd.f32 0.0, %v2185
        %v2187 = vpop.f32.mrf.mxu0
        %2188 = vmatprep.mubr.f32.mxu0 0.0
        %2189 = vmatmul.mubr.f32.gmra.mxu0 %v2031
        %v2190 = vpop.f32.mrf.mxu0
        %v2191 = vadd.f32 0.0, %v2190
        %v2192 = vpop.f32.mrf.mxu0
        %2193 = vdwg.mxu0
        %s2194 = scalar_lea.vmem %s9, 160
        %v2195 = vld [vmem:[%s2194] sm:$0xff]
        %v2196 = vld [vmem:[%s2194 + $0x8] sm:$0xff]
        %v2197 = vld [vmem:[%s2194 + $0x10] sm:$0xff]
        %v2198 = vld [vmem:[%s2194 + $0x18] sm:$0xff]
        %v2199 = vld [vmem:[%s2194 + $0x20] sm:$0xff]
        %v2200 = vld [vmem:[%s2194 + $0x28] sm:$0xff]
        %v2201 = vld [vmem:[%s2194 + $0x30] sm:$0xff]
        %v2202 = vld [vmem:[%s2194 + $0x38] sm:$0xff]
        %v2203 = vld [vmem:[%s2194 + $0x40] sm:$0xff]
        %v2204 = vld [vmem:[%s2194 + $0x48] sm:$0xff]
        %2205 = vmatprep.subr.mxu0 0.0
        %2206 = vmatpush1.msra.mxu0 0.0
        %2207 = vmatprep.subr.mxu0 0.0
        %2208 = vmatpush1.msra.mxu0 0.0
        %2209 = vmatprep.subr.mxu0 0.0
        %2210 = vmatpush1.msra.mxu0 0.0
        %2211 = vmatprep.subr.mxu0 0.0
        %2212 = vmatpush1.msra.mxu0 0.0
        %2213 = vmatprep.subr.mxu0 0.0
        %2214 = vmatpush1.msra.mxu0 0.0
        %2215 = vmatprep.subr.mxu0 0.0
        %2216 = vmatpush1.msra.mxu0 0.0
        %2217 = vmatprep.subr.mxu0 0.0
        %2218 = vmatpush1.msra.mxu0 %v2204
        %2219 = vmatprep.subr.mxu0 0.0
        %2220 = vmatpush1.msra.mxu0 %v2203
        %2221 = vmatprep.subr.mxu0 0.0
        %2222 = vmatpush1.msra.mxu0 %v2202
        %2223 = vmatprep.subr.mxu0 0.0
        %2224 = vmatpush1.msra.mxu0 %v2201
        %2225 = vmatprep.subr.mxu0 0.0
        %2226 = vmatpush1.msra.mxu0 %v2200
        %2227 = vmatprep.subr.mxu0 0.0
        %2228 = vmatpush1.msra.mxu0 %v2199
        %2229 = vmatprep.subr.mxu0 0.0
        %2230 = vmatpush1.msra.mxu0 %v2198
        %2231 = vmatprep.subr.mxu0 0.0
        %2232 = vmatpush1.msra.mxu0 %v2197
        %2233 = vmatprep.subr.mxu0 0.0
        %2234 = vmatpush1.msra.mxu0 %v2196
        %2235 = vmatprep.subr.mxu0 0.0
        %2236 = vmatpush1.msra.mxu0 %v2195
        %2237 = vmatprep.subr.mxu0 0.0
        %2238 = vmatpush2.msra.mxu0 0.0
        %2239 = vmatprep.subr.mxu0 0.0
        %2240 = vmatpush2.msra.mxu0 0.0
        %2241 = vmatprep.subr.mxu0 0.0
        %2242 = vmatpush2.msra.mxu0 0.0
        %2243 = vmatprep.subr.mxu0 0.0
        %2244 = vmatpush2.msra.mxu0 0.0
        %2245 = vmatprep.subr.mxu0 0.0
        %2246 = vmatpush2.msra.mxu0 0.0
        %2247 = vmatprep.subr.mxu0 0.0
        %2248 = vmatpush2.msra.mxu0 0.0
        %2249 = vmatprep.subr.mxu0 0.0
        %2250 = vmatpush2.msra.mxu0 0.0
        %2251 = vmatprep.subr.mxu0 0.0
        %2252 = vmatpush2.msra.mxu0 0.0
        %2253 = vmatprep.subr.mxu0 0.0
        %2254 = vmatpush2.msra.mxu0 0.0
        %2255 = vmatprep.subr.mxu0 0.0
        %2256 = vmatpush2.msra.mxu0 0.0
        %2257 = vmatprep.subr.mxu0 0.0
        %2258 = vmatpush2.msra.mxu0 0.0
        %2259 = vmatprep.subr.mxu0 0.0
        %2260 = vmatpush2.msra.mxu0 0.0
        %2261 = vmatprep.subr.mxu0 0.0
        %2262 = vmatpush2.msra.mxu0 0.0
        %2263 = vmatprep.subr.mxu0 0.0
        %2264 = vmatpush2.msra.mxu0 0.0
        %2265 = vmatprep.subr.mxu0 0.0
        %2266 = vmatpush2.msra.mxu0 0.0
        %2267 = vmatprep.subr.mxu0 0.0
        %2268 = vmatpush2.msra.mxu0 0.0
        %2269 = vmatprep.mubr.f32.mxu0 0.0
        %2270 = vmatmul.mubr.f32.gmra.mxu0 %v2028
        %v2271 = vpop.f32.mrf.mxu0
        %v2272 = vadd.f32 0.0, %v2271
        %v2273 = vpop.f32.mrf.mxu0
        %2274 = vmatprep.mubr.f32.mxu0 0.0
        %2275 = vmatmul.mubr.f32.gmra.mxu0 %v2031
        %v2276 = vpop.f32.mrf.mxu0
        %v2277 = vadd.f32 0.0, %v2276
        %v2278 = vpop.f32.mrf.mxu0
        %2279 = vdwg.mxu0
        %s2280 = scalar_lea.vmem %s9, 240
        %v2281 = vld [vmem:[%s2280] sm:$0xff]
        %v2282 = vld [vmem:[%s2280 + $0x8] sm:$0xff]
        %v2283 = vld [vmem:[%s2280 + $0x10] sm:$0xff]
        %v2284 = vld [vmem:[%s2280 + $0x18] sm:$0xff]
        %v2285 = vld [vmem:[%s2280 + $0x20] sm:$0xff]
        %v2286 = vld [vmem:[%s2280 + $0x28] sm:$0xff]
        %v2287 = vld [vmem:[%s2280 + $0x30] sm:$0xff]
        %v2288 = vld [vmem:[%s2280 + $0x38] sm:$0xff]
        %v2289 = vld [vmem:[%s2280 + $0x40] sm:$0xff]
        %v2290 = vld [vmem:[%s2280 + $0x48] sm:$0xff]
        %2291 = vmatprep.subr.mxu0 0.0
        %2292 = vmatpush1.msra.mxu0 0.0
        %2293 = vmatprep.subr.mxu0 0.0
        %2294 = vmatpush1.msra.mxu0 0.0
        %2295 = vmatprep.subr.mxu0 0.0
        %2296 = vmatpush1.msra.mxu0 0.0
        %2297 = vmatprep.subr.mxu0 0.0
        %2298 = vmatpush1.msra.mxu0 0.0
        %2299 = vmatprep.subr.mxu0 0.0
        %2300 = vmatpush1.msra.mxu0 0.0
        %2301 = vmatprep.subr.mxu0 0.0
        %2302 = vmatpush1.msra.mxu0 0.0
        %2303 = vmatprep.subr.mxu0 0.0
        %2304 = vmatpush1.msra.mxu0 %v2290
        %2305 = vmatprep.subr.mxu0 0.0
        %2306 = vmatpush1.msra.mxu0 %v2289
        %2307 = vmatprep.subr.mxu0 0.0
        %2308 = vmatpush1.msra.mxu0 %v2288
        %2309 = vmatprep.subr.mxu0 0.0
        %2310 = vmatpush1.msra.mxu0 %v2287
        %2311 = vmatprep.subr.mxu0 0.0
        %2312 = vmatpush1.msra.mxu0 %v2286
        %2313 = vmatprep.subr.mxu0 0.0
        %2314 = vmatpush1.msra.mxu0 %v2285
        %2315 = vmatprep.subr.mxu0 0.0
        %2316 = vmatpush1.msra.mxu0 %v2284
        %2317 = vmatprep.subr.mxu0 0.0
        %2318 = vmatpush1.msra.mxu0 %v2283
        %2319 = vmatprep.subr.mxu0 0.0
        %2320 = vmatpush1.msra.mxu0 %v2282
        %2321 = vmatprep.subr.mxu0 0.0
        %2322 = vmatpush1.msra.mxu0 %v2281
        %2323 = vmatprep.subr.mxu0 0.0
        %2324 = vmatpush2.msra.mxu0 0.0
        %2325 = vmatprep.subr.mxu0 0.0
        %2326 = vmatpush2.msra.mxu0 0.0
        %2327 = vmatprep.subr.mxu0 0.0
        %2328 = vmatpush2.msra.mxu0 0.0
        %2329 = vmatprep.subr.mxu0 0.0
        %2330 = vmatpush2.msra.mxu0 0.0
        %2331 = vmatprep.subr.mxu0 0.0
        %2332 = vmatpush2.msra.mxu0 0.0
        %2333 = vmatprep.subr.mxu0 0.0
        %2334 = vmatpush2.msra.mxu0 0.0
        %2335 = vmatprep.subr.mxu0 0.0
        %2336 = vmatpush2.msra.mxu0 0.0
        %2337 = vmatprep.subr.mxu0 0.0
        %2338 = vmatpush2.msra.mxu0 0.0
        %2339 = vmatprep.subr.mxu0 0.0
        %2340 = vmatpush2.msra.mxu0 0.0
        %2341 = vmatprep.subr.mxu0 0.0
        %2342 = vmatpush2.msra.mxu0 0.0
        %2343 = vmatprep.subr.mxu0 0.0
        %2344 = vmatpush2.msra.mxu0 0.0
        %2345 = vmatprep.subr.mxu0 0.0
        %2346 = vmatpush2.msra.mxu0 0.0
        %2347 = vmatprep.subr.mxu0 0.0
        %2348 = vmatpush2.msra.mxu0 0.0
        %2349 = vmatprep.subr.mxu0 0.0
        %2350 = vmatpush2.msra.mxu0 0.0
        %2351 = vmatprep.subr.mxu0 0.0
        %2352 = vmatpush2.msra.mxu0 0.0
        %2353 = vmatprep.subr.mxu0 0.0
        %2354 = vmatpush2.msra.mxu0 0.0
        %2355 = vmatprep.mubr.f32.mxu0 0.0
        %2356 = vmatmul.mubr.f32.gmra.mxu0 %v2028
        %v2357 = vpop.f32.mrf.mxu0
        %v2358 = vadd.f32 0.0, %v2357
        %v2359 = vpop.f32.mrf.mxu0
        %2360 = vmatprep.mubr.f32.mxu0 0.0
        %2361 = vmatmul.mubr.f32.gmra.mxu0 %v2031
        %v2362 = vpop.f32.mrf.mxu0
        %v2363 = vadd.f32 0.0, %v2362
        %v2364 = vpop.f32.mrf.mxu0
        %2365 = vdwg.mxu0
        %2368 = vrot.lane.b32.xlu0 %v2100, 127
        %v2369 = vpop.permute.xlu0 %2368
        %2370 = vrot.lane.b32.xlu0 %v2105, 127
        %v2371 = vpop.permute.xlu0 %2370
        %2374 = vrot.lane.b32.xlu0 %v2100, 123
        %v2375 = vpop.permute.xlu0 %2374
        %2376 = vrot.lane.b32.xlu0 %v2105, 123
        %v2377 = vpop.permute.xlu0 %2376
        %2380 = vrot.lane.b32.xlu0 %v2100, 122
        %v2381 = vpop.permute.xlu0 %2380
        %2382 = vrot.lane.b32.xlu0 %v2105, 122
        %v2383 = vpop.permute.xlu0 %2382
        %2388 = vrot.lane.b32.xlu0 %v2186, 127
        %v2389 = vpop.permute.xlu0 %2388
        %2390 = vrot.lane.b32.xlu0 %v2191, 127
        %v2391 = vpop.permute.xlu0 %2390
        %2394 = vrot.lane.b32.xlu0 %v2186, 123
        %v2395 = vpop.permute.xlu0 %2394
        %2396 = vrot.lane.b32.xlu0 %v2191, 123
        %v2397 = vpop.permute.xlu0 %2396
        %2400 = vrot.lane.b32.xlu0 %v2186, 122
        %v2401 = vpop.permute.xlu0 %2400
        %2402 = vrot.lane.b32.xlu0 %v2191, 122
        %v2403 = vpop.permute.xlu0 %2402
        %2408 = vrot.lane.b32.xlu0 %v2272, 127
        %v2409 = vpop.permute.xlu0 %2408
        %2410 = vrot.lane.b32.xlu0 %v2277, 127
        %v2411 = vpop.permute.xlu0 %2410
        %2414 = vrot.lane.b32.xlu0 %v2272, 123
        %v2415 = vpop.permute.xlu0 %2414
        %2416 = vrot.lane.b32.xlu0 %v2277, 123
        %v2417 = vpop.permute.xlu0 %2416
        %2420 = vrot.lane.b32.xlu0 %v2272, 122
        %v2421 = vpop.permute.xlu0 %2420
        %2422 = vrot.lane.b32.xlu0 %v2277, 122
        %v2423 = vpop.permute.xlu0 %2422
        %2428 = vrot.lane.b32.xlu0 %v2358, 127
        %v2429 = vpop.permute.xlu0 %2428
        %2430 = vrot.lane.b32.xlu0 %v2363, 127
        %v2431 = vpop.permute.xlu0 %2430
        %2434 = vrot.lane.b32.xlu0 %v2358, 123
        %v2435 = vpop.permute.xlu0 %2434
        %2436 = vrot.lane.b32.xlu0 %v2363, 123
        %v2437 = vpop.permute.xlu0 %2436
        %2440 = vrot.lane.b32.xlu0 %v2358, 122
        %v2441 = vpop.permute.xlu0 %2440
        %2442 = vrot.lane.b32.xlu0 %v2363, 122
        %v2443 = vpop.permute.xlu0 %2442
        %v2446 = vld [vmem:[%s8] sm:$0xff]
        %v2447 = vld [vmem:[%s8 + $0x8] sm:$0xff]
        %v2448 = vld [vmem:[%s8 + $0x10] sm:$0xff]
        %v2449 = vld [vmem:[%s8 + $0x18] sm:$0xff]
        %2450 = vset.pattern.permute.xlu0 4
        %2451 = vperm.xlu0 %2450, %v1787
        %v2452 = vpop.permute.xlu0 %2451
        %2454 = vset.pattern.permute.xlu0 4
        %2455 = vperm.xlu0 %2454, %v1788
        %v2456 = vpop.permute.xlu0 %2455
        %2458 = vmatprep.subr.mxu0 0.0
        %2459 = vmatpush1.msra.mxu0 %v2403
        %2460 = vmatprep.subr.mxu0 0.0
        %2461 = vmatpush1.msra.mxu0 %v2401
        %2462 = vmatprep.subr.mxu0 0.0
        %2463 = vmatpush1.msra.mxu0 %v2397
        %2464 = vmatprep.subr.mxu0 0.0
        %2465 = vmatpush1.msra.mxu0 %v2395
        %2466 = vmatprep.subr.mxu0 0.0
        %2467 = vmatpush1.msra.mxu0 %v2391
        %2468 = vmatprep.subr.mxu0 0.0
        %2469 = vmatpush1.msra.mxu0 %v2389
        %2470 = vmatprep.subr.mxu0 0.0
        %2471 = vmatpush1.msra.mxu0 %v2191
        %2472 = vmatprep.subr.mxu0 0.0
        %2473 = vmatpush1.msra.mxu0 %v2186
        %2474 = vmatprep.subr.mxu0 0.0
        %2475 = vmatpush1.msra.mxu0 %v2383
        %2476 = vmatprep.subr.mxu0 0.0
        %2477 = vmatpush1.msra.mxu0 %v2381
        %2478 = vmatprep.subr.mxu0 0.0
        %2479 = vmatpush1.msra.mxu0 %v2377
        %2480 = vmatprep.subr.mxu0 0.0
        %2481 = vmatpush1.msra.mxu0 %v2375
        %2482 = vmatprep.subr.mxu0 0.0
        %2483 = vmatpush1.msra.mxu0 %v2371
        %2484 = vmatprep.subr.mxu0 0.0
        %2485 = vmatpush1.msra.mxu0 %v2369
        %2486 = vmatprep.subr.mxu0 0.0
        %2487 = vmatpush1.msra.mxu0 %v2105
        %2488 = vmatprep.subr.mxu0 0.0
        %2489 = vmatpush1.msra.mxu0 %v2100
        %2490 = vmatprep.subr.mxu0 0.0
        %2491 = vmatpush2.msra.mxu0 %v2443
        %2492 = vmatprep.subr.mxu0 0.0
        %2493 = vmatpush2.msra.mxu0 %v2441
        %2494 = vmatprep.subr.mxu0 0.0
        %2495 = vmatpush2.msra.mxu0 %v2437
        %2496 = vmatprep.subr.mxu0 0.0
        %2497 = vmatpush2.msra.mxu0 %v2435
        %2498 = vmatprep.subr.mxu0 0.0
        %2499 = vmatpush2.msra.mxu0 %v2431
        %2500 = vmatprep.subr.mxu0 0.0
        %2501 = vmatpush2.msra.mxu0 %v2429
        %2502 = vmatprep.subr.mxu0 0.0
        %2503 = vmatpush2.msra.mxu0 %v2363
        %2504 = vmatprep.subr.mxu0 0.0
        %2505 = vmatpush2.msra.mxu0 %v2358
        %2506 = vmatprep.subr.mxu0 0.0
        %2507 = vmatpush2.msra.mxu0 %v2423
        %2508 = vmatprep.subr.mxu0 0.0
        %2509 = vmatpush2.msra.mxu0 %v2421
        %2510 = vmatprep.subr.mxu0 0.0
        %2511 = vmatpush2.msra.mxu0 %v2417
        %2512 = vmatprep.subr.mxu0 0.0
        %2513 = vmatpush2.msra.mxu0 %v2415
        %2514 = vmatprep.subr.mxu0 0.0
        %2515 = vmatpush2.msra.mxu0 %v2411
        %2516 = vmatprep.subr.mxu0 0.0
        %2517 = vmatpush2.msra.mxu0 %v2409
        %2518 = vmatprep.subr.mxu0 0.0
        %2519 = vmatpush2.msra.mxu0 %v2277
        %2520 = vmatprep.subr.mxu0 0.0
        %2521 = vmatpush2.msra.mxu0 %v2272
        %2522 = vmatprep.mubr.f32.mxu0 %v2447
        %2523 = vmatmul.mubr.f32.gmra.mxu0 %v2446
        %v2524 = vpop.f32.mrf.mxu0
        %v2525 = vadd.f32 %v2452, %v2524
        %v2526 = vpop.f32.mrf.mxu0
        %2527 = vmatprep.mubr.f32.mxu0 %v2449
        %2528 = vmatmul.mubr.f32.gmra.mxu0 %v2448
        %v2529 = vpop.f32.mrf.mxu0
        %v2530 = vadd.f32 %v2456, %v2529
        %v2531 = vpop.f32.mrf.mxu0
        %2532 = vdwg.mxu0
        %vm2533 = vcmp.lt.s32.totalorder %v666, 0
        %v2534 = vsub.s32 0, %v666
        %v2535 = vsel %vm2533, %v2534, %v666
        %v2536 = vmul.u32.u64.compose %v2535, 3435973837
        %v2537 = vextract.low.u32 %v2536
        %v2538 = vextract.high.u32 %v2536
        %v2539 = vshrl.u32 %v2538, 2
        %v2540 = vmul.u32 %v2539, 5
        %v2541 = vsub.s32 %v2535, %v2540
        %v2542 = vsub.s32 0, %v2541
        %v2543 = vsel %vm2533, %v2542, %v2541
        %vm2544 = vcmp.ne.s32.totalorder %v2543, 0
        %vm2545 = vcmp.lt.s32.totalorder %v2543, 0
        %vm2546 = vmand %vm2545, %vm2544
        %v2547 = vadd.s32 %v2543, 5
        %v2548 = vsel %vm2546, %v2547, %v2543
        %vm2549 = vcmp.lt.s32.totalorder %v2548, 4
        %v2550 = vsel %vm2549, 1, 0
        %vm2551 = vcmp.eq.s32.totalorder %v2550, 1
        %v2552 = vsel %vm2551, %v2525, 0.0
        %v2553 = vsel %vm2551, %v2530, 0.0
        %vm2554 = vcmask 162816
        %v2555 = vsel %vm2554, %v2552, 0.0
        %2556 = vadd.xlane.f32.xlu0 %v2555
        %v2557 = vpop.xlane.xlu0 %2556
        %v2558 = vsel %vm2554, %v2553, 0.0
        %2559 = vadd.xlane.f32.xlu0 %v2558
        %v2560 = vpop.xlane.xlu0 %2559
        %v2561 = vadd.f32 %v2557, %v2560
        %v2562 = vrot.slane %v2561, 4
        %v2563 = vadd.f32 %v2561, %v2562
        %v2564 = vrot.slane %v2563, 2
        %v2565 = vadd.f32 %v2563, %v2564
        %v2566 = vrot.slane %v2565, 1
        %v2567 = vadd.f32 %v2565, %v2566
        %v2568 = vmul.f32 %v2567, 0.00390625
        %v2569 = vsub.f32 %v2525, %v2568
        %v2570 = vsub.f32 %v2530, %v2568
        %v2571 = vsel %vm2551, %v2569, 0.0
        %v2572 = vsel %vm2551, %v2570, 0.0
        %v2573 = vmul.f32 %v2571, %v2571
        %v2574 = vmul.f32 %v2572, %v2572
        %v2575 = vsel %vm2554, %v2573, 0.0
        %2576 = vadd.xlane.f32.xlu0 %v2575
        %v2577 = vpop.xlane.xlu0 %2576
        %v2578 = vsel %vm2554, %v2574, 0.0
        %2579 = vadd.xlane.f32.xlu0 %v2578
        %v2580 = vpop.xlane.xlu0 %2579
        %v2581 = vadd.f32 %v2577, %v2580
        %v2582 = vrot.slane %v2581, 4
        %v2583 = vadd.f32 %v2581, %v2582
        %v2584 = vrot.slane %v2583, 2
        %v2585 = vadd.f32 %v2583, %v2584
        %v2586 = vrot.slane %v2585, 1
        %v2587 = vadd.f32 %v2585, %v2586
        %v2588 = vmul.f32 %v2587, 0.00390625
        %v2589 = vadd.f32 %v2588, 1e-05
        %v2590 = vrsqrt.pop %v2589
        %v2591 = vmul.f32 %v1787, %v2590
        %v2592 = vmul.f32 %v1788, %v2590
        %2594 = vset.pattern.permute.xlu0 5
        %2595 = vperm.xlu0 %2594, %v2591
        %v2596 = vpop.permute.xlu0 %2595
        %2599 = vset.pattern.permute.xlu0 5
        %2600 = vperm.xlu0 %2599, %v2592
        %v2601 = vpop.permute.xlu0 %2600
        %v2603 = vmul.f32 %v2525, %v2596
        %v2604 = vmul.f32 %v2530, %v2601
        %v2605 = vmul.f32 %v2568, %v2591
        %v2606 = vmul.f32 %v2568, %v2592
        %2609 = vrot.lane.b32.xlu0 %v2605, 1
        %v2610 = vpop.permute.xlu0 %2609
        %2611 = vrot.lane.b32.xlu0 %v2606, 1
        %v2612 = vpop.permute.xlu0 %2611
        %v2615 = vsub.f32 %v1787, %v2610
        %v2616 = vsub.f32 %v1788, %v2612
        %2618 = vset.pattern.permute.xlu0 6
        %2619 = vperm.xlu0 %2618, %v2615
        %v2620 = vpop.permute.xlu0 %2619
        %2623 = vset.pattern.permute.xlu0 6
        %2624 = vperm.xlu0 %2623, %v2616
        %v2625 = vpop.permute.xlu0 %2624
        %v2627 = vadd.f32 %v2603, %v2620
        %v2628 = vadd.f32 %v2604, %v2625
        %v2629 = vxor.u32 %v2627, 2147483648
        %v2630 = vxor.u32 %v2628, 2147483648
        %v2631 = vmul.f32 %v2629, 1.442695
        %v2632 = vpow.pop %v2631
        %v2633 = vmul.f32 %v2630, 1.442695
        %v2634 = vpow.pop %v2633
        %v2635 = vadd.f32 %v2632, 1.0
        %v2636 = vadd.f32 %v2634, 1.0
        %v2637 = vrcp.pop %v2635
        %v2638 = vmul.f32 1.0, %v2637
        %v2639 = vrcp.pop %v2636
        %v2640 = vmul.f32 1.0, %v2639
        %v2641 = vmul.f32 %v2627, %v2638
        %v2642 = vmul.f32 %v2628, %v2640
        %v2643 = vld [vmem:[%s11] sm:$0x1]
        %v2644 = vld [vmem:[%s10] sm:$0xff]
        %v2645 = vld [vmem:[%s10 + $0x8] sm:$0xff]
        %v2646 = vld [vmem:[%s10 + $0x10] sm:$0xf]
        %v2648 = vsel %vm2554, %v2641, 0
        %vm2650 = vcmask 1043456
        %v2652 = vsel %vm2650, %v2646, 0
        %2654 = vmatprep.subr.mxu0 0.0
        %2655 = vmatpush1.msra.mxu0 0.0
        %2656 = vmatprep.subr.mxu0 0.0
        %2657 = vmatpush1.msra.mxu0 0.0
        %2658 = vmatprep.subr.mxu0 0.0
        %2659 = vmatpush1.msra.mxu0 0.0
        %2660 = vmatprep.subr.mxu0 0.0
        %2661 = vmatpush1.msra.mxu0 0.0
        %2662 = vmatprep.subr.mxu0 0.0
        %2663 = vmatpush1.msra.mxu0 0.0
        %2664 = vmatprep.subr.mxu0 0.0
        %2665 = vmatpush1.msra.mxu0 0.0
        %2666 = vmatprep.subr.mxu0 0.0
        %2667 = vmatpush1.msra.mxu0 0.0
        %2668 = vmatprep.subr.mxu0 0.0
        %2669 = vmatpush1.msra.mxu0 0.0
        %2670 = vmatprep.subr.mxu0 0.0
        %2671 = vmatpush1.msra.mxu0 0.0
        %2672 = vmatprep.subr.mxu0 0.0
        %2673 = vmatpush1.msra.mxu0 0.0
        %2674 = vmatprep.subr.mxu0 0.0
        %2675 = vmatpush1.msra.mxu0 0.0
        %2676 = vmatprep.subr.mxu0 0.0
        %2677 = vmatpush1.msra.mxu0 0.0
        %2678 = vmatprep.subr.mxu0 0.0
        %2679 = vmatpush1.msra.mxu0 0.0
        %2680 = vmatprep.subr.mxu0 0.0
        %2681 = vmatpush1.msra.mxu0 %v2652
        %2682 = vmatprep.subr.mxu0 0.0
        %2683 = vmatpush1.msra.mxu0 %v2645
        %2684 = vmatprep.subr.mxu0 0.0
        %2685 = vmatpush1.msra.mxu0 %v2644
        %2686 = vmatprep.subr.mxu0 0.0
        %2687 = vmatpush2.msra.mxu0 0.0
        %2688 = vmatprep.subr.mxu0 0.0
        %2689 = vmatpush2.msra.mxu0 0.0
        %2690 = vmatprep.subr.mxu0 0.0
        %2691 = vmatpush2.msra.mxu0 0.0
        %2692 = vmatprep.subr.mxu0 0.0
        %2693 = vmatpush2.msra.mxu0 0.0
        %2694 = vmatprep.subr.mxu0 0.0
        %2695 = vmatpush2.msra.mxu0 0.0
        %2696 = vmatprep.subr.mxu0 0.0
        %2697 = vmatpush2.msra.mxu0 0.0
        %2698 = vmatprep.subr.mxu0 0.0
        %2699 = vmatpush2.msra.mxu0 0.0
        %2700 = vmatprep.subr.mxu0 0.0
        %2701 = vmatpush2.msra.mxu0 0.0
        %2702 = vmatprep.subr.mxu0 0.0
        %2703 = vmatpush2.msra.mxu0 0.0
        %2704 = vmatprep.subr.mxu0 0.0
        %2705 = vmatpush2.msra.mxu0 0.0
        %2706 = vmatprep.subr.mxu0 0.0
        %2707 = vmatpush2.msra.mxu0 0.0
        %2708 = vmatprep.subr.mxu0 0.0
        %2709 = vmatpush2.msra.mxu0 0.0
        %2710 = vmatprep.subr.mxu0 0.0
        %2711 = vmatpush2.msra.mxu0 0.0
        %2712 = vmatprep.subr.mxu0 0.0
        %2713 = vmatpush2.msra.mxu0 0.0
        %2714 = vmatprep.subr.mxu0 0.0
        %2715 = vmatpush2.msra.mxu0 0.0
        %2716 = vmatprep.subr.mxu0 0.0
        %2717 = vmatpush2.msra.mxu0 0.0
        %2718 = vmatprep.mubr.f32.mxu0 0.0
        %2719 = vmatmul.mubr.f32.gmra.mxu0 %v2648
        %v2720 = vpop.f32.mrf.mxu0
        %v2721 = vadd.f32 0.0, %v2720
        %v2722 = vpop.f32.mrf.mxu0
        %2723 = vdwg.mxu0
        %v2724 = vadd.f32 %v2643, %v2721
        %s2725 = scalar_lea.vmem %s10, 24
        %v2726 = vld [vmem:[%s2725] sm:$0xff]
        %v2727 = vld [vmem:[%s2725 + $0x8] sm:$0xff]
        %v2728 = vld [vmem:[%s2725 + $0x10] sm:$0xf]
        %v2729 = vrot.slane %v2641, 1
        %v2730 = vsel %vm2554, %v2729, 0
        %v2733 = vsel %vm2650, %v2728, 0
        %2735 = vmatprep.subr.mxu0 0.0
        %2736 = vmatpush1.msra.mxu0 0.0
        %2737 = vmatprep.subr.mxu0 0.0
        %2738 = vmatpush1.msra.mxu0 0.0
        %2739 = vmatprep.subr.mxu0 0.0
        %2740 = vmatpush1.msra.mxu0 0.0
        %2741 = vmatprep.subr.mxu0 0.0
        %2742 = vmatpush1.msra.mxu0 0.0
        %2743 = vmatprep.subr.mxu0 0.0
        %2744 = vmatpush1.msra.mxu0 0.0
        %2745 = vmatprep.subr.mxu0 0.0
        %2746 = vmatpush1.msra.mxu0 0.0
        %2747 = vmatprep.subr.mxu0 0.0
        %2748 = vmatpush1.msra.mxu0 0.0
        %2749 = vmatprep.subr.mxu0 0.0
        %2750 = vmatpush1.msra.mxu0 0.0
        %2751 = vmatprep.subr.mxu0 0.0
        %2752 = vmatpush1.msra.mxu0 0.0
        %2753 = vmatprep.subr.mxu0 0.0
        %2754 = vmatpush1.msra.mxu0 0.0
        %2755 = vmatprep.subr.mxu0 0.0
        %2756 = vmatpush1.msra.mxu0 0.0
        %2757 = vmatprep.subr.mxu0 0.0
        %2758 = vmatpush1.msra.mxu0 0.0
        %2759 = vmatprep.subr.mxu0 0.0
        %2760 = vmatpush1.msra.mxu0 0.0
        %2761 = vmatprep.subr.mxu0 0.0
        %2762 = vmatpush1.msra.mxu0 %v2733
        %2763 = vmatprep.subr.mxu0 0.0
        %2764 = vmatpush1.msra.mxu0 %v2727
        %2765 = vmatprep.subr.mxu0 0.0
        %2766 = vmatpush1.msra.mxu0 %v2726
        %2767 = vmatprep.subr.mxu0 0.0
        %2768 = vmatpush2.msra.mxu0 0.0
        %2769 = vmatprep.subr.mxu0 0.0
        %2770 = vmatpush2.msra.mxu0 0.0
        %2771 = vmatprep.subr.mxu0 0.0
        %2772 = vmatpush2.msra.mxu0 0.0
        %2773 = vmatprep.subr.mxu0 0.0
        %2774 = vmatpush2.msra.mxu0 0.0
        %2775 = vmatprep.subr.mxu0 0.0
        %2776 = vmatpush2.msra.mxu0 0.0
        %2777 = vmatprep.subr.mxu0 0.0
        %2778 = vmatpush2.msra.mxu0 0.0
        %2779 = vmatprep.subr.mxu0 0.0
        %2780 = vmatpush2.msra.mxu0 0.0
        %2781 = vmatprep.subr.mxu0 0.0
        %2782 = vmatpush2.msra.mxu0 0.0
        %2783 = vmatprep.subr.mxu0 0.0
        %2784 = vmatpush2.msra.mxu0 0.0
        %2785 = vmatprep.subr.mxu0 0.0
        %2786 = vmatpush2.msra.mxu0 0.0
        %2787 = vmatprep.subr.mxu0 0.0
        %2788 = vmatpush2.msra.mxu0 0.0
        %2789 = vmatprep.subr.mxu0 0.0
        %2790 = vmatpush2.msra.mxu0 0.0
        %2791 = vmatprep.subr.mxu0 0.0
        %2792 = vmatpush2.msra.mxu0 0.0
        %2793 = vmatprep.subr.mxu0 0.0
        %2794 = vmatpush2.msra.mxu0 0.0
        %2795 = vmatprep.subr.mxu0 0.0
        %2796 = vmatpush2.msra.mxu0 0.0
        %2797 = vmatprep.subr.mxu0 0.0
        %2798 = vmatpush2.msra.mxu0 0.0
        %2799 = vmatprep.mubr.f32.mxu0 0.0
        %2800 = vmatmul.mubr.f32.gmra.mxu0 %v2730
        %v2801 = vpop.f32.mrf.mxu0
        %v2802 = vadd.f32 0.0, %v2801
        %v2803 = vpop.f32.mrf.mxu0
        %2804 = vdwg.mxu0
        %v2805 = vadd.f32 %v2724, %v2802
        %s2806 = scalar_lea.vmem %s10, 48
        %v2807 = vld [vmem:[%s2806] sm:$0xff]
        %v2808 = vld [vmem:[%s2806 + $0x8] sm:$0xff]
        %v2809 = vld [vmem:[%s2806 + $0x10] sm:$0xf]
        %v2810 = vrot.slane %v2641, 2
        %v2811 = vsel %vm2554, %v2810, 0
        %v2814 = vsel %vm2650, %v2809, 0
        %2816 = vmatprep.subr.mxu0 0.0
        %2817 = vmatpush1.msra.mxu0 0.0
        %2818 = vmatprep.subr.mxu0 0.0
        %2819 = vmatpush1.msra.mxu0 0.0
        %2820 = vmatprep.subr.mxu0 0.0
        %2821 = vmatpush1.msra.mxu0 0.0
        %2822 = vmatprep.subr.mxu0 0.0
        %2823 = vmatpush1.msra.mxu0 0.0
        %2824 = vmatprep.subr.mxu0 0.0
        %2825 = vmatpush1.msra.mxu0 0.0
        %2826 = vmatprep.subr.mxu0 0.0
        %2827 = vmatpush1.msra.mxu0 0.0
        %2828 = vmatprep.subr.mxu0 0.0
        %2829 = vmatpush1.msra.mxu0 0.0
        %2830 = vmatprep.subr.mxu0 0.0
        %2831 = vmatpush1.msra.mxu0 0.0
        %2832 = vmatprep.subr.mxu0 0.0
        %2833 = vmatpush1.msra.mxu0 0.0
        %2834 = vmatprep.subr.mxu0 0.0
        %2835 = vmatpush1.msra.mxu0 0.0
        %2836 = vmatprep.subr.mxu0 0.0
        %2837 = vmatpush1.msra.mxu0 0.0
        %2838 = vmatprep.subr.mxu0 0.0
        %2839 = vmatpush1.msra.mxu0 0.0
        %2840 = vmatprep.subr.mxu0 0.0
        %2841 = vmatpush1.msra.mxu0 0.0
        %2842 = vmatprep.subr.mxu0 0.0
        %2843 = vmatpush1.msra.mxu0 %v2814
        %2844 = vmatprep.subr.mxu0 0.0
        %2845 = vmatpush1.msra.mxu0 %v2808
        %2846 = vmatprep.subr.mxu0 0.0
        %2847 = vmatpush1.msra.mxu0 %v2807
        %2848 = vmatprep.subr.mxu0 0.0
        %2849 = vmatpush2.msra.mxu0 0.0
        %2850 = vmatprep.subr.mxu0 0.0
        %2851 = vmatpush2.msra.mxu0 0.0
        %2852 = vmatprep.subr.mxu0 0.0
        %2853 = vmatpush2.msra.mxu0 0.0
        %2854 = vmatprep.subr.mxu0 0.0
        %2855 = vmatpush2.msra.mxu0 0.0
        %2856 = vmatprep.subr.mxu0 0.0
        %2857 = vmatpush2.msra.mxu0 0.0
        %2858 = vmatprep.subr.mxu0 0.0
        %2859 = vmatpush2.msra.mxu0 0.0
        %2860 = vmatprep.subr.mxu0 0.0
        %2861 = vmatpush2.msra.mxu0 0.0
        %2862 = vmatprep.subr.mxu0 0.0
        %2863 = vmatpush2.msra.mxu0 0.0
        %2864 = vmatprep.subr.mxu0 0.0
        %2865 = vmatpush2.msra.mxu0 0.0
        %2866 = vmatprep.subr.mxu0 0.0
        %2867 = vmatpush2.msra.mxu0 0.0
        %2868 = vmatprep.subr.mxu0 0.0
        %2869 = vmatpush2.msra.mxu0 0.0
        %2870 = vmatprep.subr.mxu0 0.0
        %2871 = vmatpush2.msra.mxu0 0.0
        %2872 = vmatprep.subr.mxu0 0.0
        %2873 = vmatpush2.msra.mxu0 0.0
        %2874 = vmatprep.subr.mxu0 0.0
        %2875 = vmatpush2.msra.mxu0 0.0
        %2876 = vmatprep.subr.mxu0 0.0
        %2877 = vmatpush2.msra.mxu0 0.0
        %2878 = vmatprep.subr.mxu0 0.0
        %2879 = vmatpush2.msra.mxu0 0.0
        %2880 = vmatprep.mubr.f32.mxu0 0.0
        %2881 = vmatmul.mubr.f32.gmra.mxu0 %v2811
        %v2882 = vpop.f32.mrf.mxu0
        %v2883 = vadd.f32 0.0, %v2882
        %v2884 = vpop.f32.mrf.mxu0
        %2885 = vdwg.mxu0
        %v2886 = vadd.f32 %v2805, %v2883
        %s2887 = scalar_lea.vmem %s10, 72
        %v2888 = vld [vmem:[%s2887] sm:$0xff]
        %v2889 = vld [vmem:[%s2887 + $0x8] sm:$0xff]
        %v2890 = vld [vmem:[%s2887 + $0x10] sm:$0xf]
        %v2891 = vrot.slane %v2641, 3
        %v2892 = vsel %vm2554, %v2891, 0
        %v2895 = vsel %vm2650, %v2890, 0
        %2897 = vmatprep.subr.mxu0 0.0
        %2898 = vmatpush1.msra.mxu0 0.0
        %2899 = vmatprep.subr.mxu0 0.0
        %2900 = vmatpush1.msra.mxu0 0.0
        %2901 = vmatprep.subr.mxu0 0.0
        %2902 = vmatpush1.msra.mxu0 0.0
        %2903 = vmatprep.subr.mxu0 0.0
        %2904 = vmatpush1.msra.mxu0 0.0
        %2905 = vmatprep.subr.mxu0 0.0
        %2906 = vmatpush1.msra.mxu0 0.0
        %2907 = vmatprep.subr.mxu0 0.0
        %2908 = vmatpush1.msra.mxu0 0.0
        %2909 = vmatprep.subr.mxu0 0.0
        %2910 = vmatpush1.msra.mxu0 0.0
        %2911 = vmatprep.subr.mxu0 0.0
        %2912 = vmatpush1.msra.mxu0 0.0
        %2913 = vmatprep.subr.mxu0 0.0
        %2914 = vmatpush1.msra.mxu0 0.0
        %2915 = vmatprep.subr.mxu0 0.0
        %2916 = vmatpush1.msra.mxu0 0.0
        %2917 = vmatprep.subr.mxu0 0.0
        %2918 = vmatpush1.msra.mxu0 0.0
        %2919 = vmatprep.subr.mxu0 0.0
        %2920 = vmatpush1.msra.mxu0 0.0
        %2921 = vmatprep.subr.mxu0 0.0
        %2922 = vmatpush1.msra.mxu0 0.0
        %2923 = vmatprep.subr.mxu0 0.0
        %2924 = vmatpush1.msra.mxu0 %v2895
        %2925 = vmatprep.subr.mxu0 0.0
        %2926 = vmatpush1.msra.mxu0 %v2889
        %2927 = vmatprep.subr.mxu0 0.0
        %2928 = vmatpush1.msra.mxu0 %v2888
        %2929 = vmatprep.subr.mxu0 0.0
        %2930 = vmatpush2.msra.mxu0 0.0
        %2931 = vmatprep.subr.mxu0 0.0
        %2932 = vmatpush2.msra.mxu0 0.0
        %2933 = vmatprep.subr.mxu0 0.0
        %2934 = vmatpush2.msra.mxu0 0.0
        %2935 = vmatprep.subr.mxu0 0.0
        %2936 = vmatpush2.msra.mxu0 0.0
        %2937 = vmatprep.subr.mxu0 0.0
        %2938 = vmatpush2.msra.mxu0 0.0
        %2939 = vmatprep.subr.mxu0 0.0
        %2940 = vmatpush2.msra.mxu0 0.0
        %2941 = vmatprep.subr.mxu0 0.0
        %2942 = vmatpush2.msra.mxu0 0.0
        %2943 = vmatprep.subr.mxu0 0.0
        %2944 = vmatpush2.msra.mxu0 0.0
        %2945 = vmatprep.subr.mxu0 0.0
        %2946 = vmatpush2.msra.mxu0 0.0
        %2947 = vmatprep.subr.mxu0 0.0
        %2948 = vmatpush2.msra.mxu0 0.0
        %2949 = vmatprep.subr.mxu0 0.0
        %2950 = vmatpush2.msra.mxu0 0.0
        %2951 = vmatprep.subr.mxu0 0.0
        %2952 = vmatpush2.msra.mxu0 0.0
        %2953 = vmatprep.subr.mxu0 0.0
        %2954 = vmatpush2.msra.mxu0 0.0
        %2955 = vmatprep.subr.mxu0 0.0
        %2956 = vmatpush2.msra.mxu0 0.0
        %2957 = vmatprep.subr.mxu0 0.0
        %2958 = vmatpush2.msra.mxu0 0.0
        %2959 = vmatprep.subr.mxu0 0.0
        %2960 = vmatpush2.msra.mxu0 0.0
        %2961 = vmatprep.mubr.f32.mxu0 0.0
        %2962 = vmatmul.mubr.f32.gmra.mxu0 %v2892
        %v2963 = vpop.f32.mrf.mxu0
        %v2964 = vadd.f32 0.0, %v2963
        %v2965 = vpop.f32.mrf.mxu0
        %2966 = vdwg.mxu0
        %v2967 = vadd.f32 %v2886, %v2964
        %s2968 = scalar_lea.vmem %s10, 96
        %v2969 = vld [vmem:[%s2968] sm:$0xff]
        %v2970 = vld [vmem:[%s2968 + $0x8] sm:$0xff]
        %v2971 = vld [vmem:[%s2968 + $0x10] sm:$0xf]
        %v2972 = vrot.slane %v2641, 4
        %v2973 = vsel %vm2554, %v2972, 0
        %v2976 = vsel %vm2650, %v2971, 0
        %2978 = vmatprep.subr.mxu0 0.0
        %2979 = vmatpush1.msra.mxu0 0.0
        %2980 = vmatprep.subr.mxu0 0.0
        %2981 = vmatpush1.msra.mxu0 0.0
        %2982 = vmatprep.subr.mxu0 0.0
        %2983 = vmatpush1.msra.mxu0 0.0
        %2984 = vmatprep.subr.mxu0 0.0
        %2985 = vmatpush1.msra.mxu0 0.0
        %2986 = vmatprep.subr.mxu0 0.0
        %2987 = vmatpush1.msra.mxu0 0.0
        %2988 = vmatprep.subr.mxu0 0.0
        %2989 = vmatpush1.msra.mxu0 0.0
        %2990 = vmatprep.subr.mxu0 0.0
        %2991 = vmatpush1.msra.mxu0 0.0
        %2992 = vmatprep.subr.mxu0 0.0
        %2993 = vmatpush1.msra.mxu0 0.0
        %2994 = vmatprep.subr.mxu0 0.0
        %2995 = vmatpush1.msra.mxu0 0.0
        %2996 = vmatprep.subr.mxu0 0.0
        %2997 = vmatpush1.msra.mxu0 0.0
        %2998 = vmatprep.subr.mxu0 0.0
        %2999 = vmatpush1.msra.mxu0 0.0
        %3000 = vmatprep.subr.mxu0 0.0
        %3001 = vmatpush1.msra.mxu0 0.0
        %3002 = vmatprep.subr.mxu0 0.0
        %3003 = vmatpush1.msra.mxu0 0.0
        %3004 = vmatprep.subr.mxu0 0.0
        %3005 = vmatpush1.msra.mxu0 %v2976
        %3006 = vmatprep.subr.mxu0 0.0
        %3007 = vmatpush1.msra.mxu0 %v2970
        %3008 = vmatprep.subr.mxu0 0.0
        %3009 = vmatpush1.msra.mxu0 %v2969
        %3010 = vmatprep.subr.mxu0 0.0
        %3011 = vmatpush2.msra.mxu0 0.0
        %3012 = vmatprep.subr.mxu0 0.0
        %3013 = vmatpush2.msra.mxu0 0.0
        %3014 = vmatprep.subr.mxu0 0.0
        %3015 = vmatpush2.msra.mxu0 0.0
        %3016 = vmatprep.subr.mxu0 0.0
        %3017 = vmatpush2.msra.mxu0 0.0
        %3018 = vmatprep.subr.mxu0 0.0
        %3019 = vmatpush2.msra.mxu0 0.0
        %3020 = vmatprep.subr.mxu0 0.0
        %3021 = vmatpush2.msra.mxu0 0.0
        %3022 = vmatprep.subr.mxu0 0.0
        %3023 = vmatpush2.msra.mxu0 0.0
        %3024 = vmatprep.subr.mxu0 0.0
        %3025 = vmatpush2.msra.mxu0 0.0
        %3026 = vmatprep.subr.mxu0 0.0
        %3027 = vmatpush2.msra.mxu0 0.0
        %3028 = vmatprep.subr.mxu0 0.0
        %3029 = vmatpush2.msra.mxu0 0.0
        %3030 = vmatprep.subr.mxu0 0.0
        %3031 = vmatpush2.msra.mxu0 0.0
        %3032 = vmatprep.subr.mxu0 0.0
        %3033 = vmatpush2.msra.mxu0 0.0
        %3034 = vmatprep.subr.mxu0 0.0
        %3035 = vmatpush2.msra.mxu0 0.0
        %3036 = vmatprep.subr.mxu0 0.0
        %3037 = vmatpush2.msra.mxu0 0.0
        %3038 = vmatprep.subr.mxu0 0.0
        %3039 = vmatpush2.msra.mxu0 0.0
        %3040 = vmatprep.subr.mxu0 0.0
        %3041 = vmatpush2.msra.mxu0 0.0
        %3042 = vmatprep.mubr.f32.mxu0 0.0
        %3043 = vmatmul.mubr.f32.gmra.mxu0 %v2973
        %v3044 = vpop.f32.mrf.mxu0
        %v3045 = vadd.f32 0.0, %v3044
        %v3046 = vpop.f32.mrf.mxu0
        %3047 = vdwg.mxu0
        %v3048 = vadd.f32 %v2967, %v3045
        %s3049 = scalar_lea.vmem %s10, 120
        %v3050 = vld [vmem:[%s3049] sm:$0xff]
        %v3051 = vld [vmem:[%s3049 + $0x8] sm:$0xff]
        %v3052 = vld [vmem:[%s3049 + $0x10] sm:$0xf]
        %v3053 = vrot.slane %v2641, 5
        %v3054 = vsel %vm2554, %v3053, 0
        %v3057 = vsel %vm2650, %v3052, 0
        %3059 = vmatprep.subr.mxu0 0.0
        %3060 = vmatpush1.msra.mxu0 0.0
        %3061 = vmatprep.subr.mxu0 0.0
        %3062 = vmatpush1.msra.mxu0 0.0
        %3063 = vmatprep.subr.mxu0 0.0
        %3064 = vmatpush1.msra.mxu0 0.0
        %3065 = vmatprep.subr.mxu0 0.0
        %3066 = vmatpush1.msra.mxu0 0.0
        %3067 = vmatprep.subr.mxu0 0.0
        %3068 = vmatpush1.msra.mxu0 0.0
        %3069 = vmatprep.subr.mxu0 0.0
        %3070 = vmatpush1.msra.mxu0 0.0
        %3071 = vmatprep.subr.mxu0 0.0
        %3072 = vmatpush1.msra.mxu0 0.0
        %3073 = vmatprep.subr.mxu0 0.0
        %3074 = vmatpush1.msra.mxu0 0.0
        %3075 = vmatprep.subr.mxu0 0.0
        %3076 = vmatpush1.msra.mxu0 0.0
        %3077 = vmatprep.subr.mxu0 0.0
        %3078 = vmatpush1.msra.mxu0 0.0
        %3079 = vmatprep.subr.mxu0 0.0
        %3080 = vmatpush1.msra.mxu0 0.0
        %3081 = vmatprep.subr.mxu0 0.0
        %3082 = vmatpush1.msra.mxu0 0.0
        %3083 = vmatprep.subr.mxu0 0.0
        %3084 = vmatpush1.msra.mxu0 0.0
        %3085 = vmatprep.subr.mxu0 0.0
        %3086 = vmatpush1.msra.mxu0 %v3057
        %3087 = vmatprep.subr.mxu0 0.0
        %3088 = vmatpush1.msra.mxu0 %v3051
        %3089 = vmatprep.subr.mxu0 0.0
        %3090 = vmatpush1.msra.mxu0 %v3050
        %3091 = vmatprep.subr.mxu0 0.0
        %3092 = vmatpush2.msra.mxu0 0.0
        %3093 = vmatprep.subr.mxu0 0.0
        %3094 = vmatpush2.msra.mxu0 0.0
        %3095 = vmatprep.subr.mxu0 0.0
        %3096 = vmatpush2.msra.mxu0 0.0
        %3097 = vmatprep.subr.mxu0 0.0
        %3098 = vmatpush2.msra.mxu0 0.0
        %3099 = vmatprep.subr.mxu0 0.0
        %3100 = vmatpush2.msra.mxu0 0.0
        %3101 = vmatprep.subr.mxu0 0.0
        %3102 = vmatpush2.msra.mxu0 0.0
        %3103 = vmatprep.subr.mxu0 0.0
        %3104 = vmatpush2.msra.mxu0 0.0
        %3105 = vmatprep.subr.mxu0 0.0
        %3106 = vmatpush2.msra.mxu0 0.0
        %3107 = vmatprep.subr.mxu0 0.0
        %3108 = vmatpush2.msra.mxu0 0.0
        %3109 = vmatprep.subr.mxu0 0.0
        %3110 = vmatpush2.msra.mxu0 0.0
        %3111 = vmatprep.subr.mxu0 0.0
        %3112 = vmatpush2.msra.mxu0 0.0
        %3113 = vmatprep.subr.mxu0 0.0
        %3114 = vmatpush2.msra.mxu0 0.0
        %3115 = vmatprep.subr.mxu0 0.0
        %3116 = vmatpush2.msra.mxu0 0.0
        %3117 = vmatprep.subr.mxu0 0.0
        %3118 = vmatpush2.msra.mxu0 0.0
        %3119 = vmatprep.subr.mxu0 0.0
        %3120 = vmatpush2.msra.mxu0 0.0
        %3121 = vmatprep.subr.mxu0 0.0
        %3122 = vmatpush2.msra.mxu0 0.0
        %3123 = vmatprep.mubr.f32.mxu0 0.0
        %3124 = vmatmul.mubr.f32.gmra.mxu0 %v3054
        %v3125 = vpop.f32.mrf.mxu0
        %v3126 = vadd.f32 0.0, %v3125
        %v3127 = vpop.f32.mrf.mxu0
        %3128 = vdwg.mxu0
        %v3129 = vadd.f32 %v3048, %v3126
        %s3130 = scalar_lea.vmem %s10, 144
        %v3131 = vld [vmem:[%s3130] sm:$0xff]
        %v3132 = vld [vmem:[%s3130 + $0x8] sm:$0xff]
        %v3133 = vld [vmem:[%s3130 + $0x10] sm:$0xf]
        %v3134 = vrot.slane %v2641, 6
        %v3135 = vsel %vm2554, %v3134, 0
        %v3138 = vsel %vm2650, %v3133, 0
        %3140 = vmatprep.subr.mxu0 0.0
        %3141 = vmatpush1.msra.mxu0 0.0
        %3142 = vmatprep.subr.mxu0 0.0
        %3143 = vmatpush1.msra.mxu0 0.0
        %3144 = vmatprep.subr.mxu0 0.0
        %3145 = vmatpush1.msra.mxu0 0.0
        %3146 = vmatprep.subr.mxu0 0.0
        %3147 = vmatpush1.msra.mxu0 0.0
        %3148 = vmatprep.subr.mxu0 0.0
        %3149 = vmatpush1.msra.mxu0 0.0
        %3150 = vmatprep.subr.mxu0 0.0
        %3151 = vmatpush1.msra.mxu0 0.0
        %3152 = vmatprep.subr.mxu0 0.0
        %3153 = vmatpush1.msra.mxu0 0.0
        %3154 = vmatprep.subr.mxu0 0.0
        %3155 = vmatpush1.msra.mxu0 0.0
        %3156 = vmatprep.subr.mxu0 0.0
        %3157 = vmatpush1.msra.mxu0 0.0
        %3158 = vmatprep.subr.mxu0 0.0
        %3159 = vmatpush1.msra.mxu0 0.0
        %3160 = vmatprep.subr.mxu0 0.0
        %3161 = vmatpush1.msra.mxu0 0.0
        %3162 = vmatprep.subr.mxu0 0.0
        %3163 = vmatpush1.msra.mxu0 0.0
        %3164 = vmatprep.subr.mxu0 0.0
        %3165 = vmatpush1.msra.mxu0 0.0
        %3166 = vmatprep.subr.mxu0 0.0
        %3167 = vmatpush1.msra.mxu0 %v3138
        %3168 = vmatprep.subr.mxu0 0.0
        %3169 = vmatpush1.msra.mxu0 %v3132
        %3170 = vmatprep.subr.mxu0 0.0
        %3171 = vmatpush1.msra.mxu0 %v3131
        %3172 = vmatprep.subr.mxu0 0.0
        %3173 = vmatpush2.msra.mxu0 0.0
        %3174 = vmatprep.subr.mxu0 0.0
        %3175 = vmatpush2.msra.mxu0 0.0
        %3176 = vmatprep.subr.mxu0 0.0
        %3177 = vmatpush2.msra.mxu0 0.0
        %3178 = vmatprep.subr.mxu0 0.0
        %3179 = vmatpush2.msra.mxu0 0.0
        %3180 = vmatprep.subr.mxu0 0.0
        %3181 = vmatpush2.msra.mxu0 0.0
        %3182 = vmatprep.subr.mxu0 0.0
        %3183 = vmatpush2.msra.mxu0 0.0
        %3184 = vmatprep.subr.mxu0 0.0
        %3185 = vmatpush2.msra.mxu0 0.0
        %3186 = vmatprep.subr.mxu0 0.0
        %3187 = vmatpush2.msra.mxu0 0.0
        %3188 = vmatprep.subr.mxu0 0.0
        %3189 = vmatpush2.msra.mxu0 0.0
        %3190 = vmatprep.subr.mxu0 0.0
        %3191 = vmatpush2.msra.mxu0 0.0
        %3192 = vmatprep.subr.mxu0 0.0
        %3193 = vmatpush2.msra.mxu0 0.0
        %3194 = vmatprep.subr.mxu0 0.0
        %3195 = vmatpush2.msra.mxu0 0.0
        %3196 = vmatprep.subr.mxu0 0.0
        %3197 = vmatpush2.msra.mxu0 0.0
        %3198 = vmatprep.subr.mxu0 0.0
        %3199 = vmatpush2.msra.mxu0 0.0
        %3200 = vmatprep.subr.mxu0 0.0
        %3201 = vmatpush2.msra.mxu0 0.0
        %3202 = vmatprep.subr.mxu0 0.0
        %3203 = vmatpush2.msra.mxu0 0.0
        %3204 = vmatprep.mubr.f32.mxu0 0.0
        %3205 = vmatmul.mubr.f32.gmra.mxu0 %v3135
        %v3206 = vpop.f32.mrf.mxu0
        %v3207 = vadd.f32 0.0, %v3206
        %v3208 = vpop.f32.mrf.mxu0
        %3209 = vdwg.mxu0
        %v3210 = vadd.f32 %v3129, %v3207
        %s3211 = scalar_lea.vmem %s10, 168
        %v3212 = vld [vmem:[%s3211] sm:$0xff]
        %v3213 = vld [vmem:[%s3211 + $0x8] sm:$0xff]
        %v3214 = vld [vmem:[%s3211 + $0x10] sm:$0xf]
        %v3215 = vrot.slane %v2641, 7
        %v3216 = vsel %vm2554, %v3215, 0
        %v3219 = vsel %vm2650, %v3214, 0
        %3221 = vmatprep.subr.mxu0 0.0
        %3222 = vmatpush1.msra.mxu0 0.0
        %3223 = vmatprep.subr.mxu0 0.0
        %3224 = vmatpush1.msra.mxu0 0.0
        %3225 = vmatprep.subr.mxu0 0.0
        %3226 = vmatpush1.msra.mxu0 0.0
        %3227 = vmatprep.subr.mxu0 0.0
        %3228 = vmatpush1.msra.mxu0 0.0
        %3229 = vmatprep.subr.mxu0 0.0
        %3230 = vmatpush1.msra.mxu0 0.0
        %3231 = vmatprep.subr.mxu0 0.0
        %3232 = vmatpush1.msra.mxu0 0.0
        %3233 = vmatprep.subr.mxu0 0.0
        %3234 = vmatpush1.msra.mxu0 0.0
        %3235 = vmatprep.subr.mxu0 0.0
        %3236 = vmatpush1.msra.mxu0 0.0
        %3237 = vmatprep.subr.mxu0 0.0
        %3238 = vmatpush1.msra.mxu0 0.0
        %3239 = vmatprep.subr.mxu0 0.0
        %3240 = vmatpush1.msra.mxu0 0.0
        %3241 = vmatprep.subr.mxu0 0.0
        %3242 = vmatpush1.msra.mxu0 0.0
        %3243 = vmatprep.subr.mxu0 0.0
        %3244 = vmatpush1.msra.mxu0 0.0
        %3245 = vmatprep.subr.mxu0 0.0
        %3246 = vmatpush1.msra.mxu0 0.0
        %3247 = vmatprep.subr.mxu0 0.0
        %3248 = vmatpush1.msra.mxu0 %v3219
        %3249 = vmatprep.subr.mxu0 0.0
        %3250 = vmatpush1.msra.mxu0 %v3213
        %3251 = vmatprep.subr.mxu0 0.0
        %3252 = vmatpush1.msra.mxu0 %v3212
        %3253 = vmatprep.subr.mxu0 0.0
        %3254 = vmatpush2.msra.mxu0 0.0
        %3255 = vmatprep.subr.mxu0 0.0
        %3256 = vmatpush2.msra.mxu0 0.0
        %3257 = vmatprep.subr.mxu0 0.0
        %3258 = vmatpush2.msra.mxu0 0.0
        %3259 = vmatprep.subr.mxu0 0.0
        %3260 = vmatpush2.msra.mxu0 0.0
        %3261 = vmatprep.subr.mxu0 0.0
        %3262 = vmatpush2.msra.mxu0 0.0
        %3263 = vmatprep.subr.mxu0 0.0
        %3264 = vmatpush2.msra.mxu0 0.0
        %3265 = vmatprep.subr.mxu0 0.0
        %3266 = vmatpush2.msra.mxu0 0.0
        %3267 = vmatprep.subr.mxu0 0.0
        %3268 = vmatpush2.msra.mxu0 0.0
        %3269 = vmatprep.subr.mxu0 0.0
        %3270 = vmatpush2.msra.mxu0 0.0
        %3271 = vmatprep.subr.mxu0 0.0
        %3272 = vmatpush2.msra.mxu0 0.0
        %3273 = vmatprep.subr.mxu0 0.0
        %3274 = vmatpush2.msra.mxu0 0.0
        %3275 = vmatprep.subr.mxu0 0.0
        %3276 = vmatpush2.msra.mxu0 0.0
        %3277 = vmatprep.subr.mxu0 0.0
        %3278 = vmatpush2.msra.mxu0 0.0
        %3279 = vmatprep.subr.mxu0 0.0
        %3280 = vmatpush2.msra.mxu0 0.0
        %3281 = vmatprep.subr.mxu0 0.0
        %3282 = vmatpush2.msra.mxu0 0.0
        %3283 = vmatprep.subr.mxu0 0.0
        %3284 = vmatpush2.msra.mxu0 0.0
        %3285 = vmatprep.mubr.f32.mxu0 0.0
        %3286 = vmatmul.mubr.f32.gmra.mxu0 %v3216
        %v3287 = vpop.f32.mrf.mxu0
        %v3288 = vadd.f32 0.0, %v3287
        %v3289 = vpop.f32.mrf.mxu0
        %3290 = vdwg.mxu0
        %v3291 = vadd.f32 %v3210, %v3288
        %s3292 = scalar_lea.vmem %s10, 192
        %v3293 = vld [vmem:[%s3292] sm:$0xff]
        %v3294 = vld [vmem:[%s3292 + $0x8] sm:$0xff]
        %v3295 = vld [vmem:[%s3292 + $0x10] sm:$0xf]
        %v3297 = vsel %vm2554, %v2642, 0
        %v3300 = vsel %vm2650, %v3295, 0
        %3302 = vmatprep.subr.mxu0 0.0
        %3303 = vmatpush1.msra.mxu0 0.0
        %3304 = vmatprep.subr.mxu0 0.0
        %3305 = vmatpush1.msra.mxu0 0.0
        %3306 = vmatprep.subr.mxu0 0.0
        %3307 = vmatpush1.msra.mxu0 0.0
        %3308 = vmatprep.subr.mxu0 0.0
        %3309 = vmatpush1.msra.mxu0 0.0
        %3310 = vmatprep.subr.mxu0 0.0
        %3311 = vmatpush1.msra.mxu0 0.0
        %3312 = vmatprep.subr.mxu0 0.0
        %3313 = vmatpush1.msra.mxu0 0.0
        %3314 = vmatprep.subr.mxu0 0.0
        %3315 = vmatpush1.msra.mxu0 0.0
        %3316 = vmatprep.subr.mxu0 0.0
        %3317 = vmatpush1.msra.mxu0 0.0
        %3318 = vmatprep.subr.mxu0 0.0
        %3319 = vmatpush1.msra.mxu0 0.0
        %3320 = vmatprep.subr.mxu0 0.0
        %3321 = vmatpush1.msra.mxu0 0.0
        %3322 = vmatprep.subr.mxu0 0.0
        %3323 = vmatpush1.msra.mxu0 0.0
        %3324 = vmatprep.subr.mxu0 0.0
        %3325 = vmatpush1.msra.mxu0 0.0
        %3326 = vmatprep.subr.mxu0 0.0
        %3327 = vmatpush1.msra.mxu0 0.0
        %3328 = vmatprep.subr.mxu0 0.0
        %3329 = vmatpush1.msra.mxu0 %v3300
        %3330 = vmatprep.subr.mxu0 0.0
        %3331 = vmatpush1.msra.mxu0 %v3294
        %3332 = vmatprep.subr.mxu0 0.0
        %3333 = vmatpush1.msra.mxu0 %v3293
        %3334 = vmatprep.subr.mxu0 0.0
        %3335 = vmatpush2.msra.mxu0 0.0
        %3336 = vmatprep.subr.mxu0 0.0
        %3337 = vmatpush2.msra.mxu0 0.0
        %3338 = vmatprep.subr.mxu0 0.0
        %3339 = vmatpush2.msra.mxu0 0.0
        %3340 = vmatprep.subr.mxu0 0.0
        %3341 = vmatpush2.msra.mxu0 0.0
        %3342 = vmatprep.subr.mxu0 0.0
        %3343 = vmatpush2.msra.mxu0 0.0
        %3344 = vmatprep.subr.mxu0 0.0
        %3345 = vmatpush2.msra.mxu0 0.0
        %3346 = vmatprep.subr.mxu0 0.0
        %3347 = vmatpush2.msra.mxu0 0.0
        %3348 = vmatprep.subr.mxu0 0.0
        %3349 = vmatpush2.msra.mxu0 0.0
        %3350 = vmatprep.subr.mxu0 0.0
        %3351 = vmatpush2.msra.mxu0 0.0
        %3352 = vmatprep.subr.mxu0 0.0
        %3353 = vmatpush2.msra.mxu0 0.0
        %3354 = vmatprep.subr.mxu0 0.0
        %3355 = vmatpush2.msra.mxu0 0.0
        %3356 = vmatprep.subr.mxu0 0.0
        %3357 = vmatpush2.msra.mxu0 0.0
        %3358 = vmatprep.subr.mxu0 0.0
        %3359 = vmatpush2.msra.mxu0 0.0
        %3360 = vmatprep.subr.mxu0 0.0
        %3361 = vmatpush2.msra.mxu0 0.0
        %3362 = vmatprep.subr.mxu0 0.0
        %3363 = vmatpush2.msra.mxu0 0.0
        %3364 = vmatprep.subr.mxu0 0.0
        %3365 = vmatpush2.msra.mxu0 0.0
        %3366 = vmatprep.mubr.f32.mxu0 0.0
        %3367 = vmatmul.mubr.f32.gmra.mxu0 %v3297
        %v3368 = vpop.f32.mrf.mxu0
        %v3369 = vadd.f32 0.0, %v3368
        %v3370 = vpop.f32.mrf.mxu0
        %3371 = vdwg.mxu0
        %v3372 = vadd.f32 %v3291, %v3369
        %s3373 = scalar_lea.vmem %s10, 216
        %v3374 = vld [vmem:[%s3373] sm:$0xff]
        %v3375 = vld [vmem:[%s3373 + $0x8] sm:$0xff]
        %v3376 = vld [vmem:[%s3373 + $0x10] sm:$0xf]
        %v3377 = vrot.slane %v2642, 1
        %v3378 = vsel %vm2554, %v3377, 0
        %v3381 = vsel %vm2650, %v3376, 0
        %3383 = vmatprep.subr.mxu0 0.0
        %3384 = vmatpush1.msra.mxu0 0.0
        %3385 = vmatprep.subr.mxu0 0.0
        %3386 = vmatpush1.msra.mxu0 0.0
        %3387 = vmatprep.subr.mxu0 0.0
        %3388 = vmatpush1.msra.mxu0 0.0
        %3389 = vmatprep.subr.mxu0 0.0
        %3390 = vmatpush1.msra.mxu0 0.0
        %3391 = vmatprep.subr.mxu0 0.0
        %3392 = vmatpush1.msra.mxu0 0.0
        %3393 = vmatprep.subr.mxu0 0.0
        %3394 = vmatpush1.msra.mxu0 0.0
        %3395 = vmatprep.subr.mxu0 0.0
        %3396 = vmatpush1.msra.mxu0 0.0
        %3397 = vmatprep.subr.mxu0 0.0
        %3398 = vmatpush1.msra.mxu0 0.0
        %3399 = vmatprep.subr.mxu0 0.0
        %3400 = vmatpush1.msra.mxu0 0.0
        %3401 = vmatprep.subr.mxu0 0.0
        %3402 = vmatpush1.msra.mxu0 0.0
        %3403 = vmatprep.subr.mxu0 0.0
        %3404 = vmatpush1.msra.mxu0 0.0
        %3405 = vmatprep.subr.mxu0 0.0
        %3406 = vmatpush1.msra.mxu0 0.0
        %3407 = vmatprep.subr.mxu0 0.0
        %3408 = vmatpush1.msra.mxu0 0.0
        %3409 = vmatprep.subr.mxu0 0.0
        %3410 = vmatpush1.msra.mxu0 %v3381
        %3411 = vmatprep.subr.mxu0 0.0
        %3412 = vmatpush1.msra.mxu0 %v3375
        %3413 = vmatprep.subr.mxu0 0.0
        %3414 = vmatpush1.msra.mxu0 %v3374
        %3415 = vmatprep.subr.mxu0 0.0
        %3416 = vmatpush2.msra.mxu0 0.0
        %3417 = vmatprep.subr.mxu0 0.0
        %3418 = vmatpush2.msra.mxu0 0.0
        %3419 = vmatprep.subr.mxu0 0.0
        %3420 = vmatpush2.msra.mxu0 0.0
        %3421 = vmatprep.subr.mxu0 0.0
        %3422 = vmatpush2.msra.mxu0 0.0
        %3423 = vmatprep.subr.mxu0 0.0
        %3424 = vmatpush2.msra.mxu0 0.0
        %3425 = vmatprep.subr.mxu0 0.0
        %3426 = vmatpush2.msra.mxu0 0.0
        %3427 = vmatprep.subr.mxu0 0.0
        %3428 = vmatpush2.msra.mxu0 0.0
        %3429 = vmatprep.subr.mxu0 0.0
        %3430 = vmatpush2.msra.mxu0 0.0
        %3431 = vmatprep.subr.mxu0 0.0
        %3432 = vmatpush2.msra.mxu0 0.0
        %3433 = vmatprep.subr.mxu0 0.0
        %3434 = vmatpush2.msra.mxu0 0.0
        %3435 = vmatprep.subr.mxu0 0.0
        %3436 = vmatpush2.msra.mxu0 0.0
        %3437 = vmatprep.subr.mxu0 0.0
        %3438 = vmatpush2.msra.mxu0 0.0
        %3439 = vmatprep.subr.mxu0 0.0
        %3440 = vmatpush2.msra.mxu0 0.0
        %3441 = vmatprep.subr.mxu0 0.0
        %3442 = vmatpush2.msra.mxu0 0.0
        %3443 = vmatprep.subr.mxu0 0.0
        %3444 = vmatpush2.msra.mxu0 0.0
        %3445 = vmatprep.subr.mxu0 0.0
        %3446 = vmatpush2.msra.mxu0 0.0
        %3447 = vmatprep.mubr.f32.mxu0 0.0
        %3448 = vmatmul.mubr.f32.gmra.mxu0 %v3378
        %v3449 = vpop.f32.mrf.mxu0
        %v3450 = vadd.f32 0.0, %v3449
        %v3451 = vpop.f32.mrf.mxu0
        %3452 = vdwg.mxu0
        %v3453 = vadd.f32 %v3372, %v3450
        %s3454 = scalar_lea.vmem %s10, 240
        %v3455 = vld [vmem:[%s3454] sm:$0xff]
        %v3456 = vld [vmem:[%s3454 + $0x8] sm:$0xff]
        %v3457 = vld [vmem:[%s3454 + $0x10] sm:$0xf]
        %v3458 = vrot.slane %v2642, 2
        %v3459 = vsel %vm2554, %v3458, 0
        %v3462 = vsel %vm2650, %v3457, 0
        %3464 = vmatprep.subr.mxu0 0.0
        %3465 = vmatpush1.msra.mxu0 0.0
        %3466 = vmatprep.subr.mxu0 0.0
        %3467 = vmatpush1.msra.mxu0 0.0
        %3468 = vmatprep.subr.mxu0 0.0
        %3469 = vmatpush1.msra.mxu0 0.0
        %3470 = vmatprep.subr.mxu0 0.0
        %3471 = vmatpush1.msra.mxu0 0.0
        %3472 = vmatprep.subr.mxu0 0.0
        %3473 = vmatpush1.msra.mxu0 0.0
        %3474 = vmatprep.subr.mxu0 0.0
        %3475 = vmatpush1.msra.mxu0 0.0
        %3476 = vmatprep.subr.mxu0 0.0
        %3477 = vmatpush1.msra.mxu0 0.0
        %3478 = vmatprep.subr.mxu0 0.0
        %3479 = vmatpush1.msra.mxu0 0.0
        %3480 = vmatprep.subr.mxu0 0.0
        %3481 = vmatpush1.msra.mxu0 0.0
        %3482 = vmatprep.subr.mxu0 0.0
        %3483 = vmatpush1.msra.mxu0 0.0
        %3484 = vmatprep.subr.mxu0 0.0
        %3485 = vmatpush1.msra.mxu0 0.0
        %3486 = vmatprep.subr.mxu0 0.0
        %3487 = vmatpush1.msra.mxu0 0.0
        %3488 = vmatprep.subr.mxu0 0.0
        %3489 = vmatpush1.msra.mxu0 0.0
        %3490 = vmatprep.subr.mxu0 0.0
        %3491 = vmatpush1.msra.mxu0 %v3462
        %3492 = vmatprep.subr.mxu0 0.0
        %3493 = vmatpush1.msra.mxu0 %v3456
        %3494 = vmatprep.subr.mxu0 0.0
        %3495 = vmatpush1.msra.mxu0 %v3455
        %3496 = vmatprep.subr.mxu0 0.0
        %3497 = vmatpush2.msra.mxu0 0.0
        %3498 = vmatprep.subr.mxu0 0.0
        %3499 = vmatpush2.msra.mxu0 0.0
        %3500 = vmatprep.subr.mxu0 0.0
        %3501 = vmatpush2.msra.mxu0 0.0
        %3502 = vmatprep.subr.mxu0 0.0
        %3503 = vmatpush2.msra.mxu0 0.0
        %3504 = vmatprep.subr.mxu0 0.0
        %3505 = vmatpush2.msra.mxu0 0.0
        %3506 = vmatprep.subr.mxu0 0.0
        %3507 = vmatpush2.msra.mxu0 0.0
        %3508 = vmatprep.subr.mxu0 0.0
        %3509 = vmatpush2.msra.mxu0 0.0
        %3510 = vmatprep.subr.mxu0 0.0
        %3511 = vmatpush2.msra.mxu0 0.0
        %3512 = vmatprep.subr.mxu0 0.0
        %3513 = vmatpush2.msra.mxu0 0.0
        %3514 = vmatprep.subr.mxu0 0.0
        %3515 = vmatpush2.msra.mxu0 0.0
        %3516 = vmatprep.subr.mxu0 0.0
        %3517 = vmatpush2.msra.mxu0 0.0
        %3518 = vmatprep.subr.mxu0 0.0
        %3519 = vmatpush2.msra.mxu0 0.0
        %3520 = vmatprep.subr.mxu0 0.0
        %3521 = vmatpush2.msra.mxu0 0.0
        %3522 = vmatprep.subr.mxu0 0.0
        %3523 = vmatpush2.msra.mxu0 0.0
        %3524 = vmatprep.subr.mxu0 0.0
        %3525 = vmatpush2.msra.mxu0 0.0
        %3526 = vmatprep.subr.mxu0 0.0
        %3527 = vmatpush2.msra.mxu0 0.0
        %3528 = vmatprep.mubr.f32.mxu0 0.0
        %3529 = vmatmul.mubr.f32.gmra.mxu0 %v3459
        %v3530 = vpop.f32.mrf.mxu0
        %v3531 = vadd.f32 0.0, %v3530
        %v3532 = vpop.f32.mrf.mxu0
        %3533 = vdwg.mxu0
        %v3534 = vadd.f32 %v3453, %v3531
        %s3535 = scalar_lea.vmem %s10, 264
        %v3536 = vld [vmem:[%s3535] sm:$0xff]
        %v3537 = vld [vmem:[%s3535 + $0x8] sm:$0xff]
        %v3538 = vld [vmem:[%s3535 + $0x10] sm:$0xf]
        %v3539 = vrot.slane %v2642, 3
        %v3540 = vsel %vm2554, %v3539, 0
        %v3543 = vsel %vm2650, %v3538, 0
        %3545 = vmatprep.subr.mxu0 0.0
        %3546 = vmatpush1.msra.mxu0 0.0
        %3547 = vmatprep.subr.mxu0 0.0
        %3548 = vmatpush1.msra.mxu0 0.0
        %3549 = vmatprep.subr.mxu0 0.0
        %3550 = vmatpush1.msra.mxu0 0.0
        %3551 = vmatprep.subr.mxu0 0.0
        %3552 = vmatpush1.msra.mxu0 0.0
        %3553 = vmatprep.subr.mxu0 0.0
        %3554 = vmatpush1.msra.mxu0 0.0
        %3555 = vmatprep.subr.mxu0 0.0
        %3556 = vmatpush1.msra.mxu0 0.0
        %3557 = vmatprep.subr.mxu0 0.0
        %3558 = vmatpush1.msra.mxu0 0.0
        %3559 = vmatprep.subr.mxu0 0.0
        %3560 = vmatpush1.msra.mxu0 0.0
        %3561 = vmatprep.subr.mxu0 0.0
        %3562 = vmatpush1.msra.mxu0 0.0
        %3563 = vmatprep.subr.mxu0 0.0
        %3564 = vmatpush1.msra.mxu0 0.0
        %3565 = vmatprep.subr.mxu0 0.0
        %3566 = vmatpush1.msra.mxu0 0.0
        %3567 = vmatprep.subr.mxu0 0.0
        %3568 = vmatpush1.msra.mxu0 0.0
        %3569 = vmatprep.subr.mxu0 0.0
        %3570 = vmatpush1.msra.mxu0 0.0
        %3571 = vmatprep.subr.mxu0 0.0
        %3572 = vmatpush1.msra.mxu0 %v3543
        %3573 = vmatprep.subr.mxu0 0.0
        %3574 = vmatpush1.msra.mxu0 %v3537
        %3575 = vmatprep.subr.mxu0 0.0
        %3576 = vmatpush1.msra.mxu0 %v3536
        %3577 = vmatprep.subr.mxu0 0.0
        %3578 = vmatpush2.msra.mxu0 0.0
        %3579 = vmatprep.subr.mxu0 0.0
        %3580 = vmatpush2.msra.mxu0 0.0
        %3581 = vmatprep.subr.mxu0 0.0
        %3582 = vmatpush2.msra.mxu0 0.0
        %3583 = vmatprep.subr.mxu0 0.0
        %3584 = vmatpush2.msra.mxu0 0.0
        %3585 = vmatprep.subr.mxu0 0.0
        %3586 = vmatpush2.msra.mxu0 0.0
        %3587 = vmatprep.subr.mxu0 0.0
        %3588 = vmatpush2.msra.mxu0 0.0
        %3589 = vmatprep.subr.mxu0 0.0
        %3590 = vmatpush2.msra.mxu0 0.0
        %3591 = vmatprep.subr.mxu0 0.0
        %3592 = vmatpush2.msra.mxu0 0.0
        %3593 = vmatprep.subr.mxu0 0.0
        %3594 = vmatpush2.msra.mxu0 0.0
        %3595 = vmatprep.subr.mxu0 0.0
        %3596 = vmatpush2.msra.mxu0 0.0
        %3597 = vmatprep.subr.mxu0 0.0
        %3598 = vmatpush2.msra.mxu0 0.0
        %3599 = vmatprep.subr.mxu0 0.0
        %3600 = vmatpush2.msra.mxu0 0.0
        %3601 = vmatprep.subr.mxu0 0.0
        %3602 = vmatpush2.msra.mxu0 0.0
        %3603 = vmatprep.subr.mxu0 0.0
        %3604 = vmatpush2.msra.mxu0 0.0
        %3605 = vmatprep.subr.mxu0 0.0
        %3606 = vmatpush2.msra.mxu0 0.0
        %3607 = vmatprep.subr.mxu0 0.0
        %3608 = vmatpush2.msra.mxu0 0.0
        %3609 = vmatprep.mubr.f32.mxu0 0.0
        %3610 = vmatmul.mubr.f32.gmra.mxu0 %v3540
        %v3611 = vpop.f32.mrf.mxu0
        %v3612 = vadd.f32 0.0, %v3611
        %v3613 = vpop.f32.mrf.mxu0
        %3614 = vdwg.mxu0
        %v3615 = vadd.f32 %v3534, %v3612
        %s3616 = scalar_lea.vmem %s10, 288
        %v3617 = vld [vmem:[%s3616] sm:$0xff]
        %v3618 = vld [vmem:[%s3616 + $0x8] sm:$0xff]
        %v3619 = vld [vmem:[%s3616 + $0x10] sm:$0xf]
        %v3620 = vrot.slane %v2642, 4
        %v3621 = vsel %vm2554, %v3620, 0
        %v3624 = vsel %vm2650, %v3619, 0
        %3626 = vmatprep.subr.mxu0 0.0
        %3627 = vmatpush1.msra.mxu0 0.0
        %3628 = vmatprep.subr.mxu0 0.0
        %3629 = vmatpush1.msra.mxu0 0.0
        %3630 = vmatprep.subr.mxu0 0.0
        %3631 = vmatpush1.msra.mxu0 0.0
        %3632 = vmatprep.subr.mxu0 0.0
        %3633 = vmatpush1.msra.mxu0 0.0
        %3634 = vmatprep.subr.mxu0 0.0
        %3635 = vmatpush1.msra.mxu0 0.0
        %3636 = vmatprep.subr.mxu0 0.0
        %3637 = vmatpush1.msra.mxu0 0.0
        %3638 = vmatprep.subr.mxu0 0.0
        %3639 = vmatpush1.msra.mxu0 0.0
        %3640 = vmatprep.subr.mxu0 0.0
        %3641 = vmatpush1.msra.mxu0 0.0
        %3642 = vmatprep.subr.mxu0 0.0
        %3643 = vmatpush1.msra.mxu0 0.0
        %3644 = vmatprep.subr.mxu0 0.0
        %3645 = vmatpush1.msra.mxu0 0.0
        %3646 = vmatprep.subr.mxu0 0.0
        %3647 = vmatpush1.msra.mxu0 0.0
        %3648 = vmatprep.subr.mxu0 0.0
        %3649 = vmatpush1.msra.mxu0 0.0
        %3650 = vmatprep.subr.mxu0 0.0
        %3651 = vmatpush1.msra.mxu0 0.0
        %3652 = vmatprep.subr.mxu0 0.0
        %3653 = vmatpush1.msra.mxu0 %v3624
        %3654 = vmatprep.subr.mxu0 0.0
        %3655 = vmatpush1.msra.mxu0 %v3618
        %3656 = vmatprep.subr.mxu0 0.0
        %3657 = vmatpush1.msra.mxu0 %v3617
        %3658 = vmatprep.subr.mxu0 0.0
        %3659 = vmatpush2.msra.mxu0 0.0
        %3660 = vmatprep.subr.mxu0 0.0
        %3661 = vmatpush2.msra.mxu0 0.0
        %3662 = vmatprep.subr.mxu0 0.0
        %3663 = vmatpush2.msra.mxu0 0.0
        %3664 = vmatprep.subr.mxu0 0.0
        %3665 = vmatpush2.msra.mxu0 0.0
        %3666 = vmatprep.subr.mxu0 0.0
        %3667 = vmatpush2.msra.mxu0 0.0
        %3668 = vmatprep.subr.mxu0 0.0
        %3669 = vmatpush2.msra.mxu0 0.0
        %3670 = vmatprep.subr.mxu0 0.0
        %3671 = vmatpush2.msra.mxu0 0.0
        %3672 = vmatprep.subr.mxu0 0.0
        %3673 = vmatpush2.msra.mxu0 0.0
        %3674 = vmatprep.subr.mxu0 0.0
        %3675 = vmatpush2.msra.mxu0 0.0
        %3676 = vmatprep.subr.mxu0 0.0
        %3677 = vmatpush2.msra.mxu0 0.0
        %3678 = vmatprep.subr.mxu0 0.0
        %3679 = vmatpush2.msra.mxu0 0.0
        %3680 = vmatprep.subr.mxu0 0.0
        %3681 = vmatpush2.msra.mxu0 0.0
        %3682 = vmatprep.subr.mxu0 0.0
        %3683 = vmatpush2.msra.mxu0 0.0
        %3684 = vmatprep.subr.mxu0 0.0
        %3685 = vmatpush2.msra.mxu0 0.0
        %3686 = vmatprep.subr.mxu0 0.0
        %3687 = vmatpush2.msra.mxu0 0.0
        %3688 = vmatprep.subr.mxu0 0.0
        %3689 = vmatpush2.msra.mxu0 0.0
        %3690 = vmatprep.mubr.f32.mxu0 0.0
        %3691 = vmatmul.mubr.f32.gmra.mxu0 %v3621
        %v3692 = vpop.f32.mrf.mxu0
        %v3693 = vadd.f32 0.0, %v3692
        %v3694 = vpop.f32.mrf.mxu0
        %3695 = vdwg.mxu0
        %v3696 = vadd.f32 %v3615, %v3693
        %s3697 = scalar_lea.vmem %s10, 312
        %v3698 = vld [vmem:[%s3697] sm:$0xff]
        %v3699 = vld [vmem:[%s3697 + $0x8] sm:$0xff]
        %v3700 = vld [vmem:[%s3697 + $0x10] sm:$0xf]
        %v3701 = vrot.slane %v2642, 5
        %v3702 = vsel %vm2554, %v3701, 0
        %v3705 = vsel %vm2650, %v3700, 0
        %3707 = vmatprep.subr.mxu0 0.0
        %3708 = vmatpush1.msra.mxu0 0.0
        %3709 = vmatprep.subr.mxu0 0.0
        %3710 = vmatpush1.msra.mxu0 0.0
        %3711 = vmatprep.subr.mxu0 0.0
        %3712 = vmatpush1.msra.mxu0 0.0
        %3713 = vmatprep.subr.mxu0 0.0
        %3714 = vmatpush1.msra.mxu0 0.0
        %3715 = vmatprep.subr.mxu0 0.0
        %3716 = vmatpush1.msra.mxu0 0.0
        %3717 = vmatprep.subr.mxu0 0.0
        %3718 = vmatpush1.msra.mxu0 0.0
        %3719 = vmatprep.subr.mxu0 0.0
        %3720 = vmatpush1.msra.mxu0 0.0
        %3721 = vmatprep.subr.mxu0 0.0
        %3722 = vmatpush1.msra.mxu0 0.0
        %3723 = vmatprep.subr.mxu0 0.0
        %3724 = vmatpush1.msra.mxu0 0.0
        %3725 = vmatprep.subr.mxu0 0.0
        %3726 = vmatpush1.msra.mxu0 0.0
        %3727 = vmatprep.subr.mxu0 0.0
        %3728 = vmatpush1.msra.mxu0 0.0
        %3729 = vmatprep.subr.mxu0 0.0
        %3730 = vmatpush1.msra.mxu0 0.0
        %3731 = vmatprep.subr.mxu0 0.0
        %3732 = vmatpush1.msra.mxu0 0.0
        %3733 = vmatprep.subr.mxu0 0.0
        %3734 = vmatpush1.msra.mxu0 %v3705
        %3735 = vmatprep.subr.mxu0 0.0
        %3736 = vmatpush1.msra.mxu0 %v3699
        %3737 = vmatprep.subr.mxu0 0.0
        %3738 = vmatpush1.msra.mxu0 %v3698
        %3739 = vmatprep.subr.mxu0 0.0
        %3740 = vmatpush2.msra.mxu0 0.0
        %3741 = vmatprep.subr.mxu0 0.0
        %3742 = vmatpush2.msra.mxu0 0.0
        %3743 = vmatprep.subr.mxu0 0.0
        %3744 = vmatpush2.msra.mxu0 0.0
        %3745 = vmatprep.subr.mxu0 0.0
        %3746 = vmatpush2.msra.mxu0 0.0
        %3747 = vmatprep.subr.mxu0 0.0
        %3748 = vmatpush2.msra.mxu0 0.0
        %3749 = vmatprep.subr.mxu0 0.0
        %3750 = vmatpush2.msra.mxu0 0.0
        %3751 = vmatprep.subr.mxu0 0.0
        %3752 = vmatpush2.msra.mxu0 0.0
        %3753 = vmatprep.subr.mxu0 0.0
        %3754 = vmatpush2.msra.mxu0 0.0
        %3755 = vmatprep.subr.mxu0 0.0
        %3756 = vmatpush2.msra.mxu0 0.0
        %3757 = vmatprep.subr.mxu0 0.0
        %3758 = vmatpush2.msra.mxu0 0.0
        %3759 = vmatprep.subr.mxu0 0.0
        %3760 = vmatpush2.msra.mxu0 0.0
        %3761 = vmatprep.subr.mxu0 0.0
        %3762 = vmatpush2.msra.mxu0 0.0
        %3763 = vmatprep.subr.mxu0 0.0
        %3764 = vmatpush2.msra.mxu0 0.0
        %3765 = vmatprep.subr.mxu0 0.0
        %3766 = vmatpush2.msra.mxu0 0.0
        %3767 = vmatprep.subr.mxu0 0.0
        %3768 = vmatpush2.msra.mxu0 0.0
        %3769 = vmatprep.subr.mxu0 0.0
        %3770 = vmatpush2.msra.mxu0 0.0
        %3771 = vmatprep.mubr.f32.mxu0 0.0
        %3772 = vmatmul.mubr.f32.gmra.mxu0 %v3702
        %v3773 = vpop.f32.mrf.mxu0
        %v3774 = vadd.f32 0.0, %v3773
        %v3775 = vpop.f32.mrf.mxu0
        %3776 = vdwg.mxu0
        %v3777 = vadd.f32 %v3696, %v3774
        %s3778 = scalar_lea.vmem %s10, 336
        %v3779 = vld [vmem:[%s3778] sm:$0xff]
        %v3780 = vld [vmem:[%s3778 + $0x8] sm:$0xff]
        %v3781 = vld [vmem:[%s3778 + $0x10] sm:$0xf]
        %v3782 = vrot.slane %v2642, 6
        %v3783 = vsel %vm2554, %v3782, 0
        %v3786 = vsel %vm2650, %v3781, 0
        %3788 = vmatprep.subr.mxu0 0.0
        %3789 = vmatpush1.msra.mxu0 0.0
        %3790 = vmatprep.subr.mxu0 0.0
        %3791 = vmatpush1.msra.mxu0 0.0
        %3792 = vmatprep.subr.mxu0 0.0
        %3793 = vmatpush1.msra.mxu0 0.0
        %3794 = vmatprep.subr.mxu0 0.0
        %3795 = vmatpush1.msra.mxu0 0.0
        %3796 = vmatprep.subr.mxu0 0.0
        %3797 = vmatpush1.msra.mxu0 0.0
        %3798 = vmatprep.subr.mxu0 0.0
        %3799 = vmatpush1.msra.mxu0 0.0
        %3800 = vmatprep.subr.mxu0 0.0
        %3801 = vmatpush1.msra.mxu0 0.0
        %3802 = vmatprep.subr.mxu0 0.0
        %3803 = vmatpush1.msra.mxu0 0.0
        %3804 = vmatprep.subr.mxu0 0.0
        %3805 = vmatpush1.msra.mxu0 0.0
        %3806 = vmatprep.subr.mxu0 0.0
        %3807 = vmatpush1.msra.mxu0 0.0
        %3808 = vmatprep.subr.mxu0 0.0
        %3809 = vmatpush1.msra.mxu0 0.0
        %3810 = vmatprep.subr.mxu0 0.0
        %3811 = vmatpush1.msra.mxu0 0.0
        %3812 = vmatprep.subr.mxu0 0.0
        %3813 = vmatpush1.msra.mxu0 0.0
        %3814 = vmatprep.subr.mxu0 0.0
        %3815 = vmatpush1.msra.mxu0 %v3786
        %3816 = vmatprep.subr.mxu0 0.0
        %3817 = vmatpush1.msra.mxu0 %v3780
        %3818 = vmatprep.subr.mxu0 0.0
        %3819 = vmatpush1.msra.mxu0 %v3779
        %3820 = vmatprep.subr.mxu0 0.0
        %3821 = vmatpush2.msra.mxu0 0.0
        %3822 = vmatprep.subr.mxu0 0.0
        %3823 = vmatpush2.msra.mxu0 0.0
        %3824 = vmatprep.subr.mxu0 0.0
        %3825 = vmatpush2.msra.mxu0 0.0
        %3826 = vmatprep.subr.mxu0 0.0
        %3827 = vmatpush2.msra.mxu0 0.0
        %3828 = vmatprep.subr.mxu0 0.0
        %3829 = vmatpush2.msra.mxu0 0.0
        %3830 = vmatprep.subr.mxu0 0.0
        %3831 = vmatpush2.msra.mxu0 0.0
        %3832 = vmatprep.subr.mxu0 0.0
        %3833 = vmatpush2.msra.mxu0 0.0
        %3834 = vmatprep.subr.mxu0 0.0
        %3835 = vmatpush2.msra.mxu0 0.0
        %3836 = vmatprep.subr.mxu0 0.0
        %3837 = vmatpush2.msra.mxu0 0.0
        %3838 = vmatprep.subr.mxu0 0.0
        %3839 = vmatpush2.msra.mxu0 0.0
        %3840 = vmatprep.subr.mxu0 0.0
        %3841 = vmatpush2.msra.mxu0 0.0
        %3842 = vmatprep.subr.mxu0 0.0
        %3843 = vmatpush2.msra.mxu0 0.0
        %3844 = vmatprep.subr.mxu0 0.0
        %3845 = vmatpush2.msra.mxu0 0.0
        %3846 = vmatprep.subr.mxu0 0.0
        %3847 = vmatpush2.msra.mxu0 0.0
        %3848 = vmatprep.subr.mxu0 0.0
        %3849 = vmatpush2.msra.mxu0 0.0
        %3850 = vmatprep.subr.mxu0 0.0
        %3851 = vmatpush2.msra.mxu0 0.0
        %3852 = vmatprep.mubr.f32.mxu0 0.0
        %3853 = vmatmul.mubr.f32.gmra.mxu0 %v3783
        %v3854 = vpop.f32.mrf.mxu0
        %v3855 = vadd.f32 0.0, %v3854
        %v3856 = vpop.f32.mrf.mxu0
        %3857 = vdwg.mxu0
        %v3858 = vadd.f32 %v3777, %v3855
        %s3859 = scalar_lea.vmem %s10, 360
        %v3860 = vld [vmem:[%s3859] sm:$0xff]
        %v3861 = vld [vmem:[%s3859 + $0x8] sm:$0xff]
        %v3862 = vld [vmem:[%s3859 + $0x10] sm:$0xf]
        %v3863 = vrot.slane %v2642, 7
        %v3864 = vsel %vm2554, %v3863, 0
        %v3867 = vsel %vm2650, %v3862, 0
        %3869 = vmatprep.subr.mxu0 0.0
        %3870 = vmatpush1.msra.mxu0 0.0
        %3871 = vmatprep.subr.mxu0 0.0
        %3872 = vmatpush1.msra.mxu0 0.0
        %3873 = vmatprep.subr.mxu0 0.0
        %3874 = vmatpush1.msra.mxu0 0.0
        %3875 = vmatprep.subr.mxu0 0.0
        %3876 = vmatpush1.msra.mxu0 0.0
        %3877 = vmatprep.subr.mxu0 0.0
        %3878 = vmatpush1.msra.mxu0 0.0
        %3879 = vmatprep.subr.mxu0 0.0
        %3880 = vmatpush1.msra.mxu0 0.0
        %3881 = vmatprep.subr.mxu0 0.0
        %3882 = vmatpush1.msra.mxu0 0.0
        %3883 = vmatprep.subr.mxu0 0.0
        %3884 = vmatpush1.msra.mxu0 0.0
        %3885 = vmatprep.subr.mxu0 0.0
        %3886 = vmatpush1.msra.mxu0 0.0
        %3887 = vmatprep.subr.mxu0 0.0
        %3888 = vmatpush1.msra.mxu0 0.0
        %3889 = vmatprep.subr.mxu0 0.0
        %3890 = vmatpush1.msra.mxu0 0.0
        %3891 = vmatprep.subr.mxu0 0.0
        %3892 = vmatpush1.msra.mxu0 0.0
        %3893 = vmatprep.subr.mxu0 0.0
        %3894 = vmatpush1.msra.mxu0 0.0
        %3895 = vmatprep.subr.mxu0 0.0
        %3896 = vmatpush1.msra.mxu0 %v3867
        %3897 = vmatprep.subr.mxu0 0.0
        %3898 = vmatpush1.msra.mxu0 %v3861
        %3899 = vmatprep.subr.mxu0 0.0
        %3900 = vmatpush1.msra.mxu0 %v3860
        %3901 = vmatprep.subr.mxu0 0.0
        %3902 = vmatpush2.msra.mxu0 0.0
        %3903 = vmatprep.subr.mxu0 0.0
        %3904 = vmatpush2.msra.mxu0 0.0
        %3905 = vmatprep.subr.mxu0 0.0
        %3906 = vmatpush2.msra.mxu0 0.0
        %3907 = vmatprep.subr.mxu0 0.0
        %3908 = vmatpush2.msra.mxu0 0.0
        %3909 = vmatprep.subr.mxu0 0.0
        %3910 = vmatpush2.msra.mxu0 0.0
        %3911 = vmatprep.subr.mxu0 0.0
        %3912 = vmatpush2.msra.mxu0 0.0
        %3913 = vmatprep.subr.mxu0 0.0
        %3914 = vmatpush2.msra.mxu0 0.0
        %3915 = vmatprep.subr.mxu0 0.0
        %3916 = vmatpush2.msra.mxu0 0.0
        %3917 = vmatprep.subr.mxu0 0.0
        %3918 = vmatpush2.msra.mxu0 0.0
        %3919 = vmatprep.subr.mxu0 0.0
        %3920 = vmatpush2.msra.mxu0 0.0
        %3921 = vmatprep.subr.mxu0 0.0
        %3922 = vmatpush2.msra.mxu0 0.0
        %3923 = vmatprep.subr.mxu0 0.0
        %3924 = vmatpush2.msra.mxu0 0.0
        %3925 = vmatprep.subr.mxu0 0.0
        %3926 = vmatpush2.msra.mxu0 0.0
        %3927 = vmatprep.subr.mxu0 0.0
        %3928 = vmatpush2.msra.mxu0 0.0
        %3929 = vmatprep.subr.mxu0 0.0
        %3930 = vmatpush2.msra.mxu0 0.0
        %3931 = vmatprep.subr.mxu0 0.0
        %3932 = vmatpush2.msra.mxu0 0.0
        %3933 = vmatprep.mubr.f32.mxu0 0.0
        %3934 = vmatmul.mubr.f32.gmra.mxu0 %v3864
        %v3935 = vpop.f32.mrf.mxu0
        %v3936 = vadd.f32 0.0, %v3935
        %v3937 = vpop.f32.mrf.mxu0
        %3938 = vdwg.mxu0
        %v3939 = vadd.f32 %v3858, %v3936
        %3940 = vst [vmem:[%s405] sm:$0x1] %v3939
        %s3941 = sand.u32 %s291, 1
        %s3942 = scalar_lea.sflag [#allocation3], %s3941
        %s3943 = sand.u32 %s291, 1
        %s3944 = scalar_lea.vmem [#allocation2], %s3943
        // Predicated region
        $region69: #{encoder_forward.1} parent=67 // pred_check
          %p3945 = pneg %p301
        $region70: #{encoder_forward.1} parent=67 // pred_check_branch
          %3947 = sbr.rel (%p3945) target = $region72
        $region71: #{encoder_forward.1} parent=67 // pred_region
          %s3949 = ssub.s32 16, 16
          %3950 = vsyncadd %s3942, %s3949
          %s3951 = smul.addr %s26, 16
          %s3952 = scalar_lea.hbm %s12, %s3951
          %s3954 = sshll.u32 %s3944, 4
          %s3955 = int_to_ptr.vmem [resolvable:$true] %s3954
          %3957 = dma.vmem_to_hbm [thread:$0]  %s3955, 16, %s3952, %s3942
        $region72: #{encoder_forward.1} parent=67 // pred_fallthru
          _
      $region68: #{encoder_forward.1} parent=5 // pred_fallthru
        _
      %p3958 = scmp.le.s32.totalorder 2, %s21
      // Predicated region
      $region73: #{encoder_forward.1} parent=5 // pred_check
        %p3959 = pneg %p3958
      $region74: #{encoder_forward.1} parent=5 // pred_check_branch
        %3961 = sbr.rel (%p3959) target = $region76
      $region75: #{encoder_forward.1} parent=5 // pred_region
        %s3962 = ssub.s32 %s21, 2
        // Predicated region
        $region77: #{encoder_forward.1} parent=75 // pred_check
          %p3963 = pneg %p307
        $region78: #{encoder_forward.1} parent=75 // pred_check_branch
          %3965 = sbr.rel (%p3963) target = $region80
        $region79: #{encoder_forward.1} parent=75 // pred_region
          %s3966 = sand.u32 %s292, 1
          %s3967 = scalar_lea.sflag [#allocation3], %s3966
          %s3968 = sand.u32 %s292, 1
          %s3969 = scalar_lea.vmem [#allocation2], %s3968
          %3970 = dma.done %s3967, 16
        $region80: #{encoder_forward.1} parent=75 // pred_fallthru
          _
      $region76: #{encoder_forward.1} parent=5 // pred_fallthru
        _
    $region6: #{encoder_forward.1} parent=1 // loop_footer
      %s25 = sadd.s32 1, %s21
    $region7: #{encoder_forward.1} parent=1 // loop_footer_branch
      %20 = sbr.rel target = $region3
    $region8: #{encoder_forward.1} parent=1 // loop_exit
      _
    %3971 = vsyncpa [#allocation3], 1
    %s3972 = scalar_lea.sflag [#allocation3], 1
    %3973 = vsyncpa %s3972, 1

</llo_original>
